<compile_context>
chip_gen: v7x
topology: tpu7x:2x2x1
jax: 0.10.0
libtpu: 0.0.40
codegen_flags: <defaults>
</compile_context>

<pallas_src>
import numpy as np
import jax
import jax.numpy as jnp
from jax import lax
from jax.scipy.special import logsumexp as _logsumexp
from jax.experimental import pallas as pl
from jax.experimental.pallas import tpu as pltpu


def _frame_nce_kernel(ctx_t_ref, qry_ref, ctx_g_ref,
                      row_ref, nom_ref, cg_ref,
                      m_sc, s_sc):
    """One streamed (tBK, D) query tile: update the online row-LSE and emit the exact
    per-tile nominator / column-group LSE rows (all lane-dense)."""
    t = pl.program_id(1)                      # step along the streamed BK axis
    T = pl.num_programs(1)

    tBK = qry_ref.shape[0]
    G = ctx_g_ref.shape[0]                    # contexts (column groups) owned by this tile
    K = tBK // G                              # frames per context
    neg_inf = jnp.float32(-jnp.inf)

    @pl.when(t == 0)
    def _init():                              # per-partition init (t is the inner axis)
        m_sc[...] = jnp.full(m_sc.shape, -jnp.inf, m_sc.dtype)
        s_sc[...] = jnp.zeros(s_sc.shape, s_sc.dtype)

    q = qry_ref[...]

    # Main score tile: (tBK, D) @ (D, B) -> (tBK, B); both operands feed the MXU in
    # natural layout, f32 accumulation.
    xT = lax.dot_general(q, ctx_t_ref[...],
                         dimension_numbers=(((1,), (0,)), ((), ())),
                         preferred_element_type=jnp.float32)

    # ---- online row LSE over the streamed BK axis; state is lane-dense (1, B) ----
    tile_max = jnp.max(xT, axis=0, keepdims=True)                             # (1, B)
    m_new = jnp.maximum(m_sc[...], tile_max)
    alpha = jnp.exp(m_sc[...] - m_new)
    s_sc[...] = alpha * s_sc[...] + jnp.sum(jnp.exp(xT - m_new), axis=0, keepdims=True)
    m_sc[...] = m_new

    # ---- group mask over sublanes: smask[r, g] = (r // K == g) ----
    # Only (tBK, G) big (a 1/n_tiles fraction of the score tile): a few cheap VPU ops.
    r_idx = lax.broadcasted_iota(jnp.int32, (tBK, G), 0)
    g_idx = lax.broadcasted_iota(jnp.int32, (tBK, G), 1)
    smask = (r_idx >= g_idx * K) & (r_idx < (g_idx + 1) * K)

    # ---- exact column-group LSE for the G groups owned by this tile ----
    rmax = jnp.max(xT, axis=1, keepdims=True)                                 # (tBK, 1)
    gmax = jnp.max(jnp.where(smask, rmax, neg_inf), axis=0, keepdims=True)    # (1, G)
    gmax_row = jnp.sum(jnp.where(smask, gmax, 0.0), axis=1, keepdims=True)    # (tBK, 1)
    csum = jnp.sum(jnp.exp(xT - gmax_row), axis=1, keepdims=True)             # (tBK, 1)
    gsum = jnp.sum(jnp.where(smask, csum, 0.0), axis=0, keepdims=True)        # (1, G)
    cg_ref[0, pl.ds(t, 1), :] = jnp.log(gsum) + gmax      # batched: stays in VMEM until
                                                           # the partition is done

    # ---- exact per-tile nominator (diag K-block of this tile's own G contexts) ----
    # z[r, g] = qry_tile[r] . contexts[tile_start + g]; tiny extra matmul (MXU has slack).
    z = lax.dot_general(q, ctx_g_ref[...],
                        dimension_numbers=(((1,), (1,)), ((), ())),
                        preferred_element_type=jnp.float32)                   # (tBK, G)
    nmax = jnp.max(jnp.where(smask, z, neg_inf), axis=0, keepdims=True)       # (1, G)
    nsum = jnp.sum(jnp.where(smask, jnp.exp(z - nmax), 0.0), axis=0, keepdims=True)
    nom_ref[0, pl.ds(t, 1), :] = jnp.log(nsum) + nmax

    # ---- finalize this partition's row LSE: one lane-dense (1, 1, B) store ----
    @pl.when(t == T - 1)
    def _fin():
        row_ref[...] = (jnp.log(s_sc[...]) + m_sc[...])[None]


def _choose_tiling(B, K, D, itemsize, *, budget_bytes, max_tile_rows):
    """Pick (n_parts, G, T): n_parts * T tiles of G contexts (tBK = G*K query rows) each.

    G % 8 == 0 (sublane rule for the (G, D) context block) and G | (B // n_parts).
    Prefer 2 partitions (v7x has 2 TensorCores; free on 1-TC chips) and the largest tile
    that fits the VMEM budget / row cap.
    """
    def est(g):
        tbk = g * K
        return int(1.25 * (2 * tbk * D * itemsize               # double-buffered query tile
                           + 2 * (D * B + g * D) * itemsize     # ctx_t + streamed ctx block
                           + (3 * tbk * B + 4 * tbk * g) * 4))  # f32 score/exp/mask temps

    for n_parts in (2, 1):
        if B % n_parts:
            continue
        b_part = B // n_parts
        cands = [g for g in range(8, b_part + 1, 8) if b_part % g == 0]
        if not cands:
            continue
        ok = [g for g in cands if g * K <= max_tile_rows and est(g) <= budget_bytes]
        g = max(ok) if ok else min(cands)
        return n_parts, g, b_part // g
    return 1, B, 1          # tiny / odd B: one tile covering everything (full-dim blocks)


def frame_nce_pallas(contexts, queries, *, reduction='mean',
                     budget_bytes=28 * 1024 * 1024, max_tile_rows=4096):
    """contexts: (B, D), queries: (B*K, D) -> frame_nce loss (reduction='mean' or None)."""
    B, D = contexts.shape
    BK, D2 = queries.shape
    assert D == D2, "contexts / queries hidden dims differ"
    assert BK % B == 0, "queries.shape[0] must be a multiple of contexts.shape[0]"
    K = BK // B

    n_parts, G, T = _choose_tiling(B, K, D, np.dtype(queries.dtype).itemsize,
                                   budget_bytes=budget_bytes, max_tile_rows=max_tile_rows)
    tBK = G * K

    ctx_t = jnp.transpose(contexts)     # (D, B): tiny; keeps every score tile a natural
                                        # (tBK, D) @ (D, B) MXU matmul (no streamed transpose)

    out_shapes = (
        jax.ShapeDtypeStruct((n_parts, 1, B), jnp.float32),   # per-partition row LSE
        jax.ShapeDtypeStruct((n_parts, T, G), jnp.float32),   # nominator LSE
        jax.ShapeDtypeStruct((n_parts, T, G), jnp.float32),   # column-group LSE
    )
    grid_spec = pltpu.PrefetchScalarGridSpec(
        num_scalar_prefetch=0,
        grid=(n_parts, T),
        in_specs=[
            pl.BlockSpec((D, B), lambda p, t: (0, 0)),              # contexts.T, resident
            pl.BlockSpec((tBK, D), lambda p, t: (p * T + t, 0)),    # streamed query tile
            pl.BlockSpec((G, D), lambda p, t: (p * T + t, 0)),      # this tile's contexts
        ],
        out_specs=(
            pl.BlockSpec((1, 1, B), lambda p, t: (p, 0, 0)),
            pl.BlockSpec((1, T, G), lambda p, t: (p, 0, 0)),
            pl.BlockSpec((1, T, G), lambda p, t: (p, 0, 0)),
        ),
        scratch_shapes=[
            pltpu.VMEM((1, B), jnp.float32),   # running row max
            pltpu.VMEM((1, B), jnp.float32),   # running row sum
        ],
    )
    row_parts, nom, cg = pl.pallas_call(
        _frame_nce_kernel,
        out_shape=out_shapes,
        grid_spec=grid_spec,
        compiler_params=pltpu.CompilerParams(
            dimension_semantics=("parallel", "arbitrary"),   # partitions can shard across
                                                             # v7x's 2 TensorCores
            vmem_limit_bytes=48 * 1024 * 1024,               # <= v7x's 64 MiB physical VMEM
        ),
    )(ctx_t, queries, contexts)

    # Cheap O(B) combine in plain JAX.
    row_lse = row_parts[0, 0, :]
    for p in range(1, n_parts):
        row_lse = jnp.logaddexp(row_lse, row_parts[p, 0, :])
    nom_lse = nom.reshape(B)            # (p, t, g) row-major == global context index
    cg_lse = cg.reshape(B)
    per_row = jnp.logaddexp(row_lse, cg_lse) - nom_lse   # diag block counted twice, as in torch
    if reduction:
        return jnp.mean(per_row)
    return per_row


def frame_nce_ref(contexts, queries):
    """Pure-JAX transcription of the PyTorch forward (reduction='mean')."""
    x = contexts @ queries.T
    bsz = contexts.shape[0]
    x3 = x.reshape(bsz, bsz, -1)
    nom = (x3 * jnp.eye(bsz, dtype=jnp.float32)[:, :, None]).sum(axis=1)
    nom = _logsumexp(nom, axis=1)
    den = jnp.concatenate([x3, jnp.transpose(x3, (1, 0, 2))], axis=1).reshape(bsz, -1)
    den = _logsumexp(den, axis=1)
    return jnp.mean(den - nom)


if __name__ == "__main__":
    # frame_nce has no learnable parameters; only inputs are needed.
    B, K, D = 64, 16, 128        # batch, frames-per-context, hidden
    key = jax.random.PRNGKey(0)
    k1, k2 = jax.random.split(key)
    contexts = jax.random.normal(k1, (B, D), dtype=jnp.float32)
    queries = jax.random.normal(k2, (B * K, D), dtype=jnp.float32)

    ref = jax.block_until_ready(frame_nce_ref(contexts, queries))

    # Default (VMEM-budgeted, large-tile) configuration.
    loss = jax.block_until_ready(frame_nce_pallas(contexts, queries))
    assert np.allclose(np.asarray(loss), np.asarray(ref), rtol=1e-3, atol=1e-3), (loss, ref)

    # Constrained tiles: several streamed steps per partition, exercising the online
    # row-LSE init / update / finalize paths.
    loss_small = jax.block_until_ready(
        frame_nce_pallas(contexts, queries, max_tile_rows=128))
    assert np.allclose(np.asarray(loss_small), np.asarray(ref), rtol=1e-3, atol=1e-3), (
        loss_small, ref)

    print("KERNEL_OK")
</pallas_src>

<mosaic_0001>
module attributes {stable_mosaic.version = 11 : i64} {
  func.func @_frame_nce_kernel(%arg0: i32, %arg1: i32, %arg2: memref<128x64xf32, #tpu.memory_space<vmem>>, %arg3: memref<512x128xf32, #tpu.memory_space<vmem>>, %arg4: memref<32x128xf32, #tpu.memory_space<vmem>>, %arg5: memref<1x1x64xf32, #tpu.memory_space<vmem>>, %arg6: memref<1x1x32xf32, #tpu.memory_space<vmem>>, %arg7: memref<1x1x32xf32, #tpu.memory_space<vmem>>, %arg8: memref<1x64xf32, #tpu.memory_space<vmem>>, %arg9: memref<1x64xf32, #tpu.memory_space<vmem>>) attributes {dimension_semantics = [#tpu.dimension_semantics<parallel>, #tpu.dimension_semantics<arbitrary>], iteration_bounds = array<i64: 2, 1>, scalar_prefetch = 0 : i64, scratch_operands = 2 : i64, tpu.core_type = #tpu.core_type<tc>, window_params = [{pipeline_mode = #tpu.pipeline_mode<synchronous>, transform_indices = @transform_0, window_bounds = array<i64: 128, 64>}, {transform_indices = @transform_1, window_bounds = array<i64: 512, 128>}, {transform_indices = @transform_2, window_bounds = array<i64: 32, 128>}, {transform_indices = @transform_3, window_bounds = array<i64: 1, 1, 64>}, {transform_indices = @transform_4, window_bounds = array<i64: 1, 1, 32>}, {transform_indices = @transform_5, window_bounds = array<i64: 1, 1, 32>}]} {
    %c0_i32 = arith.constant 0 : i32
    %0 = arith.cmpi eq, %arg1, %c0_i32 : i32
    %1 = arith.extui %0 : i1 to i32
    %c0_i32_0 = arith.constant 0 : i32
    %2 = arith.cmpi ne, %1, %c0_i32_0 : i32
    scf.if %2 {
      %cst_38 = arith.constant 0xFF800000 : f32
      %87 = vector.broadcast %cst_38 : f32 to vector<1x64xf32>
      %c0_39 = arith.constant 0 : index
      %c0_40 = arith.constant 0 : index
      %88 = vector.load %arg8[%c0_39, %c0_40] : memref<1x64xf32, #tpu.memory_space<vmem>>, vector<1x64xf32>
      tpu.vector_store %arg8[%c0_39, %c0_40], %87 {strides = array<i32>} : memref<1x64xf32, #tpu.memory_space<vmem>>, vector<1x64xf32>,
      %cst_41 = arith.constant 0.000000e+00 : f32
      %89 = vector.broadcast %cst_41 : f32 to vector<1x64xf32>
      %c0_42 = arith.constant 0 : index
      %c0_43 = arith.constant 0 : index
      %90 = vector.load %arg9[%c0_42, %c0_43] : memref<1x64xf32, #tpu.memory_space<vmem>>, vector<1x64xf32>
      tpu.vector_store %arg9[%c0_42, %c0_43], %89 {strides = array<i32>} : memref<1x64xf32, #tpu.memory_space<vmem>>, vector<1x64xf32>,
    } else {
    }
    %c0 = arith.constant 0 : index
    %c0_1 = arith.constant 0 : index
    %3 = vector.load %arg3[%c0, %c0_1] : memref<512x128xf32, #tpu.memory_space<vmem>>, vector<512x128xf32>
    %c0_2 = arith.constant 0 : index
    %c0_3 = arith.constant 0 : index
    %4 = vector.load %arg2[%c0_2, %c0_3] : memref<128x64xf32, #tpu.memory_space<vmem>>, vector<128x64xf32>
    %cst = arith.constant dense<0.000000e+00> : vector<512x64xf32>
    %5 = tpu.matmul %3, %4, %cst {dimension_numbers = #tpu.dot_dimension_numbers<[1], [0], [0], [1], [0, 0, 1, 1], [], []>} : vector<512x128xf32>, vector<128x64xf32>, vector<512x64xf32> -> vector<512x64xf32>
    %cst_4 = arith.constant dense<0xFF800000> : vector<64xf32>
    %6 = vector.multi_reduction <maximumf>, %5, %cst_4 [0] : vector<512x64xf32> to vector<64xf32>
    %7 = vector.shape_cast %6 : vector<64xf32> to vector<1x64xf32>
    %c0_5 = arith.constant 0 : index
    %c0_6 = arith.constant 0 : index
    %8 = vector.load %arg8[%c0_5, %c0_6] : memref<1x64xf32, #tpu.memory_space<vmem>>, vector<1x64xf32>
    %9 = arith.maximumf %8, %7 : vector<1x64xf32>
    %c0_7 = arith.constant 0 : index
    %c0_8 = arith.constant 0 : index
    %10 = vector.load %arg8[%c0_7, %c0_8] : memref<1x64xf32, #tpu.memory_space<vmem>>, vector<1x64xf32>
    %11 = arith.subf %10, %9 : vector<1x64xf32>
    %12 = math.exp %11 : vector<1x64xf32>
    %c0_9 = arith.constant 0 : index
    %c0_10 = arith.constant 0 : index
    %13 = vector.load %arg9[%c0_9, %c0_10] : memref<1x64xf32, #tpu.memory_space<vmem>>, vector<1x64xf32>
    %14 = arith.mulf %12, %13 : vector<1x64xf32>
    %15 = vector.broadcast %9 : vector<1x64xf32> to vector<512x64xf32>
    %16 = arith.subf %5, %15 : vector<512x64xf32>
    %17 = math.exp %16 : vector<512x64xf32>
    %cst_11 = arith.constant dense<0.000000e+00> : vector<64xf32>
    %18 = vector.multi_reduction <add>, %17, %cst_11 [0] : vector<512x64xf32> to vector<64xf32>
    %19 = vector.shape_cast %18 : vector<64xf32> to vector<1x64xf32>
    %20 = arith.addf %14, %19 : vector<1x64xf32>
    %c0_12 = arith.constant 0 : index
    %c0_13 = arith.constant 0 : index
    %21 = vector.load %arg9[%c0_12, %c0_13] : memref<1x64xf32, #tpu.memory_space<vmem>>, vector<1x64xf32>
    tpu.vector_store %arg9[%c0_12, %c0_13], %20 {strides = array<i32>} : memref<1x64xf32, #tpu.memory_space<vmem>>, vector<1x64xf32>,
    %c0_14 = arith.constant 0 : index
    %c0_15 = arith.constant 0 : index
    %22 = vector.load %arg8[%c0_14, %c0_15] : memref<1x64xf32, #tpu.memory_space<vmem>>, vector<1x64xf32>
    tpu.vector_store %arg8[%c0_14, %c0_15], %9 {strides = array<i32>} : memref<1x64xf32, #tpu.memory_space<vmem>>, vector<1x64xf32>,
    %23 = tpu.iota {dimensions = array<i32: 0>} : vector<512x32xi32>
    %24 = tpu.iota {dimensions = array<i32: 1>} : vector<512x32xi32>
    %c16_i32 = arith.constant 16 : i32
    %25 = vector.broadcast %c16_i32 : i32 to vector<512x32xi32>
    %26 = arith.muli %24, %25 : vector<512x32xi32>
    %27 = arith.cmpi sge, %23, %26 : vector<512x32xi32>
    %c1_i32 = arith.constant 1 : i32
    %28 = vector.broadcast %c1_i32 : i32 to vector<512x32xi32>
    %29 = arith.addi %24, %28 : vector<512x32xi32>
    %c16_i32_16 = arith.constant 16 : i32
    %30 = vector.broadcast %c16_i32_16 : i32 to vector<512x32xi32>
    %31 = arith.muli %29, %30 : vector<512x32xi32>
    %32 = arith.cmpi slt, %23, %31 : vector<512x32xi32>
    %33 = arith.andi %27, %32 : vector<512x32xi1>
    %cst_17 = arith.constant dense<0xFF800000> : vector<512xf32>
    %34 = vector.multi_reduction <maximumf>, %5, %cst_17 [1] : vector<512x64xf32> to vector<512xf32>
    %35 = vector.shape_cast %34 : vector<512xf32> to vector<512x1xf32>
    %cst_18 = arith.constant 0xFF800000 : f32
    %36 = vector.shape_cast %35 : vector<512x1xf32> to vector<512x1xf32>
    %37 = vector.broadcast %36 : vector<512x1xf32> to vector<512x32xf32>
    %38 = vector.broadcast %cst_18 : f32 to vector<512x32xf32>
    %39 = arith.select %33, %37, %38 : vector<512x32xi1>, vector<512x32xf32>
    %cst_19 = arith.constant dense<0xFF800000> : vector<32xf32>
    %40 = vector.multi_reduction <maximumf>, %39, %cst_19 [0] : vector<512x32xf32> to vector<32xf32>
    %41 = vector.shape_cast %40 : vector<32xf32> to vector<1x32xf32>
    %cst_20 = arith.constant 0.000000e+00 : f32
    %42 = vector.shape_cast %41 : vector<1x32xf32> to vector<1x32xf32>
    %43 = vector.broadcast %42 : vector<1x32xf32> to vector<512x32xf32>
    %44 = vector.broadcast %cst_20 : f32 to vector<512x32xf32>
    %45 = arith.select %33, %43, %44 : vector<512x32xi1>, vector<512x32xf32>
    %cst_21 = arith.constant dense<0.000000e+00> : vector<512xf32>
    %46 = vector.multi_reduction <add>, %45, %cst_21 [1] : vector<512x32xf32> to vector<512xf32>
    %47 = vector.shape_cast %46 : vector<512xf32> to vector<512x1xf32>
    %48 = vector.broadcast %47 : vector<512x1xf32> to vector<512x64xf32>
    %49 = arith.subf %5, %48 : vector<512x64xf32>
    %50 = math.exp %49 : vector<512x64xf32>
    %cst_22 = arith.constant dense<0.000000e+00> : vector<512xf32>
    %51 = vector.multi_reduction <add>, %50, %cst_22 [1] : vector<512x64xf32> to vector<512xf32>
    %52 = vector.shape_cast %51 : vector<512xf32> to vector<512x1xf32>
    %cst_23 = arith.constant 0.000000e+00 : f32
    %53 = vector.shape_cast %52 : vector<512x1xf32> to vector<512x1xf32>
    %54 = vector.broadcast %53 : vector<512x1xf32> to vector<512x32xf32>
    %55 = vector.broadcast %cst_23 : f32 to vector<512x32xf32>
    %56 = arith.select %33, %54, %55 : vector<512x32xi1>, vector<512x32xf32>
    %cst_24 = arith.constant dense<0.000000e+00> : vector<32xf32>
    %57 = vector.multi_reduction <add>, %56, %cst_24 [0] : vector<512x32xf32> to vector<32xf32>
    %58 = vector.shape_cast %57 : vector<32xf32> to vector<1x32xf32>
    %59 = math.log %58 : vector<1x32xf32>
    %60 = arith.addf %59, %41 : vector<1x32xf32>
    %c0_25 = arith.constant 0 : index
    %61 = arith.index_cast %arg1 : i32 to index
    %c0_26 = arith.constant 0 : index
    %62 = vector.load %arg7[%c0_25, %61, %c0_26] : memref<1x1x32xf32, #tpu.memory_space<vmem>>, vector<1x1x32xf32>
    %63 = vector.shape_cast %62 : vector<1x1x32xf32> to vector<1x32xf32>
    %64 = vector.shape_cast %60 : vector<1x32xf32> to vector<1x1x32xf32>
    tpu.vector_store %arg7[%c0_25, %61, %c0_26], %64 {strides = array<i32>} : memref<1x1x32xf32, #tpu.memory_space<vmem>>, vector<1x1x32xf32>,
    %c0_27 = arith.constant 0 : index
    %c0_28 = arith.constant 0 : index
    %65 = vector.load %arg4[%c0_27, %c0_28] : memref<32x128xf32, #tpu.memory_space<vmem>>, vector<32x128xf32>
    %cst_29 = arith.constant dense<0.000000e+00> : vector<512x32xf32>
    %66 = tpu.matmul %3, %65, %cst_29 {dimension_numbers = #tpu.dot_dimension_numbers<[1], [1], [0], [0], [0, 0, 1, 0], [], []>} : vector<512x128xf32>, vector<32x128xf32>, vector<512x32xf32> -> vector<512x32xf32>
    %cst_30 = arith.constant 0xFF800000 : f32
    %67 = vector.broadcast %cst_30 : f32 to vector<512x32xf32>
    %68 = arith.select %33, %66, %67 : vector<512x32xi1>, vector<512x32xf32>
    %cst_31 = arith.constant dense<0xFF800000> : vector<32xf32>
    %69 = vector.multi_reduction <maximumf>, %68, %cst_31 [0] : vector<512x32xf32> to vector<32xf32>
    %70 = vector.shape_cast %69 : vector<32xf32> to vector<1x32xf32>
    %71 = vector.broadcast %70 : vector<1x32xf32> to vector<512x32xf32>
    %72 = arith.subf %66, %71 : vector<512x32xf32>
    %73 = math.exp %72 : vector<512x32xf32>
    %cst_32 = arith.constant 0.000000e+00 : f32
    %74 = vector.broadcast %cst_32 : f32 to vector<512x32xf32>
    %75 = arith.select %33, %73, %74 : vector<512x32xi1>, vector<512x32xf32>
    %cst_33 = arith.constant dense<0.000000e+00> : vector<32xf32>
    %76 = vector.multi_reduction <add>, %75, %cst_33 [0] : vector<512x32xf32> to vector<32xf32>
    %77 = vector.shape_cast %76 : vector<32xf32> to vector<1x32xf32>
    %78 = math.log %77 : vector<1x32xf32>
    %79 = arith.addf %78, %70 : vector<1x32xf32>
    %c0_34 = arith.constant 0 : index
    %80 = arith.index_cast %arg1 : i32 to index
    %c0_35 = arith.constant 0 : index
    %81 = vector.load %arg6[%c0_34, %80, %c0_35] : memref<1x1x32xf32, #tpu.memory_space<vmem>>, vector<1x1x32xf32>
    %82 = vector.shape_cast %81 : vector<1x1x32xf32> to vector<1x32xf32>
    %83 = vector.shape_cast %79 : vector<1x32xf32> to vector<1x1x32xf32>
    tpu.vector_store %arg6[%c0_34, %80, %c0_35], %83 {strides = array<i32>} : memref<1x1x32xf32, #tpu.memory_space<vmem>>, vector<1x1x32xf32>,
    %c0_i32_36 = arith.constant 0 : i32
    %84 = arith.cmpi eq, %arg1, %c0_i32_36 : i32
    %85 = arith.extui %84 : i1 to i32
    %c0_i32_37 = arith.constant 0 : i32
    %86 = arith.cmpi ne, %85, %c0_i32_37 : i32
    scf.if %86 {
      %c0_38 = arith.constant 0 : index
      %c0_39 = arith.constant 0 : index
      %87 = vector.load %arg9[%c0_38, %c0_39] : memref<1x64xf32, #tpu.memory_space<vmem>>, vector<1x64xf32>
      %88 = math.log %87 : vector<1x64xf32>
      %c0_40 = arith.constant 0 : index
      %c0_41 = arith.constant 0 : index
      %89 = vector.load %arg8[%c0_40, %c0_41] : memref<1x64xf32, #tpu.memory_space<vmem>>, vector<1x64xf32>
      %90 = arith.addf %88, %89 : vector<1x64xf32>
      %91 = vector.shape_cast %90 : vector<1x64xf32> to vector<1x1x64xf32>
      %c0_42 = arith.constant 0 : index
      %c0_43 = arith.constant 0 : index
      %c0_44 = arith.constant 0 : index
      %92 = vector.load %arg5[%c0_42, %c0_43, %c0_44] : memref<1x1x64xf32, #tpu.memory_space<vmem>>, vector<1x1x64xf32>
      tpu.vector_store %arg5[%c0_42, %c0_43, %c0_44], %91 {strides = array<i32>} : memref<1x1x64xf32, #tpu.memory_space<vmem>>, vector<1x1x64xf32>,
    } else {
    }
    return
  }
  func.func @transform_0(%arg0: i32, %arg1: i32) -> (i32, i32) {
    %c0_i32 = arith.constant 0 : i32
    %c0_i32_0 = arith.constant 0 : i32
    %c0_i32_1 = arith.constant 0 : i32
    return %c0_i32, %c0_i32_0 : i32, i32
  }
  func.func @transform_1(%arg0: i32, %arg1: i32) -> (i32, i32) {
    %c1_i32 = arith.constant 1 : i32
    %0 = arith.muli %arg0, %c1_i32 : i32
    %1 = arith.addi %0, %arg1 : i32
    %c0_i32 = arith.constant 0 : i32
    %c0_i32_0 = arith.constant 0 : i32
    return %1, %c0_i32 : i32, i32
  }
  func.func @transform_2(%arg0: i32, %arg1: i32) -> (i32, i32) {
    %c1_i32 = arith.constant 1 : i32
    %0 = arith.muli %arg0, %c1_i32 : i32
    %1 = arith.addi %0, %arg1 : i32
    %c0_i32 = arith.constant 0 : i32
    %c0_i32_0 = arith.constant 0 : i32
    return %1, %c0_i32 : i32, i32
  }
  func.func @transform_3(%arg0: i32, %arg1: i32) -> (i32, i32, i32) {
    %c0_i32 = arith.constant 0 : i32
    %c0_i32_0 = arith.constant 0 : i32
    %c0_i32_1 = arith.constant 0 : i32
    return %arg0, %c0_i32, %c0_i32_0 : i32, i32, i32
  }
  func.func @transform_4(%arg0: i32, %arg1: i32) -> (i32, i32, i32) {
    %c0_i32 = arith.constant 0 : i32
    %c0_i32_0 = arith.constant 0 : i32
    %c0_i32_1 = arith.constant 0 : i32
    return %arg0, %c0_i32, %c0_i32_0 : i32, i32, i32
  }
  func.func @transform_5(%arg0: i32, %arg1: i32) -> (i32, i32, i32) {
    %c0_i32 = arith.constant 0 : i32
    %c0_i32_0 = arith.constant 0 : i32
    %c0_i32_1 = arith.constant 0 : i32
    return %arg0, %c0_i32, %c0_i32_0 : i32, i32, i32
  }
}

</mosaic_0001>

<llo_original>
// kernel: tpu_custom_call.1
$region0: #{tpu_custom_call.1}
  #allocation0 [shape = 'u32[]', space=smem, size = 0x4, offset = 0x4, fixed_abs, tag = 'smem constant byte address 0x4 - core index']
  #allocation1 [shape = 'u32[144,128]{1,0:T(1,128)}', space=vmem, size = 0x12000, scoped, tag = 'internal scratch']
  #allocation2 [shape = 'f32[1,64]{1,0:T(1,128)}', space=vmem, size = 0x200, scoped, tag = 'scratch operand']
  #allocation3 [shape = 'f32[1,64]{1,0:T(1,128)}', space=vmem, size = 0x200, scoped, tag = 'scratch operand']
  %s0 = inlined_call_operand.vmem [shape: f32[128,64], index: 0, kind: input, shape index: {}]
  %s1 = inlined_call_operand.hbm [shape: f32[1024,128], index: 1, kind: input, shape index: {}]
  %s2 = inlined_call_operand.vmem [shape: f32[64,128], index: 2, kind: input, shape index: {}]
  %s3 = inlined_call_operand.hbm [shape: f32[2,1,64], index: 3, kind: output, shape index: {0}]
  %s4 = inlined_call_operand.hbm [shape: f32[2,1,32], index: 4, kind: output, shape index: {1}]
  %s5 = inlined_call_operand.hbm [shape: f32[2,1,32], index: 5, kind: output, shape index: {2}]
  %6 = xla_tuple %s3, %s4, %s5
  %s7 = sld [smem:[#allocation0]]
  $region73: #{tpu_custom_call.1} parent=0
    _
  %s9 = ssub.s32 1, %s7
  %s10 = scalar_select 0, %s9, %s7
  $region1: #{tpu_custom_call.1} parent=0
    #allocation4 [shape = 'u8[524288]{0}', space=vmem, size = 0x80000, scoped, tag = 'input window, operand 1']
    #allocation5 [shape = 's32[2]{0}', space=sflag, size = 0x8, scoped, tag = 'scoped memory for tpu_custom_call.1']
    #allocation6 [shape = 's32[2]{0}', space=sflag, size = 0x8, scoped, tag = 'scoped memory for tpu_custom_call.1']
    #allocation7 [shape = 'u8[1024]{0}', space=vmem, size = 0x400, scoped, tag = 'output window, operand 0']
    #allocation8 [shape = 'u8[1024]{0}', space=vmem, size = 0x400, scoped, tag = 'output window, operand 1']
    #allocation9 [shape = 's32[2]{0}', space=sflag, size = 0x8, scoped, tag = 'scoped memory for tpu_custom_call.1']
    #allocation10 [shape = 'u8[1024]{0}', space=vmem, size = 0x400, scoped, tag = 'output window, operand 2']
    %11 = vsyncpa [#allocation5], 0
    %s12 = scalar_lea.sflag [#allocation5], 1
    %13 = vsyncpa %s12, 0
    %14 = vsyncpa [#allocation6], 0
    %s15 = scalar_lea.sflag [#allocation6], 1
    %16 = vsyncpa %s15, 0
    %17 = vsyncpa [#allocation9], 0
    %s18 = scalar_lea.sflag [#allocation9], 1
    %19 = vsyncpa %s18, 0
    loop: start=0, step=1, limit=4
    $region2: #{tpu_custom_call.1} parent=1 // loop_pre_header
      _
    $region3: #{tpu_custom_call.1} parent=1 // loop_header
      %s21 = sphi 0, %s25
      %p22 = scmp.ge.s32.totalorder %s21, 4
      %s28 = sphi 0, %s40
      %s29 = sphi 0, %s36
      %s30 = sphi 0, %s28
      %s31 = sphi 0, %s29
      %s32 = sphi 0, %s30
      %s33 = sphi 0, %s31
      %s41 = sphi 0, %s41
      %s43 = sphi 0, %s41
      %s44 = sphi 0, %s43
      %s58 = sphi 0, %s44
      %s66 = sphi 0, %s68
      %s69 = sphi 0, %s66
      %s70 = sphi 0, %s69
      %s86 = sphi 0, %s70
      %s94 = sphi 0, %s96
      %s97 = sphi 0, %s94
      %s98 = sphi 0, %s97
      %s114 = sphi 0, %s98
      %s120 = sphi 0, %s122
      %s123 = sphi 0, %s120
      %s124 = sphi 0, %s123
      %s140 = sphi 0, %s124
      %s146 = sphi 0, %s148
      %s149 = sphi 0, %s146
      %s150 = sphi 0, %s149
      %s166 = sphi 0, %s150
      %s172 = sphi 0, %s174
      %s175 = sphi 0, %s172
      %s176 = sphi 0, %s175
      %s192 = sphi 0, %s176
    $region4: #{tpu_custom_call.1} parent=1 // loop_header_branch
      %24 = sbr.rel (%p22) target = $region8
    $region5: #{tpu_custom_call.1} parent=1 // loop_body
      %s26 = ssub.s32 %s21, 1
      %s27 = ssub.s32 %s21, 2
      %s34 = sadd.s32 1, %s29
      %p35 = scmp.ge.s32.totalorder %s34, 1
      %s36 = scalar_select %p35, 0, %s34
      %s37 = sadd.s32 1, %s28
      %s38 = scalar_select %p35, %s37, %s28
      %p39 = scmp.ge.s32.totalorder %s38, 2
      %s40 = scalar_select %p39, 0, %s38
      %s42 = sadd.s32 %s41, 1
      %p45 = scmp.eq.s32.totalorder %s21, 1
      %p46 = scmp.ne.s32.totalorder %s41, %s43
      %p47 = scmp.eq.s32.totalorder %s21, 0
      %p48 = por %p46, %p47
      %p49 = scmp.ne.s32.totalorder %s41, %s43
      %p50 = scmp.eq.s32.totalorder %s26, 1
      %p51 = por %p49, %p50
      %p52 = scmp.ne.s32.totalorder %s43, %s44
      %p53 = scmp.eq.s32.totalorder %s26, 0
      %p54 = por %p52, %p53
      %p55 = scmp.ne.s32.totalorder %s43, %s44
      %p56 = scmp.eq.s32.totalorder %s27, 1
      %p57 = por %p55, %p56
      %p59 = scmp.ne.s32.totalorder %s44, %s58
      %p60 = scmp.eq.s32.totalorder %s27, 0
      %p61 = por %p59, %p60
      %s62 = sadd.s32 %s28, %s29
      %s63 = sadd.s32 %s40, %s36
      %s64 = ssub.s32 %s62, %s63
      %p65 = scmp.eq.s32.totalorder %s64, 0
      %s67 = sadd.s32 %s66, 1
      %s68 = scalar_select %p65, %s66, %s67
      %p71 = pneg %p65
      %p72 = scmp.eq.s32.totalorder %s21, 1
      %p73 = por %p71, %p72
      %p74 = scmp.ne.s32.totalorder %s66, %s69
      %p75 = scmp.eq.s32.totalorder %s21, 0
      %p76 = por %p74, %p75
      %p77 = scmp.ne.s32.totalorder %s66, %s69
      %p78 = scmp.eq.s32.totalorder %s26, 1
      %p79 = por %p77, %p78
      %p80 = scmp.ne.s32.totalorder %s69, %s70
      %p81 = scmp.eq.s32.totalorder %s26, 0
      %p82 = por %p80, %p81
      %p83 = scmp.ne.s32.totalorder %s69, %s70
      %p84 = scmp.eq.s32.totalorder %s27, 1
      %p85 = por %p83, %p84
      %p87 = scmp.ne.s32.totalorder %s70, %s86
      %p88 = scmp.eq.s32.totalorder %s27, 0
      %p89 = por %p87, %p88
      %s90 = sadd.s32 %s28, %s29
      %s91 = sadd.s32 %s40, %s36
      %s92 = ssub.s32 %s90, %s91
      %p93 = scmp.eq.s32.totalorder %s92, 0
      %s95 = sadd.s32 %s94, 1
      %s96 = scalar_select %p93, %s94, %s95
      %p99 = pneg %p93
      %p100 = scmp.eq.s32.totalorder %s21, 1
      %p101 = por %p99, %p100
      %p102 = scmp.ne.s32.totalorder %s94, %s97
      %p103 = scmp.eq.s32.totalorder %s21, 0
      %p104 = por %p102, %p103
      %p105 = scmp.ne.s32.totalorder %s94, %s97
      %p106 = scmp.eq.s32.totalorder %s26, 1
      %p107 = por %p105, %p106
      %p108 = scmp.ne.s32.totalorder %s97, %s98
      %p109 = scmp.eq.s32.totalorder %s26, 0
      %p110 = por %p108, %p109
      %p111 = scmp.ne.s32.totalorder %s97, %s98
      %p112 = scmp.eq.s32.totalorder %s27, 1
      %p113 = por %p111, %p112
      %p115 = scmp.ne.s32.totalorder %s98, %s114
      %p116 = scmp.eq.s32.totalorder %s27, 0
      %p117 = por %p115, %p116
      %s118 = ssub.s32 %s28, %s40
      %p119 = scmp.eq.s32.totalorder %s118, 0
      %s121 = sadd.s32 %s120, 1
      %s122 = scalar_select %p119, %s120, %s121
      %p125 = pneg %p119
      %p126 = scmp.eq.s32.totalorder %s21, 1
      %p127 = por %p125, %p126
      %p128 = scmp.ne.s32.totalorder %s120, %s123
      %p129 = scmp.eq.s32.totalorder %s21, 0
      %p130 = por %p128, %p129
      %p131 = scmp.ne.s32.totalorder %s120, %s123
      %p132 = scmp.eq.s32.totalorder %s26, 1
      %p133 = por %p131, %p132
      %p134 = scmp.ne.s32.totalorder %s123, %s124
      %p135 = scmp.eq.s32.totalorder %s26, 0
      %p136 = por %p134, %p135
      %p137 = scmp.ne.s32.totalorder %s123, %s124
      %p138 = scmp.eq.s32.totalorder %s27, 1
      %p139 = por %p137, %p138
      %p141 = scmp.ne.s32.totalorder %s124, %s140
      %p142 = scmp.eq.s32.totalorder %s27, 0
      %p143 = por %p141, %p142
      %s144 = ssub.s32 %s28, %s40
      %p145 = scmp.eq.s32.totalorder %s144, 0
      %s147 = sadd.s32 %s146, 1
      %s148 = scalar_select %p145, %s146, %s147
      %p151 = pneg %p145
      %p152 = scmp.eq.s32.totalorder %s21, 1
      %p153 = por %p151, %p152
      %p154 = scmp.ne.s32.totalorder %s146, %s149
      %p155 = scmp.eq.s32.totalorder %s21, 0
      %p156 = por %p154, %p155
      %p157 = scmp.ne.s32.totalorder %s146, %s149
      %p158 = scmp.eq.s32.totalorder %s26, 1
      %p159 = por %p157, %p158
      %p160 = scmp.ne.s32.totalorder %s149, %s150
      %p161 = scmp.eq.s32.totalorder %s26, 0
      %p162 = por %p160, %p161
      %p163 = scmp.ne.s32.totalorder %s149, %s150
      %p164 = scmp.eq.s32.totalorder %s27, 1
      %p165 = por %p163, %p164
      %p167 = scmp.ne.s32.totalorder %s150, %s166
      %p168 = scmp.eq.s32.totalorder %s27, 0
      %p169 = por %p167, %p168
      %s170 = ssub.s32 %s28, %s40
      %p171 = scmp.eq.s32.totalorder %s170, 0
      %s173 = sadd.s32 %s172, 1
      %s174 = scalar_select %p171, %s172, %s173
      %p177 = pneg %p171
      %p178 = scmp.eq.s32.totalorder %s21, 1
      %p179 = por %p177, %p178
      %p180 = scmp.ne.s32.totalorder %s172, %s175
      %p181 = scmp.eq.s32.totalorder %s21, 0
      %p182 = por %p180, %p181
      %p183 = scmp.ne.s32.totalorder %s172, %s175
      %p184 = scmp.eq.s32.totalorder %s26, 1
      %p185 = por %p183, %p184
      %p186 = scmp.ne.s32.totalorder %s175, %s176
      %p187 = scmp.eq.s32.totalorder %s26, 0
      %p188 = por %p186, %p187
      %p189 = scmp.ne.s32.totalorder %s175, %s176
      %p190 = scmp.eq.s32.totalorder %s27, 1
      %p191 = por %p189, %p190
      %p193 = scmp.ne.s32.totalorder %s176, %s192
      %p194 = scmp.eq.s32.totalorder %s27, 0
      %p195 = por %p193, %p194
      %p196 = scmp.le.s32.totalorder 1, %s21
      %p197 = scmp.lt.s32.totalorder %s21, 3
      %p198 = pnand %p196, %p197
      %p199 = pneg %p198
      // Predicated region
      $region9: #{tpu_custom_call.1} parent=5 // pred_check
        _
      $region10: #{tpu_custom_call.1} parent=5 // pred_check_branch
        %201 = sbr.rel (%p198) target = $region12
      $region11: #{tpu_custom_call.1} parent=5 // pred_region
        %s202 = ssub.s32 %s21, 1
        // Predicated region
        $region13: #{tpu_custom_call.1} parent=11 // pred_check
          %p203 = pneg %p54
        $region14: #{tpu_custom_call.1} parent=11 // pred_check_branch
          %205 = sbr.rel (%p203) target = $region16
        $region15: #{tpu_custom_call.1} parent=11 // pred_region
          _
        $region16: #{tpu_custom_call.1} parent=11 // pred_fallthru
          _
      $region12: #{tpu_custom_call.1} parent=5 // pred_fallthru
        _
      %p206 = scmp.lt.s32.totalorder %s21, 2
      // Predicated region
      $region17: #{tpu_custom_call.1} parent=5 // pred_check
        %p207 = pneg %p206
      $region18: #{tpu_custom_call.1} parent=5 // pred_check_branch
        %209 = sbr.rel (%p207) target = $region20
      $region19: #{tpu_custom_call.1} parent=5 // pred_region
        // Predicated region
        $region21: #{tpu_custom_call.1} parent=19 // pred_check
          %p210 = pneg %p76
        $region22: #{tpu_custom_call.1} parent=19 // pred_check_branch
          %212 = sbr.rel (%p210) target = $region24
        $region23: #{tpu_custom_call.1} parent=19 // pred_region
          %s213 = sand.u32 %s66, 1
          %s214 = scalar_lea.sflag [#allocation5], %s213
          %s215 = sand.u32 %s66, 1
          %s216 = smul.addr %s215, 512
          %s217 = scalar_lea.vmem [#allocation4], %s216
          %s218 = sadd.s32 %s28, %s29
          %s219 = smul.u32 64, %s218
          %s221 = ssub.s32 8192, 8192
          %222 = vsyncadd %s214, %s221
          %s223 = smul.addr %s219, 128
          %s224 = scalar_lea.hbm %s1, %s223
          %s225 = sshll.u32 %s217, 4
          %s226 = int_to_ptr.vmem [resolvable:$true] %s225
          %231 = dma.hbm_to_vmem [thread:$0]  %s224, 8192, %s226, %s214, 128, 128, 8
        $region24: #{tpu_custom_call.1} parent=19 // pred_fallthru
          _
        // Predicated region
        $region25: #{tpu_custom_call.1} parent=19 // pred_check
          %p232 = pneg %p104
        $region26: #{tpu_custom_call.1} parent=19 // pred_check_branch
          %234 = sbr.rel (%p232) target = $region28
        $region27: #{tpu_custom_call.1} parent=19 // pred_region
          %s235 = sadd.s32 %s28, %s29
          %s236 = smul.u32 4, %s235
          %p237 = scmp.lt.s32.totalorder %s236, 7
          %s238 = scalar_select %p237, %s236, 7
          %s239 = smul.addr %s238, 8
          %s240 = scalar_lea.vmem %s2, %s239
          %s241 = sadd.s32 %s28, %s29
          %s242 = smul.u32 4, %s241
        $region28: #{tpu_custom_call.1} parent=19 // pred_fallthru
          _
      $region20: #{tpu_custom_call.1} parent=5 // pred_fallthru
        _
      %p243 = scmp.le.s32.totalorder 1, %s21
      %p244 = scmp.lt.s32.totalorder %s21, 3
      %p245 = pnand %p243, %p244
      %p246 = pneg %p245
      // Predicated region
      $region29: #{tpu_custom_call.1} parent=5 // pred_check
        _
      $region30: #{tpu_custom_call.1} parent=5 // pred_check_branch
        %248 = sbr.rel (%p245) target = $region32
      $region31: #{tpu_custom_call.1} parent=5 // pred_region
        %s249 = ssub.s32 %s21, 1
        %s250 = sand.u32 %s69, 1
        %s251 = scalar_lea.sflag [#allocation5], %s250
        %s252 = sand.u32 %s69, 1
        %s253 = smul.addr %s252, 512
        %s254 = scalar_lea.vmem [#allocation4], %s253
        // Predicated region
        $region33: #{tpu_custom_call.1} parent=31 // pred_check
          %p255 = pneg %p82
        $region34: #{tpu_custom_call.1} parent=31 // pred_check_branch
          %257 = sbr.rel (%p255) target = $region36
        $region35: #{tpu_custom_call.1} parent=31 // pred_region
          %258 = dma.done %s251, 8192
        $region36: #{tpu_custom_call.1} parent=31 // pred_fallthru
          _
        %p259 = pneg %p54
        %p260 = pneg %p51
        %s261 = sand.u32 %s69, 1
        %s262 = scalar_lea.sflag [#allocation5], %s261
        %s263 = sand.u32 %s69, 1
        %s264 = smul.addr %s263, 512
        %s265 = scalar_lea.vmem [#allocation4], %s264
        %p266 = pneg %p82
        %p267 = pneg %p79
        %s268 = sadd.s32 %s30, %s31
        %s269 = smul.u32 4, %s268
        %p270 = scmp.lt.s32.totalorder %s269, 7
        %s271 = scalar_select %p270, %s269, 7
        %s272 = smul.addr %s271, 8
        %s273 = scalar_lea.vmem %s2, %s272
        %p274 = pneg %p110
        %p275 = pneg %p107
        %p276 = pneg %p136
        %p277 = pneg %p133
        %s278 = sand.u32 %s123, 1
        %s279 = scalar_lea.sflag [#allocation6], %s278
        %s280 = sand.u32 %s123, 1
        %s281 = scalar_lea.vmem [#allocation7], %s280
        %p282 = pneg %p162
        %p283 = pneg %p159
        %s284 = sand.u32 %s26, 1
        %s285 = scalar_lea.sflag [#allocation9], %s284
        %s286 = sand.u32 %s149, 1
        %s287 = scalar_lea.vmem [#allocation8], %s286
        %p288 = pneg %p188
        %p289 = pneg %p185
        %s290 = sand.u32 %s26, 1
        %s291 = scalar_lea.sflag [#allocation9], %s290
        %s292 = sand.u32 %s175, 1
        %s293 = scalar_lea.vmem [#allocation10], %s292
        %s294 = sadd.s32 %s30, %s31
        %s295 = smul.u32 64, %s294
        %s296 = sadd.s32 %s30, %s31
        %s297 = smul.u32 4, %s296
        %p298 = scmp.lt.s32.totalorder %s297, 7
        %s299 = scalar_select %p298, %s297, 7
        %s300 = smul.addr %s299, 8
        %s301 = scalar_lea.vmem %s2, %s300
        %s302 = sadd.s32 %s30, %s31
        %s303 = smul.u32 4, %s302
        %p304 = scmp.eq.s32.totalorder %s31, 0
        // Predicated region
        $region37: #{tpu_custom_call.1} parent=31 // pred_check
          %p305 = pneg %p304
        $region38: #{tpu_custom_call.1} parent=31 // pred_check_branch
          %307 = sbr.rel (%p305) target = $region40
        $region39: #{tpu_custom_call.1} parent=31 // pred_region
          %vm308 = vcmask 516096
          %309 = vst.msk [vmem:[#allocation2] sm:$0x1] %vm308, -inf
          %310 = vst.msk [vmem:[#allocation3] sm:$0x1] %vm308, 0.0
        $region40: #{tpu_custom_call.1} parent=31 // pred_fallthru
          _
        %v311 = vld [vmem:[%s254] sm:$0xff]
        %v312 = vld [vmem:[%s254 + $0x8] sm:$0xff]
        %v313 = vld [vmem:[%s254 + $0x10] sm:$0xff]
        %v314 = vld [vmem:[%s254 + $0x18] sm:$0xff]
        %v315 = vld [vmem:[%s254 + $0x20] sm:$0xff]
        %v316 = vld [vmem:[%s254 + $0x28] sm:$0xff]
        %v317 = vld [vmem:[%s254 + $0x30] sm:$0xff]
        %v318 = vld [vmem:[%s254 + $0x38] sm:$0xff]
        %v319 = vld [vmem:[%s254 + $0x40] sm:$0xff]
        %v320 = vld [vmem:[%s254 + $0x48] sm:$0xff]
        %v321 = vld [vmem:[%s254 + $0x50] sm:$0xff]
        %v322 = vld [vmem:[%s254 + $0x58] sm:$0xff]
        %v323 = vld [vmem:[%s254 + $0x60] sm:$0xff]
        %v324 = vld [vmem:[%s254 + $0x68] sm:$0xff]
        %v325 = vld [vmem:[%s254 + $0x70] sm:$0xff]
        %v326 = vld [vmem:[%s254 + $0x78] sm:$0xff]
        %v327 = vld [vmem:[%s254 + $0x80] sm:$0xff]
        %v328 = vld [vmem:[%s254 + $0x88] sm:$0xff]
        %v329 = vld [vmem:[%s254 + $0x90] sm:$0xff]
        %v330 = vld [vmem:[%s254 + $0x98] sm:$0xff]
        %v331 = vld [vmem:[%s254 + $0xa0] sm:$0xff]
        %v332 = vld [vmem:[%s254 + $0xa8] sm:$0xff]
        %v333 = vld [vmem:[%s254 + $0xb0] sm:$0xff]
        %v334 = vld [vmem:[%s254 + $0xb8] sm:$0xff]
        %v335 = vld [vmem:[%s254 + $0xc0] sm:$0xff]
        %v336 = vld [vmem:[%s254 + $0xc8] sm:$0xff]
        %v337 = vld [vmem:[%s254 + $0xd0] sm:$0xff]
        %v338 = vld [vmem:[%s254 + $0xd8] sm:$0xff]
        %v339 = vld [vmem:[%s254 + $0xe0] sm:$0xff]
        %v340 = vld [vmem:[%s254 + $0xe8] sm:$0xff]
        %v341 = vld [vmem:[%s254 + $0xf0] sm:$0xff]
        %v342 = vld [vmem:[%s254 + $0xf8] sm:$0xff]
        %v343 = vld [vmem:[%s254 + $0x100] sm:$0xff]
        %v344 = vld [vmem:[%s254 + $0x108] sm:$0xff]
        %v345 = vld [vmem:[%s254 + $0x110] sm:$0xff]
        %v346 = vld [vmem:[%s254 + $0x118] sm:$0xff]
        %v347 = vld [vmem:[%s254 + $0x120] sm:$0xff]
        %v348 = vld [vmem:[%s254 + $0x128] sm:$0xff]
        %v349 = vld [vmem:[%s254 + $0x130] sm:$0xff]
        %v350 = vld [vmem:[%s254 + $0x138] sm:$0xff]
        %v351 = vld [vmem:[%s254 + $0x140] sm:$0xff]
        %v352 = vld [vmem:[%s254 + $0x148] sm:$0xff]
        %v353 = vld [vmem:[%s254 + $0x150] sm:$0xff]
        %v354 = vld [vmem:[%s254 + $0x158] sm:$0xff]
        %v355 = vld [vmem:[%s254 + $0x160] sm:$0xff]
        %v356 = vld [vmem:[%s254 + $0x168] sm:$0xff]
        %v357 = vld [vmem:[%s254 + $0x170] sm:$0xff]
        %v358 = vld [vmem:[%s254 + $0x178] sm:$0xff]
        %v359 = vld [vmem:[%s254 + $0x180] sm:$0xff]
        %v360 = vld [vmem:[%s254 + $0x188] sm:$0xff]
        %v361 = vld [vmem:[%s254 + $0x190] sm:$0xff]
        %v362 = vld [vmem:[%s254 + $0x198] sm:$0xff]
        %v363 = vld [vmem:[%s254 + $0x1a0] sm:$0xff]
        %v364 = vld [vmem:[%s254 + $0x1a8] sm:$0xff]
        %v365 = vld [vmem:[%s254 + $0x1b0] sm:$0xff]
        %v366 = vld [vmem:[%s254 + $0x1b8] sm:$0xff]
        %v367 = vld [vmem:[%s254 + $0x1c0] sm:$0xff]
        %v368 = vld [vmem:[%s254 + $0x1c8] sm:$0xff]
        %v369 = vld [vmem:[%s254 + $0x1d0] sm:$0xff]
        %v370 = vld [vmem:[%s254 + $0x1d8] sm:$0xff]
        %v371 = vld [vmem:[%s254 + $0x1e0] sm:$0xff]
        %v372 = vld [vmem:[%s254 + $0x1e8] sm:$0xff]
        %v373 = vld [vmem:[%s254 + $0x1f0] sm:$0xff]
        %v374 = vld [vmem:[%s254 + $0x1f8] sm:$0xff]
        %v375 = vld [vmem:[%s0] sm:$0xff]
        %v376 = vld [vmem:[%s0 + $0x8] sm:$0xff]
        %v377 = vld [vmem:[%s0 + $0x10] sm:$0xff]
        %v378 = vld [vmem:[%s0 + $0x18] sm:$0xff]
        %v379 = vld [vmem:[%s0 + $0x20] sm:$0xff]
        %v380 = vld [vmem:[%s0 + $0x28] sm:$0xff]
        %v381 = vld [vmem:[%s0 + $0x30] sm:$0xff]
        %v382 = vld [vmem:[%s0 + $0x38] sm:$0xff]
        %v383 = vld [vmem:[%s0 + $0x40] sm:$0xff]
        %v384 = vld [vmem:[%s0 + $0x48] sm:$0xff]
        %v385 = vld [vmem:[%s0 + $0x50] sm:$0xff]
        %v386 = vld [vmem:[%s0 + $0x58] sm:$0xff]
        %v387 = vld [vmem:[%s0 + $0x60] sm:$0xff]
        %v388 = vld [vmem:[%s0 + $0x68] sm:$0xff]
        %v389 = vld [vmem:[%s0 + $0x70] sm:$0xff]
        %v390 = vld [vmem:[%s0 + $0x78] sm:$0xff]
        %391 = vmatprep.subr.mxu0 0.0
        %392 = vmatpush1.msra.mxu0 %v375
        %393 = vmatprep.subr.mxu0 0.0
        %394 = vmatpush1.msra.mxu0 %v376
        %395 = vmatprep.subr.mxu0 0.0
        %396 = vmatpush1.msra.mxu0 %v377
        %397 = vmatprep.subr.mxu0 0.0
        %398 = vmatpush1.msra.mxu0 %v378
        %399 = vmatprep.subr.mxu0 0.0
        %400 = vmatpush1.msra.mxu0 %v379
        %401 = vmatprep.subr.mxu0 0.0
        %402 = vmatpush1.msra.mxu0 %v380
        %403 = vmatprep.subr.mxu0 0.0
        %404 = vmatpush1.msra.mxu0 %v381
        %405 = vmatprep.subr.mxu0 0.0
        %406 = vmatpush1.msra.mxu0 %v382
        %407 = vmatprep.subr.mxu0 0.0
        %408 = vmatpush1.msra.mxu0 %v383
        %409 = vmatprep.subr.mxu0 0.0
        %410 = vmatpush1.msra.mxu0 %v384
        %411 = vmatprep.subr.mxu0 0.0
        %412 = vmatpush1.msra.mxu0 %v385
        %413 = vmatprep.subr.mxu0 0.0
        %414 = vmatpush1.msra.mxu0 %v386
        %415 = vmatprep.subr.mxu0 0.0
        %416 = vmatpush1.msra.mxu0 %v387
        %417 = vmatprep.subr.mxu0 0.0
        %418 = vmatpush1.msra.mxu0 %v388
        %419 = vmatprep.subr.mxu0 0.0
        %420 = vmatpush1.msra.mxu0 %v389
        %421 = vmatprep.subr.mxu0 0.0
        %422 = vmatpush1.msra.mxu0 %v390
        %423 = vmatprep.subr.mxu0 0.0
        %424 = vmatpush1.msra.mxu0 0.0
        %425 = vmatprep.subr.mxu0 0.0
        %426 = vmatpush1.msra.mxu0 0.0
        %427 = vmatprep.subr.mxu0 0.0
        %428 = vmatpush1.msra.mxu0 0.0
        %429 = vmatprep.subr.mxu0 0.0
        %430 = vmatpush1.msra.mxu0 0.0
        %431 = vmatprep.subr.mxu0 0.0
        %432 = vmatpush1.msra.mxu0 0.0
        %433 = vmatprep.subr.mxu0 0.0
        %434 = vmatpush1.msra.mxu0 0.0
        %435 = vmatprep.subr.mxu0 0.0
        %436 = vmatpush1.msra.mxu0 0.0
        %437 = vmatprep.subr.mxu0 0.0
        %438 = vmatpush1.msra.mxu0 0.0
        %439 = vmatprep.subr.mxu0 0.0
        %440 = vmatpush1.msra.mxu0 0.0
        %441 = vmatprep.subr.mxu0 0.0
        %442 = vmatpush1.msra.mxu0 0.0
        %443 = vmatprep.subr.mxu0 0.0
        %444 = vmatpush1.msra.mxu0 0.0
        %445 = vmatprep.subr.mxu0 0.0
        %446 = vmatpush1.msra.mxu0 0.0
        %447 = vmatprep.subr.mxu0 0.0
        %448 = vmatpush1.msra.mxu0 0.0
        %449 = vmatprep.subr.mxu0 0.0
        %450 = vmatpush1.msra.mxu0 0.0
        %451 = vmatprep.subr.mxu0 0.0
        %452 = vmatpush1.msra.mxu0 0.0
        %453 = vmatprep.subr.mxu0 0.0
        %454 = vmatpush1.msra.mxu0 0.0
        %455 = vmatprep.mubr.f32.mxu0 0.0
        %456 = vmatmul.mubr.f32.gmra.mrb[0].mxu0 %v311
        %v457 = vpop.f32.mrb[0].mxu0
        %v458 = vadd.f32 0.0, %v457
        %v459 = vpop.f32.mrb[0].mxu0
        %460 = vmatprep.mubr.f32.mxu0 0.0
        %461 = vmatmul.mubr.f32.gmra.mrb[0].mxu0 %v312
        %v462 = vpop.f32.mrb[0].mxu0
        %v463 = vadd.f32 0.0, %v462
        %v464 = vpop.f32.mrb[0].mxu0
        %465 = vmatprep.mubr.f32.mxu0 0.0
        %466 = vmatmul.mubr.f32.gmra.mrb[0].mxu0 %v313
        %v467 = vpop.f32.mrb[0].mxu0
        %v468 = vadd.f32 0.0, %v467
        %v469 = vpop.f32.mrb[0].mxu0
        %470 = vmatprep.mubr.f32.mxu0 0.0
        %471 = vmatmul.mubr.f32.gmra.mrb[0].mxu0 %v314
        %v472 = vpop.f32.mrb[0].mxu0
        %v473 = vadd.f32 0.0, %v472
        %v474 = vpop.f32.mrb[0].mxu0
        %475 = vmatprep.mubr.f32.mxu0 0.0
        %476 = vmatmul.mubr.f32.gmra.mrb[0].mxu0 %v315
        %v477 = vpop.f32.mrb[0].mxu0
        %v478 = vadd.f32 0.0, %v477
        %v479 = vpop.f32.mrb[0].mxu0
        %480 = vmatprep.mubr.f32.mxu0 0.0
        %481 = vmatmul.mubr.f32.gmra.mrb[0].mxu0 %v316
        %v482 = vpop.f32.mrb[0].mxu0
        %v483 = vadd.f32 0.0, %v482
        %v484 = vpop.f32.mrb[0].mxu0
        %485 = vmatprep.mubr.f32.mxu0 0.0
        %486 = vmatmul.mubr.f32.gmra.mrb[0].mxu0 %v317
        %v487 = vpop.f32.mrb[0].mxu0
        %v488 = vadd.f32 0.0, %v487
        %v489 = vpop.f32.mrb[0].mxu0
        %490 = vmatprep.mubr.f32.mxu0 0.0
        %491 = vmatmul.mubr.f32.gmra.mrb[0].mxu0 %v318
        %v492 = vpop.f32.mrb[0].mxu0
        %v493 = vadd.f32 0.0, %v492
        %v494 = vpop.f32.mrb[0].mxu0
        %495 = vmatprep.mubr.f32.mxu0 0.0
        %496 = vmatmul.mubr.f32.gmra.mrb[0].mxu0 %v319
        %v497 = vpop.f32.mrb[0].mxu0
        %v498 = vadd.f32 0.0, %v497
        %v499 = vpop.f32.mrb[0].mxu0
        %500 = vmatprep.mubr.f32.mxu0 0.0
        %501 = vmatmul.mubr.f32.gmra.mrb[0].mxu0 %v320
        %v502 = vpop.f32.mrb[0].mxu0
        %v503 = vadd.f32 0.0, %v502
        %v504 = vpop.f32.mrb[0].mxu0
        %505 = vmatprep.mubr.f32.mxu0 0.0
        %506 = vmatmul.mubr.f32.gmra.mrb[0].mxu0 %v321
        %v507 = vpop.f32.mrb[0].mxu0
        %v508 = vadd.f32 0.0, %v507
        %v509 = vpop.f32.mrb[0].mxu0
        %510 = vmatprep.mubr.f32.mxu0 0.0
        %511 = vmatmul.mubr.f32.gmra.mrb[0].mxu0 %v322
        %v512 = vpop.f32.mrb[0].mxu0
        %v513 = vadd.f32 0.0, %v512
        %v514 = vpop.f32.mrb[0].mxu0
        %515 = vmatprep.mubr.f32.mxu0 0.0
        %516 = vmatmul.mubr.f32.gmra.mrb[0].mxu0 %v323
        %v517 = vpop.f32.mrb[0].mxu0
        %v518 = vadd.f32 0.0, %v517
        %v519 = vpop.f32.mrb[0].mxu0
        %520 = vmatprep.mubr.f32.mxu0 0.0
        %521 = vmatmul.mubr.f32.gmra.mrb[0].mxu0 %v324
        %v522 = vpop.f32.mrb[0].mxu0
        %v523 = vadd.f32 0.0, %v522
        %v524 = vpop.f32.mrb[0].mxu0
        %525 = vmatprep.mubr.f32.mxu0 0.0
        %526 = vmatmul.mubr.f32.gmra.mrb[0].mxu0 %v325
        %v527 = vpop.f32.mrb[0].mxu0
        %v528 = vadd.f32 0.0, %v527
        %v529 = vpop.f32.mrb[0].mxu0
        %530 = vmatprep.mubr.f32.mxu0 0.0
        %531 = vmatmul.mubr.f32.gmra.mrb[0].mxu0 %v326
        %v532 = vpop.f32.mrb[0].mxu0
        %v533 = vadd.f32 0.0, %v532
        %v534 = vpop.f32.mrb[0].mxu0
        %535 = vmatprep.mubr.f32.mxu0 0.0
        %536 = vmatmul.mubr.f32.gmra.mrb[0].mxu0 %v327
        %v537 = vpop.f32.mrb[0].mxu0
        %v538 = vadd.f32 0.0, %v537
        %v539 = vpop.f32.mrb[0].mxu0
        %540 = vmatprep.mubr.f32.mxu0 0.0
        %541 = vmatmul.mubr.f32.gmra.mrb[0].mxu0 %v328
        %v542 = vpop.f32.mrb[0].mxu0
        %v543 = vadd.f32 0.0, %v542
        %v544 = vpop.f32.mrb[0].mxu0
        %545 = vmatprep.mubr.f32.mxu0 0.0
        %546 = vmatmul.mubr.f32.gmra.mrb[0].mxu0 %v329
        %v547 = vpop.f32.mrb[0].mxu0
        %v548 = vadd.f32 0.0, %v547
        %v549 = vpop.f32.mrb[0].mxu0
        %550 = vmatprep.mubr.f32.mxu0 0.0
        %551 = vmatmul.mubr.f32.gmra.mrb[0].mxu0 %v330
        %v552 = vpop.f32.mrb[0].mxu0
        %v553 = vadd.f32 0.0, %v552
        %v554 = vpop.f32.mrb[0].mxu0
        %555 = vmatprep.mubr.f32.mxu0 0.0
        %556 = vmatmul.mubr.f32.gmra.mrb[0].mxu0 %v331
        %v557 = vpop.f32.mrb[0].mxu0
        %v558 = vadd.f32 0.0, %v557
        %v559 = vpop.f32.mrb[0].mxu0
        %560 = vmatprep.mubr.f32.mxu0 0.0
        %561 = vmatmul.mubr.f32.gmra.mrb[0].mxu0 %v332
        %v562 = vpop.f32.mrb[0].mxu0
        %v563 = vadd.f32 0.0, %v562
        %v564 = vpop.f32.mrb[0].mxu0
        %565 = vmatprep.mubr.f32.mxu0 0.0
        %566 = vmatmul.mubr.f32.gmra.mrb[0].mxu0 %v333
        %v567 = vpop.f32.mrb[0].mxu0
        %v568 = vadd.f32 0.0, %v567
        %v569 = vpop.f32.mrb[0].mxu0
        %570 = vmatprep.mubr.f32.mxu0 0.0
        %571 = vmatmul.mubr.f32.gmra.mrb[0].mxu0 %v334
        %v572 = vpop.f32.mrb[0].mxu0
        %v573 = vadd.f32 0.0, %v572
        %v574 = vpop.f32.mrb[0].mxu0
        %575 = vmatprep.mubr.f32.mxu0 0.0
        %576 = vmatmul.mubr.f32.gmra.mrb[0].mxu0 %v335
        %v577 = vpop.f32.mrb[0].mxu0
        %v578 = vadd.f32 0.0, %v577
        %v579 = vpop.f32.mrb[0].mxu0
        %580 = vmatprep.mubr.f32.mxu0 0.0
        %581 = vmatmul.mubr.f32.gmra.mrb[0].mxu0 %v336
        %v582 = vpop.f32.mrb[0].mxu0
        %v583 = vadd.f32 0.0, %v582
        %v584 = vpop.f32.mrb[0].mxu0
        %585 = vmatprep.mubr.f32.mxu0 0.0
        %586 = vmatmul.mubr.f32.gmra.mrb[0].mxu0 %v337
        %v587 = vpop.f32.mrb[0].mxu0
        %v588 = vadd.f32 0.0, %v587
        %v589 = vpop.f32.mrb[0].mxu0
        %590 = vmatprep.mubr.f32.mxu0 0.0
        %591 = vmatmul.mubr.f32.gmra.mrb[0].mxu0 %v338
        %v592 = vpop.f32.mrb[0].mxu0
        %v593 = vadd.f32 0.0, %v592
        %v594 = vpop.f32.mrb[0].mxu0
        %595 = vmatprep.mubr.f32.mxu0 0.0
        %596 = vmatmul.mubr.f32.gmra.mrb[0].mxu0 %v339
        %v597 = vpop.f32.mrb[0].mxu0
        %v598 = vadd.f32 0.0, %v597
        %v599 = vpop.f32.mrb[0].mxu0
        %600 = vmatprep.mubr.f32.mxu0 0.0
        %601 = vmatmul.mubr.f32.gmra.mrb[0].mxu0 %v340
        %v602 = vpop.f32.mrb[0].mxu0
        %v603 = vadd.f32 0.0, %v602
        %v604 = vpop.f32.mrb[0].mxu0
        %605 = vmatprep.mubr.f32.mxu0 0.0
        %606 = vmatmul.mubr.f32.gmra.mrb[0].mxu0 %v341
        %v607 = vpop.f32.mrb[0].mxu0
        %v608 = vadd.f32 0.0, %v607
        %v609 = vpop.f32.mrb[0].mxu0
        %610 = vmatprep.mubr.f32.mxu0 0.0
        %611 = vmatmul.mubr.f32.gmra.mrb[0].mxu0 %v342
        %v612 = vpop.f32.mrb[0].mxu0
        %v613 = vadd.f32 0.0, %v612
        %v614 = vpop.f32.mrb[0].mxu0
        %615 = vmatprep.mubr.f32.mxu0 0.0
        %616 = vmatmul.mubr.f32.gmra.mrb[0].mxu0 %v343
        %v617 = vpop.f32.mrb[0].mxu0
        %v618 = vadd.f32 0.0, %v617
        %v619 = vpop.f32.mrb[0].mxu0
        %620 = vmatprep.mubr.f32.mxu0 0.0
        %621 = vmatmul.mubr.f32.gmra.mrb[0].mxu0 %v344
        %v622 = vpop.f32.mrb[0].mxu0
        %v623 = vadd.f32 0.0, %v622
        %v624 = vpop.f32.mrb[0].mxu0
        %625 = vmatprep.mubr.f32.mxu0 0.0
        %626 = vmatmul.mubr.f32.gmra.mrb[0].mxu0 %v345
        %v627 = vpop.f32.mrb[0].mxu0
        %v628 = vadd.f32 0.0, %v627
        %v629 = vpop.f32.mrb[0].mxu0
        %630 = vmatprep.mubr.f32.mxu0 0.0
        %631 = vmatmul.mubr.f32.gmra.mrb[0].mxu0 %v346
        %v632 = vpop.f32.mrb[0].mxu0
        %v633 = vadd.f32 0.0, %v632
        %v634 = vpop.f32.mrb[0].mxu0
        %635 = vmatprep.mubr.f32.mxu0 0.0
        %636 = vmatmul.mubr.f32.gmra.mrb[0].mxu0 %v347
        %v637 = vpop.f32.mrb[0].mxu0
        %v638 = vadd.f32 0.0, %v637
        %v639 = vpop.f32.mrb[0].mxu0
        %640 = vmatprep.mubr.f32.mxu0 0.0
        %641 = vmatmul.mubr.f32.gmra.mrb[0].mxu0 %v348
        %v642 = vpop.f32.mrb[0].mxu0
        %v643 = vadd.f32 0.0, %v642
        %v644 = vpop.f32.mrb[0].mxu0
        %645 = vmatprep.mubr.f32.mxu0 0.0
        %646 = vmatmul.mubr.f32.gmra.mrb[0].mxu0 %v349
        %v647 = vpop.f32.mrb[0].mxu0
        %v648 = vadd.f32 0.0, %v647
        %v649 = vpop.f32.mrb[0].mxu0
        %650 = vmatprep.mubr.f32.mxu0 0.0
        %651 = vmatmul.mubr.f32.gmra.mrb[0].mxu0 %v350
        %v652 = vpop.f32.mrb[0].mxu0
        %v653 = vadd.f32 0.0, %v652
        %v654 = vpop.f32.mrb[0].mxu0
        %655 = vmatprep.mubr.f32.mxu0 0.0
        %656 = vmatmul.mubr.f32.gmra.mrb[0].mxu0 %v351
        %v657 = vpop.f32.mrb[0].mxu0
        %v658 = vadd.f32 0.0, %v657
        %v659 = vpop.f32.mrb[0].mxu0
        %660 = vmatprep.mubr.f32.mxu0 0.0
        %661 = vmatmul.mubr.f32.gmra.mrb[0].mxu0 %v352
        %v662 = vpop.f32.mrb[0].mxu0
        %v663 = vadd.f32 0.0, %v662
        %v664 = vpop.f32.mrb[0].mxu0
        %665 = vmatprep.mubr.f32.mxu0 0.0
        %666 = vmatmul.mubr.f32.gmra.mrb[0].mxu0 %v353
        %v667 = vpop.f32.mrb[0].mxu0
        %v668 = vadd.f32 0.0, %v667
        %v669 = vpop.f32.mrb[0].mxu0
        %670 = vmatprep.mubr.f32.mxu0 0.0
        %671 = vmatmul.mubr.f32.gmra.mrb[0].mxu0 %v354
        %v672 = vpop.f32.mrb[0].mxu0
        %v673 = vadd.f32 0.0, %v672
        %v674 = vpop.f32.mrb[0].mxu0
        %675 = vmatprep.mubr.f32.mxu0 0.0
        %676 = vmatmul.mubr.f32.gmra.mrb[0].mxu0 %v355
        %v677 = vpop.f32.mrb[0].mxu0
        %v678 = vadd.f32 0.0, %v677
        %v679 = vpop.f32.mrb[0].mxu0
        %680 = vmatprep.mubr.f32.mxu0 0.0
        %681 = vmatmul.mubr.f32.gmra.mrb[0].mxu0 %v356
        %v682 = vpop.f32.mrb[0].mxu0
        %v683 = vadd.f32 0.0, %v682
        %v684 = vpop.f32.mrb[0].mxu0
        %685 = vmatprep.mubr.f32.mxu0 0.0
        %686 = vmatmul.mubr.f32.gmra.mrb[0].mxu0 %v357
        %v687 = vpop.f32.mrb[0].mxu0
        %v688 = vadd.f32 0.0, %v687
        %v689 = vpop.f32.mrb[0].mxu0
        %690 = vmatprep.mubr.f32.mxu0 0.0
        %691 = vmatmul.mubr.f32.gmra.mrb[0].mxu0 %v358
        %v692 = vpop.f32.mrb[0].mxu0
        %v693 = vadd.f32 0.0, %v692
        %v694 = vpop.f32.mrb[0].mxu0
        %695 = vmatprep.mubr.f32.mxu0 0.0
        %696 = vmatmul.mubr.f32.gmra.mrb[0].mxu0 %v359
        %v697 = vpop.f32.mrb[0].mxu0
        %v698 = vadd.f32 0.0, %v697
        %v699 = vpop.f32.mrb[0].mxu0
        %700 = vmatprep.mubr.f32.mxu0 0.0
        %701 = vmatmul.mubr.f32.gmra.mrb[0].mxu0 %v360
        %v702 = vpop.f32.mrb[0].mxu0
        %v703 = vadd.f32 0.0, %v702
        %v704 = vpop.f32.mrb[0].mxu0
        %705 = vmatprep.mubr.f32.mxu0 0.0
        %706 = vmatmul.mubr.f32.gmra.mrb[0].mxu0 %v361
        %v707 = vpop.f32.mrb[0].mxu0
        %v708 = vadd.f32 0.0, %v707
        %v709 = vpop.f32.mrb[0].mxu0
        %710 = vmatprep.mubr.f32.mxu0 0.0
        %711 = vmatmul.mubr.f32.gmra.mrb[0].mxu0 %v362
        %v712 = vpop.f32.mrb[0].mxu0
        %v713 = vadd.f32 0.0, %v712
        %v714 = vpop.f32.mrb[0].mxu0
        %715 = vmatprep.mubr.f32.mxu0 0.0
        %716 = vmatmul.mubr.f32.gmra.mrb[0].mxu0 %v363
        %v717 = vpop.f32.mrb[0].mxu0
        %v718 = vadd.f32 0.0, %v717
        %v719 = vpop.f32.mrb[0].mxu0
        %720 = vmatprep.mubr.f32.mxu0 0.0
        %721 = vmatmul.mubr.f32.gmra.mrb[0].mxu0 %v364
        %v722 = vpop.f32.mrb[0].mxu0
        %v723 = vadd.f32 0.0, %v722
        %v724 = vpop.f32.mrb[0].mxu0
        %725 = vmatprep.mubr.f32.mxu0 0.0
        %726 = vmatmul.mubr.f32.gmra.mrb[0].mxu0 %v365
        %v727 = vpop.f32.mrb[0].mxu0
        %v728 = vadd.f32 0.0, %v727
        %v729 = vpop.f32.mrb[0].mxu0
        %730 = vmatprep.mubr.f32.mxu0 0.0
        %731 = vmatmul.mubr.f32.gmra.mrb[0].mxu0 %v366
        %v732 = vpop.f32.mrb[0].mxu0
        %v733 = vadd.f32 0.0, %v732
        %v734 = vpop.f32.mrb[0].mxu0
        %735 = vmatprep.mubr.f32.mxu0 0.0
        %736 = vmatmul.mubr.f32.gmra.mrb[0].mxu0 %v367
        %v737 = vpop.f32.mrb[0].mxu0
        %v738 = vadd.f32 0.0, %v737
        %v739 = vpop.f32.mrb[0].mxu0
        %740 = vmatprep.mubr.f32.mxu0 0.0
        %741 = vmatmul.mubr.f32.gmra.mrb[0].mxu0 %v368
        %v742 = vpop.f32.mrb[0].mxu0
        %v743 = vadd.f32 0.0, %v742
        %v744 = vpop.f32.mrb[0].mxu0
        %745 = vmatprep.mubr.f32.mxu0 0.0
        %746 = vmatmul.mubr.f32.gmra.mrb[0].mxu0 %v369
        %v747 = vpop.f32.mrb[0].mxu0
        %v748 = vadd.f32 0.0, %v747
        %v749 = vpop.f32.mrb[0].mxu0
        %750 = vmatprep.mubr.f32.mxu0 0.0
        %751 = vmatmul.mubr.f32.gmra.mrb[0].mxu0 %v370
        %v752 = vpop.f32.mrb[0].mxu0
        %v753 = vadd.f32 0.0, %v752
        %v754 = vpop.f32.mrb[0].mxu0
        %755 = vmatprep.mubr.f32.mxu0 0.0
        %756 = vmatmul.mubr.f32.gmra.mrb[0].mxu0 %v371
        %v757 = vpop.f32.mrb[0].mxu0
        %v758 = vadd.f32 0.0, %v757
        %v759 = vpop.f32.mrb[0].mxu0
        %760 = vmatprep.mubr.f32.mxu0 0.0
        %761 = vmatmul.mubr.f32.gmra.mrb[0].mxu0 %v372
        %v762 = vpop.f32.mrb[0].mxu0
        %v763 = vadd.f32 0.0, %v762
        %v764 = vpop.f32.mrb[0].mxu0
        %765 = vmatprep.mubr.f32.mxu0 0.0
        %766 = vmatmul.mubr.f32.gmra.mrb[0].mxu0 %v373
        %v767 = vpop.f32.mrb[0].mxu0
        %v768 = vadd.f32 0.0, %v767
        %v769 = vpop.f32.mrb[0].mxu0
        %770 = vmatprep.mubr.f32.mxu0 0.0
        %771 = vmatmul.mubr.f32.gmra.mrb[0].mxu0 %v374
        %v772 = vpop.f32.mrb[0].mxu0
        %v773 = vadd.f32 0.0, %v772
        %v774 = vpop.f32.mrb[0].mxu0
        %775 = vdwg.mxu0
        %vm776 = vcmask 523264
        %v777 = vsel %vm776, %v458, -inf
        %v778 = vsel %vm776, %v463, -inf
        %v779 = vsel %vm776, %v468, -inf
        %v780 = vsel %vm776, %v473, -inf
        %v781 = vsel %vm776, %v478, -inf
        %v782 = vmax.f32 %v777, %v781
        %v783 = vsel %vm776, %v483, -inf
        %v784 = vmax.f32 %v778, %v783
        %v785 = vsel %vm776, %v488, -inf
        %v786 = vmax.f32 %v779, %v785
        %v787 = vsel %vm776, %v493, -inf
        %v788 = vmax.f32 %v780, %v787
        %v789 = vsel %vm776, %v498, -inf
        %v790 = vmax.f32 %v782, %v789
        %v791 = vsel %vm776, %v503, -inf
        %v792 = vmax.f32 %v784, %v791
        %v793 = vsel %vm776, %v508, -inf
        %v794 = vmax.f32 %v786, %v793
        %v795 = vsel %vm776, %v513, -inf
        %v796 = vmax.f32 %v788, %v795
        %v797 = vsel %vm776, %v518, -inf
        %v798 = vmax.f32 %v790, %v797
        %v799 = vsel %vm776, %v523, -inf
        %v800 = vmax.f32 %v792, %v799
        %v801 = vsel %vm776, %v528, -inf
        %v802 = vmax.f32 %v794, %v801
        %v803 = vsel %vm776, %v533, -inf
        %v804 = vmax.f32 %v796, %v803
        %v805 = vsel %vm776, %v538, -inf
        %v806 = vmax.f32 %v798, %v805
        %v807 = vsel %vm776, %v543, -inf
        %v808 = vmax.f32 %v800, %v807
        %v809 = vsel %vm776, %v548, -inf
        %v810 = vmax.f32 %v802, %v809
        %v811 = vsel %vm776, %v553, -inf
        %v812 = vmax.f32 %v804, %v811
        %v813 = vsel %vm776, %v558, -inf
        %v814 = vmax.f32 %v806, %v813
        %v815 = vsel %vm776, %v563, -inf
        %v816 = vmax.f32 %v808, %v815
        %v817 = vsel %vm776, %v568, -inf
        %v818 = vmax.f32 %v810, %v817
        %v819 = vsel %vm776, %v573, -inf
        %v820 = vmax.f32 %v812, %v819
        %v821 = vsel %vm776, %v578, -inf
        %v822 = vmax.f32 %v814, %v821
        %v823 = vsel %vm776, %v583, -inf
        %v824 = vmax.f32 %v816, %v823
        %v825 = vsel %vm776, %v588, -inf
        %v826 = vmax.f32 %v818, %v825
        %v827 = vsel %vm776, %v593, -inf
        %v828 = vmax.f32 %v820, %v827
        %v829 = vsel %vm776, %v598, -inf
        %v830 = vmax.f32 %v822, %v829
        %v831 = vsel %vm776, %v603, -inf
        %v832 = vmax.f32 %v824, %v831
        %v833 = vsel %vm776, %v608, -inf
        %v834 = vmax.f32 %v826, %v833
        %v835 = vsel %vm776, %v613, -inf
        %v836 = vmax.f32 %v828, %v835
        %v837 = vsel %vm776, %v618, -inf
        %v838 = vmax.f32 %v830, %v837
        %v839 = vsel %vm776, %v623, -inf
        %v840 = vmax.f32 %v832, %v839
        %v841 = vsel %vm776, %v628, -inf
        %v842 = vmax.f32 %v834, %v841
        %v843 = vsel %vm776, %v633, -inf
        %v844 = vmax.f32 %v836, %v843
        %v845 = vsel %vm776, %v638, -inf
        %v846 = vmax.f32 %v838, %v845
        %v847 = vsel %vm776, %v643, -inf
        %v848 = vmax.f32 %v840, %v847
        %v849 = vsel %vm776, %v648, -inf
        %v850 = vmax.f32 %v842, %v849
        %v851 = vsel %vm776, %v653, -inf
        %v852 = vmax.f32 %v844, %v851
        %v853 = vsel %vm776, %v658, -inf
        %v854 = vmax.f32 %v846, %v853
        %v855 = vsel %vm776, %v663, -inf
        %v856 = vmax.f32 %v848, %v855
        %v857 = vsel %vm776, %v668, -inf
        %v858 = vmax.f32 %v850, %v857
        %v859 = vsel %vm776, %v673, -inf
        %v860 = vmax.f32 %v852, %v859
        %v861 = vsel %vm776, %v678, -inf
        %v862 = vmax.f32 %v854, %v861
        %v863 = vsel %vm776, %v683, -inf
        %v864 = vmax.f32 %v856, %v863
        %v865 = vsel %vm776, %v688, -inf
        %v866 = vmax.f32 %v858, %v865
        %v867 = vsel %vm776, %v693, -inf
        %v868 = vmax.f32 %v860, %v867
        %v869 = vsel %vm776, %v698, -inf
        %v870 = vmax.f32 %v862, %v869
        %v871 = vsel %vm776, %v703, -inf
        %v872 = vmax.f32 %v864, %v871
        %v873 = vsel %vm776, %v708, -inf
        %v874 = vmax.f32 %v866, %v873
        %v875 = vsel %vm776, %v713, -inf
        %v876 = vmax.f32 %v868, %v875
        %v877 = vsel %vm776, %v718, -inf
        %v878 = vmax.f32 %v870, %v877
        %v879 = vsel %vm776, %v723, -inf
        %v880 = vmax.f32 %v872, %v879
        %v881 = vsel %vm776, %v728, -inf
        %v882 = vmax.f32 %v874, %v881
        %v883 = vsel %vm776, %v733, -inf
        %v884 = vmax.f32 %v876, %v883
        %v885 = vsel %vm776, %v738, -inf
        %v886 = vmax.f32 %v878, %v885
        %v887 = vsel %vm776, %v743, -inf
        %v888 = vmax.f32 %v880, %v887
        %v889 = vsel %vm776, %v748, -inf
        %v890 = vmax.f32 %v882, %v889
        %v891 = vsel %vm776, %v753, -inf
        %v892 = vmax.f32 %v884, %v891
        %v893 = vsel %vm776, %v758, -inf
        %v894 = vmax.f32 %v886, %v893
        %v895 = vsel %vm776, %v763, -inf
        %v896 = vmax.f32 %v888, %v895
        %v897 = vsel %vm776, %v768, -inf
        %v898 = vmax.f32 %v890, %v897
        %v899 = vsel %vm776, %v773, -inf
        %v900 = vmax.f32 %v892, %v899
        %v901 = vmax.f32 %v894, %v896
        %v902 = vmax.f32 %v898, %v900
        %v903 = vmax.f32 %v901, %v902
        %v904 = vrot.slane %v903, 4
        %v905 = vmax.f32 %v903, %v904
        %v906 = vrot.slane %v905, 2
        %v907 = vmax.f32 %v905, %v906
        %v908 = vrot.slane %v907, 1
        %v909 = vmax.f32 %v907, %v908
        %v910 = vld [vmem:[#allocation2] sm:$0x1]
        %v911 = vmax.f32 %v910, %v909
        %v912 = vsub.f32 %v910, %v911
        %v913 = vmul.f32 %v912, 1.442695
        %v914 = vpow.pop %v913
        %v915 = vld [vmem:[#allocation3] sm:$0x1]
        %v916 = vmul.f32 %v914, %v915
        %v918 = vlaneseq
        %v919 = vshrl.u32 %v918, 7
        %v920 = vsub.s32 0, %v919
        %v921 = vrot.slane %v911, %v920
        %v923 = vsub.f32 %v458, %v921
        %v924 = vsub.f32 %v463, %v921
        %v925 = vsub.f32 %v468, %v921
        %v926 = vsub.f32 %v473, %v921
        %v927 = vsub.f32 %v478, %v921
        %v928 = vsub.f32 %v483, %v921
        %v929 = vsub.f32 %v488, %v921
        %v930 = vsub.f32 %v493, %v921
        %v931 = vsub.f32 %v498, %v921
        %v932 = vsub.f32 %v503, %v921
        %v933 = vsub.f32 %v508, %v921
        %v934 = vsub.f32 %v513, %v921
        %v935 = vsub.f32 %v518, %v921
        %v936 = vsub.f32 %v523, %v921
        %v937 = vsub.f32 %v528, %v921
        %v938 = vsub.f32 %v533, %v921
        %v939 = vsub.f32 %v538, %v921
        %v940 = vsub.f32 %v543, %v921
        %v941 = vsub.f32 %v548, %v921
        %v942 = vsub.f32 %v553, %v921
        %v943 = vsub.f32 %v558, %v921
        %v944 = vsub.f32 %v563, %v921
        %v945 = vsub.f32 %v568, %v921
        %v946 = vsub.f32 %v573, %v921
        %v947 = vsub.f32 %v578, %v921
        %v948 = vsub.f32 %v583, %v921
        %v949 = vsub.f32 %v588, %v921
        %v950 = vsub.f32 %v593, %v921
        %v951 = vsub.f32 %v598, %v921
        %v952 = vsub.f32 %v603, %v921
        %v953 = vsub.f32 %v608, %v921
        %v954 = vsub.f32 %v613, %v921
        %v955 = vsub.f32 %v618, %v921
        %v956 = vsub.f32 %v623, %v921
        %v957 = vsub.f32 %v628, %v921
        %v958 = vsub.f32 %v633, %v921
        %v959 = vsub.f32 %v638, %v921
        %v960 = vsub.f32 %v643, %v921
        %v961 = vsub.f32 %v648, %v921
        %v962 = vsub.f32 %v653, %v921
        %v963 = vsub.f32 %v658, %v921
        %v964 = vsub.f32 %v663, %v921
        %v965 = vsub.f32 %v668, %v921
        %v966 = vsub.f32 %v673, %v921
        %v967 = vsub.f32 %v678, %v921
        %v968 = vsub.f32 %v683, %v921
        %v969 = vsub.f32 %v688, %v921
        %v970 = vsub.f32 %v693, %v921
        %v971 = vsub.f32 %v698, %v921
        %v972 = vsub.f32 %v703, %v921
        %v973 = vsub.f32 %v708, %v921
        %v974 = vsub.f32 %v713, %v921
        %v975 = vsub.f32 %v718, %v921
        %v976 = vsub.f32 %v723, %v921
        %v977 = vsub.f32 %v728, %v921
        %v978 = vsub.f32 %v733, %v921
        %v979 = vsub.f32 %v738, %v921
        %v980 = vsub.f32 %v743, %v921
        %v981 = vsub.f32 %v748, %v921
        %v982 = vsub.f32 %v753, %v921
        %v983 = vsub.f32 %v758, %v921
        %v984 = vsub.f32 %v763, %v921
        %v985 = vsub.f32 %v768, %v921
        %v986 = vsub.f32 %v773, %v921
        %v987 = vmul.f32 %v923, 1.442695
        %v988 = vpow.pop %v987
        %v989 = vmul.f32 %v924, 1.442695
        %v990 = vpow.pop %v989
        %v991 = vmul.f32 %v925, 1.442695
        %v992 = vpow.pop %v991
        %v993 = vmul.f32 %v926, 1.442695
        %v994 = vpow.pop %v993
        %v995 = vmul.f32 %v927, 1.442695
        %v996 = vpow.pop %v995
        %v997 = vmul.f32 %v928, 1.442695
        %v998 = vpow.pop %v997
        %v999 = vmul.f32 %v929, 1.442695
        %v1000 = vpow.pop %v999
        %v1001 = vmul.f32 %v930, 1.442695
        %v1002 = vpow.pop %v1001
        %v1003 = vmul.f32 %v931, 1.442695
        %v1004 = vpow.pop %v1003
        %v1005 = vmul.f32 %v932, 1.442695
        %v1006 = vpow.pop %v1005
        %v1007 = vmul.f32 %v933, 1.442695
        %v1008 = vpow.pop %v1007
        %v1009 = vmul.f32 %v934, 1.442695
        %v1010 = vpow.pop %v1009
        %v1011 = vmul.f32 %v935, 1.442695
        %v1012 = vpow.pop %v1011
        %v1013 = vmul.f32 %v936, 1.442695
        %v1014 = vpow.pop %v1013
        %v1015 = vmul.f32 %v937, 1.442695
        %v1016 = vpow.pop %v1015
        %v1017 = vmul.f32 %v938, 1.442695
        %v1018 = vpow.pop %v1017
        %v1019 = vmul.f32 %v939, 1.442695
        %v1020 = vpow.pop %v1019
        %v1021 = vmul.f32 %v940, 1.442695
        %v1022 = vpow.pop %v1021
        %v1023 = vmul.f32 %v941, 1.442695
        %v1024 = vpow.pop %v1023
        %v1025 = vmul.f32 %v942, 1.442695
        %v1026 = vpow.pop %v1025
        %v1027 = vmul.f32 %v943, 1.442695
        %v1028 = vpow.pop %v1027
        %v1029 = vmul.f32 %v944, 1.442695
        %v1030 = vpow.pop %v1029
        %v1031 = vmul.f32 %v945, 1.442695
        %v1032 = vpow.pop %v1031
        %v1033 = vmul.f32 %v946, 1.442695
        %v1034 = vpow.pop %v1033
        %v1035 = vmul.f32 %v947, 1.442695
        %v1036 = vpow.pop %v1035
        %v1037 = vmul.f32 %v948, 1.442695
        %v1038 = vpow.pop %v1037
        %v1039 = vmul.f32 %v949, 1.442695
        %v1040 = vpow.pop %v1039
        %v1041 = vmul.f32 %v950, 1.442695
        %v1042 = vpow.pop %v1041
        %v1043 = vmul.f32 %v951, 1.442695
        %v1044 = vpow.pop %v1043
        %v1045 = vmul.f32 %v952, 1.442695
        %v1046 = vpow.pop %v1045
        %v1047 = vmul.f32 %v953, 1.442695
        %v1048 = vpow.pop %v1047
        %v1049 = vmul.f32 %v954, 1.442695
        %v1050 = vpow.pop %v1049
        %v1051 = vmul.f32 %v955, 1.442695
        %v1052 = vpow.pop %v1051
        %v1053 = vmul.f32 %v956, 1.442695
        %v1054 = vpow.pop %v1053
        %v1055 = vmul.f32 %v957, 1.442695
        %v1056 = vpow.pop %v1055
        %v1057 = vmul.f32 %v958, 1.442695
        %v1058 = vpow.pop %v1057
        %v1059 = vmul.f32 %v959, 1.442695
        %v1060 = vpow.pop %v1059
        %v1061 = vmul.f32 %v960, 1.442695
        %v1062 = vpow.pop %v1061
        %v1063 = vmul.f32 %v961, 1.442695
        %v1064 = vpow.pop %v1063
        %v1065 = vmul.f32 %v962, 1.442695
        %v1066 = vpow.pop %v1065
        %v1067 = vmul.f32 %v963, 1.442695
        %v1068 = vpow.pop %v1067
        %v1069 = vmul.f32 %v964, 1.442695
        %v1070 = vpow.pop %v1069
        %v1071 = vmul.f32 %v965, 1.442695
        %v1072 = vpow.pop %v1071
        %v1073 = vmul.f32 %v966, 1.442695
        %v1074 = vpow.pop %v1073
        %v1075 = vmul.f32 %v967, 1.442695
        %v1076 = vpow.pop %v1075
        %v1077 = vmul.f32 %v968, 1.442695
        %v1078 = vpow.pop %v1077
        %v1079 = vmul.f32 %v969, 1.442695
        %v1080 = vpow.pop %v1079
        %v1081 = vmul.f32 %v970, 1.442695
        %v1082 = vpow.pop %v1081
        %v1083 = vmul.f32 %v971, 1.442695
        %v1084 = vpow.pop %v1083
        %v1085 = vmul.f32 %v972, 1.442695
        %v1086 = vpow.pop %v1085
        %v1087 = vmul.f32 %v973, 1.442695
        %v1088 = vpow.pop %v1087
        %v1089 = vmul.f32 %v974, 1.442695
        %v1090 = vpow.pop %v1089
        %v1091 = vmul.f32 %v975, 1.442695
        %v1092 = vpow.pop %v1091
        %v1093 = vmul.f32 %v976, 1.442695
        %v1094 = vpow.pop %v1093
        %v1095 = vmul.f32 %v977, 1.442695
        %v1096 = vpow.pop %v1095
        %v1097 = vmul.f32 %v978, 1.442695
        %v1098 = vpow.pop %v1097
        %v1099 = vmul.f32 %v979, 1.442695
        %v1100 = vpow.pop %v1099
        %v1101 = vmul.f32 %v980, 1.442695
        %v1102 = vpow.pop %v1101
        %v1103 = vmul.f32 %v981, 1.442695
        %v1104 = vpow.pop %v1103
        %v1105 = vmul.f32 %v982, 1.442695
        %v1106 = vpow.pop %v1105
        %v1107 = vmul.f32 %v983, 1.442695
        %v1108 = vpow.pop %v1107
        %v1109 = vmul.f32 %v984, 1.442695
        %v1110 = vpow.pop %v1109
        %v1111 = vmul.f32 %v985, 1.442695
        %v1112 = vpow.pop %v1111
        %v1113 = vmul.f32 %v986, 1.442695
        %v1114 = vpow.pop %v1113
        %v1115 = vsel %vm776, %v988, 0.0
        %v1116 = vsel %vm776, %v990, 0.0
        %v1117 = vadd.f32 %v1115, %v1116
        %v1118 = vsel %vm776, %v992, 0.0
        %v1119 = vadd.f32 %v1117, %v1118
        %v1120 = vsel %vm776, %v994, 0.0
        %v1121 = vadd.f32 %v1119, %v1120
        %v1122 = vsel %vm776, %v996, 0.0
        %v1123 = vadd.f32 %v1121, %v1122
        %v1124 = vsel %vm776, %v998, 0.0
        %v1125 = vadd.f32 %v1123, %v1124
        %v1126 = vsel %vm776, %v1000, 0.0
        %v1127 = vadd.f32 %v1125, %v1126
        %v1128 = vsel %vm776, %v1002, 0.0
        %v1129 = vadd.f32 %v1127, %v1128
        %v1130 = vsel %vm776, %v1004, 0.0
        %v1131 = vadd.f32 %v1129, %v1130
        %v1132 = vsel %vm776, %v1006, 0.0
        %v1133 = vadd.f32 %v1131, %v1132
        %v1134 = vsel %vm776, %v1008, 0.0
        %v1135 = vadd.f32 %v1133, %v1134
        %v1136 = vsel %vm776, %v1010, 0.0
        %v1137 = vadd.f32 %v1135, %v1136
        %v1138 = vsel %vm776, %v1012, 0.0
        %v1139 = vadd.f32 %v1137, %v1138
        %v1140 = vsel %vm776, %v1014, 0.0
        %v1141 = vadd.f32 %v1139, %v1140
        %v1142 = vsel %vm776, %v1016, 0.0
        %v1143 = vadd.f32 %v1141, %v1142
        %v1144 = vsel %vm776, %v1018, 0.0
        %v1145 = vadd.f32 %v1143, %v1144
        %v1146 = vsel %vm776, %v1020, 0.0
        %v1147 = vadd.f32 %v1145, %v1146
        %v1148 = vsel %vm776, %v1022, 0.0
        %v1149 = vadd.f32 %v1147, %v1148
        %v1150 = vsel %vm776, %v1024, 0.0
        %v1151 = vadd.f32 %v1149, %v1150
        %v1152 = vsel %vm776, %v1026, 0.0
        %v1153 = vadd.f32 %v1151, %v1152
        %v1154 = vsel %vm776, %v1028, 0.0
        %v1155 = vadd.f32 %v1153, %v1154
        %v1156 = vsel %vm776, %v1030, 0.0
        %v1157 = vadd.f32 %v1155, %v1156
        %v1158 = vsel %vm776, %v1032, 0.0
        %v1159 = vadd.f32 %v1157, %v1158
        %v1160 = vsel %vm776, %v1034, 0.0
        %v1161 = vadd.f32 %v1159, %v1160
        %v1162 = vsel %vm776, %v1036, 0.0
        %v1163 = vadd.f32 %v1161, %v1162
        %v1164 = vsel %vm776, %v1038, 0.0
        %v1165 = vadd.f32 %v1163, %v1164
        %v1166 = vsel %vm776, %v1040, 0.0
        %v1167 = vadd.f32 %v1165, %v1166
        %v1168 = vsel %vm776, %v1042, 0.0
        %v1169 = vadd.f32 %v1167, %v1168
        %v1170 = vsel %vm776, %v1044, 0.0
        %v1171 = vadd.f32 %v1169, %v1170
        %v1172 = vsel %vm776, %v1046, 0.0
        %v1173 = vadd.f32 %v1171, %v1172
        %v1174 = vsel %vm776, %v1048, 0.0
        %v1175 = vadd.f32 %v1173, %v1174
        %v1176 = vsel %vm776, %v1050, 0.0
        %v1177 = vadd.f32 %v1175, %v1176
        %v1178 = vsel %vm776, %v1052, 0.0
        %v1179 = vadd.f32 %v1177, %v1178
        %v1180 = vsel %vm776, %v1054, 0.0
        %v1181 = vadd.f32 %v1179, %v1180
        %v1182 = vsel %vm776, %v1056, 0.0
        %v1183 = vadd.f32 %v1181, %v1182
        %v1184 = vsel %vm776, %v1058, 0.0
        %v1185 = vadd.f32 %v1183, %v1184
        %v1186 = vsel %vm776, %v1060, 0.0
        %v1187 = vadd.f32 %v1185, %v1186
        %v1188 = vsel %vm776, %v1062, 0.0
        %v1189 = vadd.f32 %v1187, %v1188
        %v1190 = vsel %vm776, %v1064, 0.0
        %v1191 = vadd.f32 %v1189, %v1190
        %v1192 = vsel %vm776, %v1066, 0.0
        %v1193 = vadd.f32 %v1191, %v1192
        %v1194 = vsel %vm776, %v1068, 0.0
        %v1195 = vadd.f32 %v1193, %v1194
        %v1196 = vsel %vm776, %v1070, 0.0
        %v1197 = vadd.f32 %v1195, %v1196
        %v1198 = vsel %vm776, %v1072, 0.0
        %v1199 = vadd.f32 %v1197, %v1198
        %v1200 = vsel %vm776, %v1074, 0.0
        %v1201 = vadd.f32 %v1199, %v1200
        %v1202 = vsel %vm776, %v1076, 0.0
        %v1203 = vadd.f32 %v1201, %v1202
        %v1204 = vsel %vm776, %v1078, 0.0
        %v1205 = vadd.f32 %v1203, %v1204
        %v1206 = vsel %vm776, %v1080, 0.0
        %v1207 = vadd.f32 %v1205, %v1206
        %v1208 = vsel %vm776, %v1082, 0.0
        %v1209 = vadd.f32 %v1207, %v1208
        %v1210 = vsel %vm776, %v1084, 0.0
        %v1211 = vadd.f32 %v1209, %v1210
        %v1212 = vsel %vm776, %v1086, 0.0
        %v1213 = vadd.f32 %v1211, %v1212
        %v1214 = vsel %vm776, %v1088, 0.0
        %v1215 = vadd.f32 %v1213, %v1214
        %v1216 = vsel %vm776, %v1090, 0.0
        %v1217 = vadd.f32 %v1215, %v1216
        %v1218 = vsel %vm776, %v1092, 0.0
        %v1219 = vadd.f32 %v1217, %v1218
        %v1220 = vsel %vm776, %v1094, 0.0
        %v1221 = vadd.f32 %v1219, %v1220
        %v1222 = vsel %vm776, %v1096, 0.0
        %v1223 = vadd.f32 %v1221, %v1222
        %v1224 = vsel %vm776, %v1098, 0.0
        %v1225 = vadd.f32 %v1223, %v1224
        %v1226 = vsel %vm776, %v1100, 0.0
        %v1227 = vadd.f32 %v1225, %v1226
        %v1228 = vsel %vm776, %v1102, 0.0
        %v1229 = vadd.f32 %v1227, %v1228
        %v1230 = vsel %vm776, %v1104, 0.0
        %v1231 = vadd.f32 %v1229, %v1230
        %v1232 = vsel %vm776, %v1106, 0.0
        %v1233 = vadd.f32 %v1231, %v1232
        %v1234 = vsel %vm776, %v1108, 0.0
        %v1235 = vadd.f32 %v1233, %v1234
        %v1236 = vsel %vm776, %v1110, 0.0
        %v1237 = vadd.f32 %v1235, %v1236
        %v1238 = vsel %vm776, %v1112, 0.0
        %v1239 = vadd.f32 %v1237, %v1238
        %v1240 = vsel %vm776, %v1114, 0.0
        %v1241 = vadd.f32 %v1239, %v1240
        %v1242 = vrot.slane %v1241, 4
        %v1243 = vadd.f32 %v1241, %v1242
        %v1244 = vrot.slane %v1243, 2
        %v1245 = vadd.f32 %v1243, %v1244
        %v1246 = vrot.slane %v1245, 1
        %v1247 = vadd.f32 %v1245, %v1246
        %v1248 = vadd.f32 %v916, %v1247
        %vm1249 = vcmask 516096
        %1250 = vst.msk [vmem:[#allocation3] sm:$0x1] %vm1249, %v1248
        %1251 = vst.msk [vmem:[#allocation2] sm:$0x1] %vm1249, %v911
        %v1252 = vlaneseq
        %v1253 = vshrl.u32 %v1252, 7
        %v1254 = vadd.s32 %v1253, 8
        %v1255 = vadd.s32 %v1253, 16
        %v1256 = vadd.s32 %v1253, 24
        %v1257 = vadd.s32 %v1253, 32
        %v1258 = vadd.s32 %v1253, 40
        %v1259 = vadd.s32 %v1253, 48
        %v1260 = vadd.s32 %v1253, 56
        %v1261 = vadd.s32 %v1253, 64
        %v1262 = vadd.s32 %v1253, 72
        %v1263 = vadd.s32 %v1253, 80
        %v1264 = vadd.s32 %v1253, 88
        %v1265 = vadd.s32 %v1253, 96
        %v1266 = vadd.s32 %v1253, 104
        %v1267 = vadd.s32 %v1253, 112
        %v1268 = vadd.s32 %v1253, 120
        %v1269 = vadd.s32 %v1253, 128
        %v1270 = vadd.s32 %v1253, 136
        %v1271 = vadd.s32 %v1253, 144
        %v1272 = vadd.s32 %v1253, 152
        %v1273 = vadd.s32 %v1253, 160
        %v1274 = vadd.s32 %v1253, 168
        %v1275 = vadd.s32 %v1253, 176
        %v1276 = vadd.s32 %v1253, 184
        %v1277 = vadd.s32 %v1253, 192
        %v1278 = vadd.s32 %v1253, 200
        %v1279 = vadd.s32 %v1253, 208
        %v1280 = vadd.s32 %v1253, 216
        %v1281 = vadd.s32 %v1253, 224
        %v1282 = vadd.s32 %v1253, 232
        %v1283 = vadd.s32 %v1253, 240
        %v1284 = vadd.s32 %v1253, 248
        %v1285 = vadd.s32 %v1253, 256
        %v1286 = vadd.s32 %v1253, 264
        %v1287 = vadd.s32 %v1253, 272
        %v1288 = vadd.s32 %v1253, 280
        %v1289 = vadd.s32 %v1253, 288
        %v1290 = vadd.s32 %v1253, 296
        %v1291 = vadd.s32 %v1253, 304
        %v1292 = vadd.s32 %v1253, 312
        %v1293 = vadd.s32 %v1253, 320
        %v1294 = vadd.s32 %v1253, 328
        %v1295 = vadd.s32 %v1253, 336
        %v1296 = vadd.s32 %v1253, 344
        %v1297 = vadd.s32 %v1253, 352
        %v1298 = vadd.s32 %v1253, 360
        %v1299 = vadd.s32 %v1253, 368
        %v1300 = vadd.s32 %v1253, 376
        %v1301 = vadd.s32 %v1253, 384
        %v1302 = vadd.s32 %v1253, 392
        %v1303 = vadd.s32 %v1253, 400
        %v1304 = vadd.s32 %v1253, 408
        %v1305 = vadd.s32 %v1253, 416
        %v1306 = vadd.s32 %v1253, 424
        %v1307 = vadd.s32 %v1253, 432
        %v1308 = vadd.s32 %v1253, 440
        %v1309 = vadd.s32 %v1253, 448
        %v1310 = vadd.s32 %v1253, 456
        %v1311 = vadd.s32 %v1253, 464
        %v1312 = vadd.s32 %v1253, 472
        %v1313 = vadd.s32 %v1253, 480
        %v1314 = vadd.s32 %v1253, 488
        %v1315 = vadd.s32 %v1253, 496
        %v1316 = vadd.s32 %v1253, 504
        %v1317 = vlaneseq
        %v1318 = vand.u32 %v1317, 127
        %v1319 = vmul.u32 %v1318, 16
        %vm1320 = vcmp.ge.s32.totalorder %v1253, %v1319
        %vm1321 = vcmp.ge.s32.totalorder %v1254, %v1319
        %vm1322 = vcmp.ge.s32.totalorder %v1255, %v1319
        %vm1323 = vcmp.ge.s32.totalorder %v1256, %v1319
        %vm1324 = vcmp.ge.s32.totalorder %v1257, %v1319
        %vm1325 = vcmp.ge.s32.totalorder %v1258, %v1319
        %vm1326 = vcmp.ge.s32.totalorder %v1259, %v1319
        %vm1327 = vcmp.ge.s32.totalorder %v1260, %v1319
        %vm1328 = vcmp.ge.s32.totalorder %v1261, %v1319
        %vm1329 = vcmp.ge.s32.totalorder %v1262, %v1319
        %vm1330 = vcmp.ge.s32.totalorder %v1263, %v1319
        %vm1331 = vcmp.ge.s32.totalorder %v1264, %v1319
        %vm1332 = vcmp.ge.s32.totalorder %v1265, %v1319
        %vm1333 = vcmp.ge.s32.totalorder %v1266, %v1319
        %vm1334 = vcmp.ge.s32.totalorder %v1267, %v1319
        %vm1335 = vcmp.ge.s32.totalorder %v1268, %v1319
        %vm1336 = vcmp.ge.s32.totalorder %v1269, %v1319
        %vm1337 = vcmp.ge.s32.totalorder %v1270, %v1319
        %vm1338 = vcmp.ge.s32.totalorder %v1271, %v1319
        %vm1339 = vcmp.ge.s32.totalorder %v1272, %v1319
        %vm1340 = vcmp.ge.s32.totalorder %v1273, %v1319
        %vm1341 = vcmp.ge.s32.totalorder %v1274, %v1319
        %vm1342 = vcmp.ge.s32.totalorder %v1275, %v1319
        %vm1343 = vcmp.ge.s32.totalorder %v1276, %v1319
        %vm1344 = vcmp.ge.s32.totalorder %v1277, %v1319
        %vm1345 = vcmp.ge.s32.totalorder %v1278, %v1319
        %vm1346 = vcmp.ge.s32.totalorder %v1279, %v1319
        %vm1347 = vcmp.ge.s32.totalorder %v1280, %v1319
        %vm1348 = vcmp.ge.s32.totalorder %v1281, %v1319
        %vm1349 = vcmp.ge.s32.totalorder %v1282, %v1319
        %vm1350 = vcmp.ge.s32.totalorder %v1283, %v1319
        %vm1351 = vcmp.ge.s32.totalorder %v1284, %v1319
        %vm1352 = vcmp.ge.s32.totalorder %v1285, %v1319
        %vm1353 = vcmp.ge.s32.totalorder %v1286, %v1319
        %vm1354 = vcmp.ge.s32.totalorder %v1287, %v1319
        %vm1355 = vcmp.ge.s32.totalorder %v1288, %v1319
        %vm1356 = vcmp.ge.s32.totalorder %v1289, %v1319
        %vm1357 = vcmp.ge.s32.totalorder %v1290, %v1319
        %vm1358 = vcmp.ge.s32.totalorder %v1291, %v1319
        %vm1359 = vcmp.ge.s32.totalorder %v1292, %v1319
        %vm1360 = vcmp.ge.s32.totalorder %v1293, %v1319
        %vm1361 = vcmp.ge.s32.totalorder %v1294, %v1319
        %vm1362 = vcmp.ge.s32.totalorder %v1295, %v1319
        %vm1363 = vcmp.ge.s32.totalorder %v1296, %v1319
        %vm1364 = vcmp.ge.s32.totalorder %v1297, %v1319
        %vm1365 = vcmp.ge.s32.totalorder %v1298, %v1319
        %vm1366 = vcmp.ge.s32.totalorder %v1299, %v1319
        %vm1367 = vcmp.ge.s32.totalorder %v1300, %v1319
        %vm1368 = vcmp.ge.s32.totalorder %v1301, %v1319
        %vm1369 = vcmp.ge.s32.totalorder %v1302, %v1319
        %vm1370 = vcmp.ge.s32.totalorder %v1303, %v1319
        %vm1371 = vcmp.ge.s32.totalorder %v1304, %v1319
        %vm1372 = vcmp.ge.s32.totalorder %v1305, %v1319
        %vm1373 = vcmp.ge.s32.totalorder %v1306, %v1319
        %vm1374 = vcmp.ge.s32.totalorder %v1307, %v1319
        %vm1375 = vcmp.ge.s32.totalorder %v1308, %v1319
        %vm1376 = vcmp.ge.s32.totalorder %v1309, %v1319
        %vm1377 = vcmp.ge.s32.totalorder %v1310, %v1319
        %vm1378 = vcmp.ge.s32.totalorder %v1311, %v1319
        %vm1379 = vcmp.ge.s32.totalorder %v1312, %v1319
        %vm1380 = vcmp.ge.s32.totalorder %v1313, %v1319
        %vm1381 = vcmp.ge.s32.totalorder %v1314, %v1319
        %vm1382 = vcmp.ge.s32.totalorder %v1315, %v1319
        %vm1383 = vcmp.ge.s32.totalorder %v1316, %v1319
        %v1384 = vadd.s32 %v1318, 1
        %v1385 = vmul.u32 %v1384, 16
        %vm1386 = vcmp.lt.s32.totalorder %v1253, %v1385
        %vm1387 = vcmp.lt.s32.totalorder %v1254, %v1385
        %vm1388 = vcmp.lt.s32.totalorder %v1255, %v1385
        %vm1389 = vcmp.lt.s32.totalorder %v1256, %v1385
        %vm1390 = vcmp.lt.s32.totalorder %v1257, %v1385
        %vm1391 = vcmp.lt.s32.totalorder %v1258, %v1385
        %vm1392 = vcmp.lt.s32.totalorder %v1259, %v1385
        %vm1393 = vcmp.lt.s32.totalorder %v1260, %v1385
        %vm1394 = vcmp.lt.s32.totalorder %v1261, %v1385
        %vm1395 = vcmp.lt.s32.totalorder %v1262, %v1385
        %vm1396 = vcmp.lt.s32.totalorder %v1263, %v1385
        %vm1397 = vcmp.lt.s32.totalorder %v1264, %v1385
        %vm1398 = vcmp.lt.s32.totalorder %v1265, %v1385
        %vm1399 = vcmp.lt.s32.totalorder %v1266, %v1385
        %vm1400 = vcmp.lt.s32.totalorder %v1267, %v1385
        %vm1401 = vcmp.lt.s32.totalorder %v1268, %v1385
        %vm1402 = vcmp.lt.s32.totalorder %v1269, %v1385
        %vm1403 = vcmp.lt.s32.totalorder %v1270, %v1385
        %vm1404 = vcmp.lt.s32.totalorder %v1271, %v1385
        %vm1405 = vcmp.lt.s32.totalorder %v1272, %v1385
        %vm1406 = vcmp.lt.s32.totalorder %v1273, %v1385
        %vm1407 = vcmp.lt.s32.totalorder %v1274, %v1385
        %vm1408 = vcmp.lt.s32.totalorder %v1275, %v1385
        %vm1409 = vcmp.lt.s32.totalorder %v1276, %v1385
        %vm1410 = vcmp.lt.s32.totalorder %v1277, %v1385
        %vm1411 = vcmp.lt.s32.totalorder %v1278, %v1385
        %vm1412 = vcmp.lt.s32.totalorder %v1279, %v1385
        %vm1413 = vcmp.lt.s32.totalorder %v1280, %v1385
        %vm1414 = vcmp.lt.s32.totalorder %v1281, %v1385
        %vm1415 = vcmp.lt.s32.totalorder %v1282, %v1385
        %vm1416 = vcmp.lt.s32.totalorder %v1283, %v1385
        %vm1417 = vcmp.lt.s32.totalorder %v1284, %v1385
        %vm1418 = vcmp.lt.s32.totalorder %v1285, %v1385
        %vm1419 = vcmp.lt.s32.totalorder %v1286, %v1385
        %vm1420 = vcmp.lt.s32.totalorder %v1287, %v1385
        %vm1421 = vcmp.lt.s32.totalorder %v1288, %v1385
        %vm1422 = vcmp.lt.s32.totalorder %v1289, %v1385
        %vm1423 = vcmp.lt.s32.totalorder %v1290, %v1385
        %vm1424 = vcmp.lt.s32.totalorder %v1291, %v1385
        %vm1425 = vcmp.lt.s32.totalorder %v1292, %v1385
        %vm1426 = vcmp.lt.s32.totalorder %v1293, %v1385
        %vm1427 = vcmp.lt.s32.totalorder %v1294, %v1385
        %vm1428 = vcmp.lt.s32.totalorder %v1295, %v1385
        %vm1429 = vcmp.lt.s32.totalorder %v1296, %v1385
        %vm1430 = vcmp.lt.s32.totalorder %v1297, %v1385
        %vm1431 = vcmp.lt.s32.totalorder %v1298, %v1385
        %vm1432 = vcmp.lt.s32.totalorder %v1299, %v1385
        %vm1433 = vcmp.lt.s32.totalorder %v1300, %v1385
        %vm1434 = vcmp.lt.s32.totalorder %v1301, %v1385
        %vm1435 = vcmp.lt.s32.totalorder %v1302, %v1385
        %vm1436 = vcmp.lt.s32.totalorder %v1303, %v1385
        %vm1437 = vcmp.lt.s32.totalorder %v1304, %v1385
        %vm1438 = vcmp.lt.s32.totalorder %v1305, %v1385
        %vm1439 = vcmp.lt.s32.totalorder %v1306, %v1385
        %vm1440 = vcmp.lt.s32.totalorder %v1307, %v1385
        %vm1441 = vcmp.lt.s32.totalorder %v1308, %v1385
        %vm1442 = vcmp.lt.s32.totalorder %v1309, %v1385
        %vm1443 = vcmp.lt.s32.totalorder %v1310, %v1385
        %vm1444 = vcmp.lt.s32.totalorder %v1311, %v1385
        %vm1445 = vcmp.lt.s32.totalorder %v1312, %v1385
        %vm1446 = vcmp.lt.s32.totalorder %v1313, %v1385
        %vm1447 = vcmp.lt.s32.totalorder %v1314, %v1385
        %vm1448 = vcmp.lt.s32.totalorder %v1315, %v1385
        %vm1449 = vcmp.lt.s32.totalorder %v1316, %v1385
        %vm1450 = vmand %vm1320, %vm1386
        %vm1451 = vmand %vm1321, %vm1387
        %vm1452 = vmand %vm1322, %vm1388
        %vm1453 = vmand %vm1323, %vm1389
        %vm1454 = vmand %vm1324, %vm1390
        %vm1455 = vmand %vm1325, %vm1391
        %vm1456 = vmand %vm1326, %vm1392
        %vm1457 = vmand %vm1327, %vm1393
        %vm1458 = vmand %vm1328, %vm1394
        %vm1459 = vmand %vm1329, %vm1395
        %vm1460 = vmand %vm1330, %vm1396
        %vm1461 = vmand %vm1331, %vm1397
        %vm1462 = vmand %vm1332, %vm1398
        %vm1463 = vmand %vm1333, %vm1399
        %vm1464 = vmand %vm1334, %vm1400
        %vm1465 = vmand %vm1335, %vm1401
        %vm1466 = vmand %vm1336, %vm1402
        %vm1467 = vmand %vm1337, %vm1403
        %vm1468 = vmand %vm1338, %vm1404
        %vm1469 = vmand %vm1339, %vm1405
        %vm1470 = vmand %vm1340, %vm1406
        %vm1471 = vmand %vm1341, %vm1407
        %vm1472 = vmand %vm1342, %vm1408
        %vm1473 = vmand %vm1343, %vm1409
        %vm1474 = vmand %vm1344, %vm1410
        %vm1475 = vmand %vm1345, %vm1411
        %vm1476 = vmand %vm1346, %vm1412
        %vm1477 = vmand %vm1347, %vm1413
        %vm1478 = vmand %vm1348, %vm1414
        %vm1479 = vmand %vm1349, %vm1415
        %vm1480 = vmand %vm1350, %vm1416
        %vm1481 = vmand %vm1351, %vm1417
        %vm1482 = vmand %vm1352, %vm1418
        %vm1483 = vmand %vm1353, %vm1419
        %vm1484 = vmand %vm1354, %vm1420
        %vm1485 = vmand %vm1355, %vm1421
        %vm1486 = vmand %vm1356, %vm1422
        %vm1487 = vmand %vm1357, %vm1423
        %vm1488 = vmand %vm1358, %vm1424
        %vm1489 = vmand %vm1359, %vm1425
        %vm1490 = vmand %vm1360, %vm1426
        %vm1491 = vmand %vm1361, %vm1427
        %vm1492 = vmand %vm1362, %vm1428
        %vm1493 = vmand %vm1363, %vm1429
        %vm1494 = vmand %vm1364, %vm1430
        %vm1495 = vmand %vm1365, %vm1431
        %vm1496 = vmand %vm1366, %vm1432
        %vm1497 = vmand %vm1367, %vm1433
        %vm1498 = vmand %vm1368, %vm1434
        %vm1499 = vmand %vm1369, %vm1435
        %vm1500 = vmand %vm1370, %vm1436
        %vm1501 = vmand %vm1371, %vm1437
        %vm1502 = vmand %vm1372, %vm1438
        %vm1503 = vmand %vm1373, %vm1439
        %vm1504 = vmand %vm1374, %vm1440
        %vm1505 = vmand %vm1375, %vm1441
        %vm1506 = vmand %vm1376, %vm1442
        %vm1507 = vmand %vm1377, %vm1443
        %vm1508 = vmand %vm1378, %vm1444
        %vm1509 = vmand %vm1379, %vm1445
        %vm1510 = vmand %vm1380, %vm1446
        %vm1511 = vmand %vm1381, %vm1447
        %vm1512 = vmand %vm1382, %vm1448
        %vm1513 = vmand %vm1383, %vm1449
        %1514 = vmax.xlane.f32.xlu0 %v777
        %v1515 = vpop.xlane.xlu0 %1514
        %1516 = vmax.xlane.f32.xlu0 %v778
        %v1517 = vpop.xlane.xlu0 %1516
        %1518 = vmax.xlane.f32.xlu0 %v779
        %v1519 = vpop.xlane.xlu0 %1518
        %1520 = vmax.xlane.f32.xlu0 %v780
        %v1521 = vpop.xlane.xlu0 %1520
        %1522 = vmax.xlane.f32.xlu0 %v781
        %v1523 = vpop.xlane.xlu0 %1522
        %1524 = vmax.xlane.f32.xlu0 %v783
        %v1525 = vpop.xlane.xlu0 %1524
        %1526 = vmax.xlane.f32.xlu0 %v785
        %v1527 = vpop.xlane.xlu0 %1526
        %1528 = vmax.xlane.f32.xlu0 %v787
        %v1529 = vpop.xlane.xlu0 %1528
        %1530 = vmax.xlane.f32.xlu0 %v789
        %v1531 = vpop.xlane.xlu0 %1530
        %1532 = vmax.xlane.f32.xlu0 %v791
        %v1533 = vpop.xlane.xlu0 %1532
        %1534 = vmax.xlane.f32.xlu0 %v793
        %v1535 = vpop.xlane.xlu0 %1534
        %1536 = vmax.xlane.f32.xlu0 %v795
        %v1537 = vpop.xlane.xlu0 %1536
        %1538 = vmax.xlane.f32.xlu0 %v797
        %v1539 = vpop.xlane.xlu0 %1538
        %1540 = vmax.xlane.f32.xlu0 %v799
        %v1541 = vpop.xlane.xlu0 %1540
        %1542 = vmax.xlane.f32.xlu0 %v801
        %v1543 = vpop.xlane.xlu0 %1542
        %1544 = vmax.xlane.f32.xlu0 %v803
        %v1545 = vpop.xlane.xlu0 %1544
        %1546 = vmax.xlane.f32.xlu0 %v805
        %v1547 = vpop.xlane.xlu0 %1546
        %1548 = vmax.xlane.f32.xlu0 %v807
        %v1549 = vpop.xlane.xlu0 %1548
        %1550 = vmax.xlane.f32.xlu0 %v809
        %v1551 = vpop.xlane.xlu0 %1550
        %1552 = vmax.xlane.f32.xlu0 %v811
        %v1553 = vpop.xlane.xlu0 %1552
        %1554 = vmax.xlane.f32.xlu0 %v813
        %v1555 = vpop.xlane.xlu0 %1554
        %1556 = vmax.xlane.f32.xlu0 %v815
        %v1557 = vpop.xlane.xlu0 %1556
        %1558 = vmax.xlane.f32.xlu0 %v817
        %v1559 = vpop.xlane.xlu0 %1558
        %1560 = vmax.xlane.f32.xlu0 %v819
        %v1561 = vpop.xlane.xlu0 %1560
        %1562 = vmax.xlane.f32.xlu0 %v821
        %v1563 = vpop.xlane.xlu0 %1562
        %1564 = vmax.xlane.f32.xlu0 %v823
        %v1565 = vpop.xlane.xlu0 %1564
        %1566 = vmax.xlane.f32.xlu0 %v825
        %v1567 = vpop.xlane.xlu0 %1566
        %1568 = vmax.xlane.f32.xlu0 %v827
        %v1569 = vpop.xlane.xlu0 %1568
        %1570 = vmax.xlane.f32.xlu0 %v829
        %v1571 = vpop.xlane.xlu0 %1570
        %1572 = vmax.xlane.f32.xlu0 %v831
        %v1573 = vpop.xlane.xlu0 %1572
        %1574 = vmax.xlane.f32.xlu0 %v833
        %v1575 = vpop.xlane.xlu0 %1574
        %1576 = vmax.xlane.f32.xlu0 %v835
        %v1577 = vpop.xlane.xlu0 %1576
        %1578 = vmax.xlane.f32.xlu0 %v837
        %v1579 = vpop.xlane.xlu0 %1578
        %1580 = vmax.xlane.f32.xlu0 %v839
        %v1581 = vpop.xlane.xlu0 %1580
        %1582 = vmax.xlane.f32.xlu0 %v841
        %v1583 = vpop.xlane.xlu0 %1582
        %1584 = vmax.xlane.f32.xlu0 %v843
        %v1585 = vpop.xlane.xlu0 %1584
        %1586 = vmax.xlane.f32.xlu0 %v845
        %v1587 = vpop.xlane.xlu0 %1586
        %1588 = vmax.xlane.f32.xlu0 %v847
        %v1589 = vpop.xlane.xlu0 %1588
        %1590 = vmax.xlane.f32.xlu0 %v849
        %v1591 = vpop.xlane.xlu0 %1590
        %1592 = vmax.xlane.f32.xlu0 %v851
        %v1593 = vpop.xlane.xlu0 %1592
        %1594 = vmax.xlane.f32.xlu0 %v853
        %v1595 = vpop.xlane.xlu0 %1594
        %1596 = vmax.xlane.f32.xlu0 %v855
        %v1597 = vpop.xlane.xlu0 %1596
        %1598 = vmax.xlane.f32.xlu0 %v857
        %v1599 = vpop.xlane.xlu0 %1598
        %1600 = vmax.xlane.f32.xlu0 %v859
        %v1601 = vpop.xlane.xlu0 %1600
        %1602 = vmax.xlane.f32.xlu0 %v861
        %v1603 = vpop.xlane.xlu0 %1602
        %1604 = vmax.xlane.f32.xlu0 %v863
        %v1605 = vpop.xlane.xlu0 %1604
        %1606 = vmax.xlane.f32.xlu0 %v865
        %v1607 = vpop.xlane.xlu0 %1606
        %1608 = vmax.xlane.f32.xlu0 %v867
        %v1609 = vpop.xlane.xlu0 %1608
        %1610 = vmax.xlane.f32.xlu0 %v869
        %v1611 = vpop.xlane.xlu0 %1610
        %1612 = vmax.xlane.f32.xlu0 %v871
        %v1613 = vpop.xlane.xlu0 %1612
        %1614 = vmax.xlane.f32.xlu0 %v873
        %v1615 = vpop.xlane.xlu0 %1614
        %1616 = vmax.xlane.f32.xlu0 %v875
        %v1617 = vpop.xlane.xlu0 %1616
        %1618 = vmax.xlane.f32.xlu0 %v877
        %v1619 = vpop.xlane.xlu0 %1618
        %1620 = vmax.xlane.f32.xlu0 %v879
        %v1621 = vpop.xlane.xlu0 %1620
        %1622 = vmax.xlane.f32.xlu0 %v881
        %v1623 = vpop.xlane.xlu0 %1622
        %1624 = vmax.xlane.f32.xlu0 %v883
        %v1625 = vpop.xlane.xlu0 %1624
        %1626 = vmax.xlane.f32.xlu0 %v885
        %v1627 = vpop.xlane.xlu0 %1626
        %1628 = vmax.xlane.f32.xlu0 %v887
        %v1629 = vpop.xlane.xlu0 %1628
        %1630 = vmax.xlane.f32.xlu0 %v889
        %v1631 = vpop.xlane.xlu0 %1630
        %1632 = vmax.xlane.f32.xlu0 %v891
        %v1633 = vpop.xlane.xlu0 %1632
        %1634 = vmax.xlane.f32.xlu0 %v893
        %v1635 = vpop.xlane.xlu0 %1634
        %1636 = vmax.xlane.f32.xlu0 %v895
        %v1637 = vpop.xlane.xlu0 %1636
        %1638 = vmax.xlane.f32.xlu0 %v897
        %v1639 = vpop.xlane.xlu0 %1638
        %1640 = vmax.xlane.f32.xlu0 %v899
        %v1641 = vpop.xlane.xlu0 %1640
        %v1642 = vsel %vm1450, %v1515, -inf
        %v1643 = vsel %vm1451, %v1517, -inf
        %v1644 = vsel %vm1452, %v1519, -inf
        %v1645 = vsel %vm1453, %v1521, -inf
        %v1646 = vsel %vm1454, %v1523, -inf
        %v1647 = vsel %vm1455, %v1525, -inf
        %v1648 = vsel %vm1456, %v1527, -inf
        %v1649 = vsel %vm1457, %v1529, -inf
        %v1650 = vsel %vm1458, %v1531, -inf
        %v1651 = vsel %vm1459, %v1533, -inf
        %v1652 = vsel %vm1460, %v1535, -inf
        %v1653 = vsel %vm1461, %v1537, -inf
        %v1654 = vsel %vm1462, %v1539, -inf
        %v1655 = vsel %vm1463, %v1541, -inf
        %v1656 = vsel %vm1464, %v1543, -inf
        %v1657 = vsel %vm1465, %v1545, -inf
        %v1658 = vsel %vm1466, %v1547, -inf
        %v1659 = vsel %vm1467, %v1549, -inf
        %v1660 = vsel %vm1468, %v1551, -inf
        %v1661 = vsel %vm1469, %v1553, -inf
        %v1662 = vsel %vm1470, %v1555, -inf
        %v1663 = vsel %vm1471, %v1557, -inf
        %v1664 = vsel %vm1472, %v1559, -inf
        %v1665 = vsel %vm1473, %v1561, -inf
        %v1666 = vsel %vm1474, %v1563, -inf
        %v1667 = vsel %vm1475, %v1565, -inf
        %v1668 = vsel %vm1476, %v1567, -inf
        %v1669 = vsel %vm1477, %v1569, -inf
        %v1670 = vsel %vm1478, %v1571, -inf
        %v1671 = vsel %vm1479, %v1573, -inf
        %v1672 = vsel %vm1480, %v1575, -inf
        %v1673 = vsel %vm1481, %v1577, -inf
        %v1674 = vsel %vm1482, %v1579, -inf
        %v1675 = vsel %vm1483, %v1581, -inf
        %v1676 = vsel %vm1484, %v1583, -inf
        %v1677 = vsel %vm1485, %v1585, -inf
        %v1678 = vsel %vm1486, %v1587, -inf
        %v1679 = vsel %vm1487, %v1589, -inf
        %v1680 = vsel %vm1488, %v1591, -inf
        %v1681 = vsel %vm1489, %v1593, -inf
        %v1682 = vsel %vm1490, %v1595, -inf
        %v1683 = vsel %vm1491, %v1597, -inf
        %v1684 = vsel %vm1492, %v1599, -inf
        %v1685 = vsel %vm1493, %v1601, -inf
        %v1686 = vsel %vm1494, %v1603, -inf
        %v1687 = vsel %vm1495, %v1605, -inf
        %v1688 = vsel %vm1496, %v1607, -inf
        %v1689 = vsel %vm1497, %v1609, -inf
        %v1690 = vsel %vm1498, %v1611, -inf
        %v1691 = vsel %vm1499, %v1613, -inf
        %v1692 = vsel %vm1500, %v1615, -inf
        %v1693 = vsel %vm1501, %v1617, -inf
        %v1694 = vsel %vm1502, %v1619, -inf
        %v1695 = vsel %vm1503, %v1621, -inf
        %v1696 = vsel %vm1504, %v1623, -inf
        %v1697 = vsel %vm1505, %v1625, -inf
        %v1698 = vsel %vm1506, %v1627, -inf
        %v1699 = vsel %vm1507, %v1629, -inf
        %v1700 = vsel %vm1508, %v1631, -inf
        %v1701 = vsel %vm1509, %v1633, -inf
        %v1702 = vsel %vm1510, %v1635, -inf
        %v1703 = vsel %vm1511, %v1637, -inf
        %v1704 = vsel %vm1512, %v1639, -inf
        %v1705 = vsel %vm1513, %v1641, -inf
        %vm1706 = vcmask 261120
        %v1707 = vsel %vm1706, %v1642, -inf
        %v1708 = vsel %vm1706, %v1643, -inf
        %v1709 = vsel %vm1706, %v1644, -inf
        %v1710 = vsel %vm1706, %v1645, -inf
        %v1711 = vsel %vm1706, %v1646, -inf
        %v1712 = vmax.f32 %v1707, %v1711
        %v1713 = vsel %vm1706, %v1647, -inf
        %v1714 = vmax.f32 %v1708, %v1713
        %v1715 = vsel %vm1706, %v1648, -inf
        %v1716 = vmax.f32 %v1709, %v1715
        %v1717 = vsel %vm1706, %v1649, -inf
        %v1718 = vmax.f32 %v1710, %v1717
        %v1719 = vsel %vm1706, %v1650, -inf
        %v1720 = vmax.f32 %v1712, %v1719
        %v1721 = vsel %vm1706, %v1651, -inf
        %v1722 = vmax.f32 %v1714, %v1721
        %v1723 = vsel %vm1706, %v1652, -inf
        %v1724 = vmax.f32 %v1716, %v1723
        %v1725 = vsel %vm1706, %v1653, -inf
        %v1726 = vmax.f32 %v1718, %v1725
        %v1727 = vsel %vm1706, %v1654, -inf
        %v1728 = vmax.f32 %v1720, %v1727
        %v1729 = vsel %vm1706, %v1655, -inf
        %v1730 = vmax.f32 %v1722, %v1729
        %v1731 = vsel %vm1706, %v1656, -inf
        %v1732 = vmax.f32 %v1724, %v1731
        %v1733 = vsel %vm1706, %v1657, -inf
        %v1734 = vmax.f32 %v1726, %v1733
        %v1735 = vsel %vm1706, %v1658, -inf
        %v1736 = vmax.f32 %v1728, %v1735
        %v1737 = vsel %vm1706, %v1659, -inf
        %v1738 = vmax.f32 %v1730, %v1737
        %v1739 = vsel %vm1706, %v1660, -inf
        %v1740 = vmax.f32 %v1732, %v1739
        %v1741 = vsel %vm1706, %v1661, -inf
        %v1742 = vmax.f32 %v1734, %v1741
        %v1743 = vsel %vm1706, %v1662, -inf
        %v1744 = vmax.f32 %v1736, %v1743
        %v1745 = vsel %vm1706, %v1663, -inf
        %v1746 = vmax.f32 %v1738, %v1745
        %v1747 = vsel %vm1706, %v1664, -inf
        %v1748 = vmax.f32 %v1740, %v1747
        %v1749 = vsel %vm1706, %v1665, -inf
        %v1750 = vmax.f32 %v1742, %v1749
        %v1751 = vsel %vm1706, %v1666, -inf
        %v1752 = vmax.f32 %v1744, %v1751
        %v1753 = vsel %vm1706, %v1667, -inf
        %v1754 = vmax.f32 %v1746, %v1753
        %v1755 = vsel %vm1706, %v1668, -inf
        %v1756 = vmax.f32 %v1748, %v1755
        %v1757 = vsel %vm1706, %v1669, -inf
        %v1758 = vmax.f32 %v1750, %v1757
        %v1759 = vsel %vm1706, %v1670, -inf
        %v1760 = vmax.f32 %v1752, %v1759
        %v1761 = vsel %vm1706, %v1671, -inf
        %v1762 = vmax.f32 %v1754, %v1761
        %v1763 = vsel %vm1706, %v1672, -inf
        %v1764 = vmax.f32 %v1756, %v1763
        %v1765 = vsel %vm1706, %v1673, -inf
        %v1766 = vmax.f32 %v1758, %v1765
        %v1767 = vsel %vm1706, %v1674, -inf
        %v1768 = vmax.f32 %v1760, %v1767
        %v1769 = vsel %vm1706, %v1675, -inf
        %v1770 = vmax.f32 %v1762, %v1769
        %v1771 = vsel %vm1706, %v1676, -inf
        %v1772 = vmax.f32 %v1764, %v1771
        %v1773 = vsel %vm1706, %v1677, -inf
        %v1774 = vmax.f32 %v1766, %v1773
        %v1775 = vsel %vm1706, %v1678, -inf
        %v1776 = vmax.f32 %v1768, %v1775
        %v1777 = vsel %vm1706, %v1679, -inf
        %v1778 = vmax.f32 %v1770, %v1777
        %v1779 = vsel %vm1706, %v1680, -inf
        %v1780 = vmax.f32 %v1772, %v1779
        %v1781 = vsel %vm1706, %v1681, -inf
        %v1782 = vmax.f32 %v1774, %v1781
        %v1783 = vsel %vm1706, %v1682, -inf
        %v1784 = vmax.f32 %v1776, %v1783
        %v1785 = vsel %vm1706, %v1683, -inf
        %v1786 = vmax.f32 %v1778, %v1785
        %v1787 = vsel %vm1706, %v1684, -inf
        %v1788 = vmax.f32 %v1780, %v1787
        %v1789 = vsel %vm1706, %v1685, -inf
        %v1790 = vmax.f32 %v1782, %v1789
        %v1791 = vsel %vm1706, %v1686, -inf
        %v1792 = vmax.f32 %v1784, %v1791
        %v1793 = vsel %vm1706, %v1687, -inf
        %v1794 = vmax.f32 %v1786, %v1793
        %v1795 = vsel %vm1706, %v1688, -inf
        %v1796 = vmax.f32 %v1788, %v1795
        %v1797 = vsel %vm1706, %v1689, -inf
        %v1798 = vmax.f32 %v1790, %v1797
        %v1799 = vsel %vm1706, %v1690, -inf
        %v1800 = vmax.f32 %v1792, %v1799
        %v1801 = vsel %vm1706, %v1691, -inf
        %v1802 = vmax.f32 %v1794, %v1801
        %v1803 = vsel %vm1706, %v1692, -inf
        %v1804 = vmax.f32 %v1796, %v1803
        %v1805 = vsel %vm1706, %v1693, -inf
        %v1806 = vmax.f32 %v1798, %v1805
        %v1807 = vsel %vm1706, %v1694, -inf
        %v1808 = vmax.f32 %v1800, %v1807
        %v1809 = vsel %vm1706, %v1695, -inf
        %v1810 = vmax.f32 %v1802, %v1809
        %v1811 = vsel %vm1706, %v1696, -inf
        %v1812 = vmax.f32 %v1804, %v1811
        %v1813 = vsel %vm1706, %v1697, -inf
        %v1814 = vmax.f32 %v1806, %v1813
        %v1815 = vsel %vm1706, %v1698, -inf
        %v1816 = vmax.f32 %v1808, %v1815
        %v1817 = vsel %vm1706, %v1699, -inf
        %v1818 = vmax.f32 %v1810, %v1817
        %v1819 = vsel %vm1706, %v1700, -inf
        %v1820 = vmax.f32 %v1812, %v1819
        %v1821 = vsel %vm1706, %v1701, -inf
        %v1822 = vmax.f32 %v1814, %v1821
        %v1823 = vsel %vm1706, %v1702, -inf
        %v1824 = vmax.f32 %v1816, %v1823
        %v1825 = vsel %vm1706, %v1703, -inf
        %v1826 = vmax.f32 %v1818, %v1825
        %v1827 = vsel %vm1706, %v1704, -inf
        %v1828 = vmax.f32 %v1820, %v1827
        %v1829 = vsel %vm1706, %v1705, -inf
        %v1830 = vmax.f32 %v1822, %v1829
        %v1831 = vmax.f32 %v1824, %v1826
        %v1832 = vmax.f32 %v1828, %v1830
        %v1833 = vmax.f32 %v1831, %v1832
        %v1834 = vrot.slane %v1833, 4
        %v1835 = vmax.f32 %v1833, %v1834
        %v1836 = vrot.slane %v1835, 2
        %v1837 = vmax.f32 %v1835, %v1836
        %v1838 = vrot.slane %v1837, 1
        %v1839 = vmax.f32 %v1837, %v1838
        %v1840 = vsel %vm1450, %v1839, 0.0
        %v1841 = vsel %vm1451, %v1839, 0.0
        %v1842 = vsel %vm1452, %v1839, 0.0
        %v1843 = vsel %vm1453, %v1839, 0.0
        %v1844 = vsel %vm1454, %v1839, 0.0
        %v1845 = vsel %vm1455, %v1839, 0.0
        %v1846 = vsel %vm1456, %v1839, 0.0
        %v1847 = vsel %vm1457, %v1839, 0.0
        %v1848 = vsel %vm1458, %v1839, 0.0
        %v1849 = vsel %vm1459, %v1839, 0.0
        %v1850 = vsel %vm1460, %v1839, 0.0
        %v1851 = vsel %vm1461, %v1839, 0.0
        %v1852 = vsel %vm1462, %v1839, 0.0
        %v1853 = vsel %vm1463, %v1839, 0.0
        %v1854 = vsel %vm1464, %v1839, 0.0
        %v1855 = vsel %vm1465, %v1839, 0.0
        %v1856 = vsel %vm1466, %v1839, 0.0
        %v1857 = vsel %vm1467, %v1839, 0.0
        %v1858 = vsel %vm1468, %v1839, 0.0
        %v1859 = vsel %vm1469, %v1839, 0.0
        %v1860 = vsel %vm1470, %v1839, 0.0
        %v1861 = vsel %vm1471, %v1839, 0.0
        %v1862 = vsel %vm1472, %v1839, 0.0
        %v1863 = vsel %vm1473, %v1839, 0.0
        %v1864 = vsel %vm1474, %v1839, 0.0
        %v1865 = vsel %vm1475, %v1839, 0.0
        %v1866 = vsel %vm1476, %v1839, 0.0
        %v1867 = vsel %vm1477, %v1839, 0.0
        %v1868 = vsel %vm1478, %v1839, 0.0
        %v1869 = vsel %vm1479, %v1839, 0.0
        %v1870 = vsel %vm1480, %v1839, 0.0
        %v1871 = vsel %vm1481, %v1839, 0.0
        %v1872 = vsel %vm1482, %v1839, 0.0
        %v1873 = vsel %vm1483, %v1839, 0.0
        %v1874 = vsel %vm1484, %v1839, 0.0
        %v1875 = vsel %vm1485, %v1839, 0.0
        %v1876 = vsel %vm1486, %v1839, 0.0
        %v1877 = vsel %vm1487, %v1839, 0.0
        %v1878 = vsel %vm1488, %v1839, 0.0
        %v1879 = vsel %vm1489, %v1839, 0.0
        %v1880 = vsel %vm1490, %v1839, 0.0
        %v1881 = vsel %vm1491, %v1839, 0.0
        %v1882 = vsel %vm1492, %v1839, 0.0
        %v1883 = vsel %vm1493, %v1839, 0.0
        %v1884 = vsel %vm1494, %v1839, 0.0
        %v1885 = vsel %vm1495, %v1839, 0.0
        %v1886 = vsel %vm1496, %v1839, 0.0
        %v1887 = vsel %vm1497, %v1839, 0.0
        %v1888 = vsel %vm1498, %v1839, 0.0
        %v1889 = vsel %vm1499, %v1839, 0.0
        %v1890 = vsel %vm1500, %v1839, 0.0
        %v1891 = vsel %vm1501, %v1839, 0.0
        %v1892 = vsel %vm1502, %v1839, 0.0
        %v1893 = vsel %vm1503, %v1839, 0.0
        %v1894 = vsel %vm1504, %v1839, 0.0
        %v1895 = vsel %vm1505, %v1839, 0.0
        %v1896 = vsel %vm1506, %v1839, 0.0
        %v1897 = vsel %vm1507, %v1839, 0.0
        %v1898 = vsel %vm1508, %v1839, 0.0
        %v1899 = vsel %vm1509, %v1839, 0.0
        %v1900 = vsel %vm1510, %v1839, 0.0
        %v1901 = vsel %vm1511, %v1839, 0.0
        %v1902 = vsel %vm1512, %v1839, 0.0
        %v1903 = vsel %vm1513, %v1839, 0.0
        %v1904 = vsel %vm1706, %v1840, 0.0
        %1905 = vadd.xlane.f32.xlu0 %v1904
        %v1906 = vpop.xlane.xlu0 %1905
        %v1907 = vsel %vm1706, %v1841, 0.0
        %1908 = vadd.xlane.f32.xlu0 %v1907
        %v1909 = vpop.xlane.xlu0 %1908
        %v1910 = vsel %vm1706, %v1842, 0.0
        %1911 = vadd.xlane.f32.xlu0 %v1910
        %v1912 = vpop.xlane.xlu0 %1911
        %v1913 = vsel %vm1706, %v1843, 0.0
        %1914 = vadd.xlane.f32.xlu0 %v1913
        %v1915 = vpop.xlane.xlu0 %1914
        %v1916 = vsel %vm1706, %v1844, 0.0
        %1917 = vadd.xlane.f32.xlu0 %v1916
        %v1918 = vpop.xlane.xlu0 %1917
        %v1919 = vsel %vm1706, %v1845, 0.0
        %1920 = vadd.xlane.f32.xlu0 %v1919
        %v1921 = vpop.xlane.xlu0 %1920
        %v1922 = vsel %vm1706, %v1846, 0.0
        %1923 = vadd.xlane.f32.xlu0 %v1922
        %v1924 = vpop.xlane.xlu0 %1923
        %v1925 = vsel %vm1706, %v1847, 0.0
        %1926 = vadd.xlane.f32.xlu0 %v1925
        %v1927 = vpop.xlane.xlu0 %1926
        %v1928 = vsel %vm1706, %v1848, 0.0
        %1929 = vadd.xlane.f32.xlu0 %v1928
        %v1930 = vpop.xlane.xlu0 %1929
        %v1931 = vsel %vm1706, %v1849, 0.0
        %1932 = vadd.xlane.f32.xlu0 %v1931
        %v1933 = vpop.xlane.xlu0 %1932
        %v1934 = vsel %vm1706, %v1850, 0.0
        %1935 = vadd.xlane.f32.xlu0 %v1934
        %v1936 = vpop.xlane.xlu0 %1935
        %v1937 = vsel %vm1706, %v1851, 0.0
        %1938 = vadd.xlane.f32.xlu0 %v1937
        %v1939 = vpop.xlane.xlu0 %1938
        %v1940 = vsel %vm1706, %v1852, 0.0
        %1941 = vadd.xlane.f32.xlu0 %v1940
        %v1942 = vpop.xlane.xlu0 %1941
        %v1943 = vsel %vm1706, %v1853, 0.0
        %1944 = vadd.xlane.f32.xlu0 %v1943
        %v1945 = vpop.xlane.xlu0 %1944
        %v1946 = vsel %vm1706, %v1854, 0.0
        %1947 = vadd.xlane.f32.xlu0 %v1946
        %v1948 = vpop.xlane.xlu0 %1947
        %v1949 = vsel %vm1706, %v1855, 0.0
        %1950 = vadd.xlane.f32.xlu0 %v1949
        %v1951 = vpop.xlane.xlu0 %1950
        %v1952 = vsel %vm1706, %v1856, 0.0
        %1953 = vadd.xlane.f32.xlu0 %v1952
        %v1954 = vpop.xlane.xlu0 %1953
        %v1955 = vsel %vm1706, %v1857, 0.0
        %1956 = vadd.xlane.f32.xlu0 %v1955
        %v1957 = vpop.xlane.xlu0 %1956
        %v1958 = vsel %vm1706, %v1858, 0.0
        %1959 = vadd.xlane.f32.xlu0 %v1958
        %v1960 = vpop.xlane.xlu0 %1959
        %v1961 = vsel %vm1706, %v1859, 0.0
        %1962 = vadd.xlane.f32.xlu0 %v1961
        %v1963 = vpop.xlane.xlu0 %1962
        %v1964 = vsel %vm1706, %v1860, 0.0
        %1965 = vadd.xlane.f32.xlu0 %v1964
        %v1966 = vpop.xlane.xlu0 %1965
        %v1967 = vsel %vm1706, %v1861, 0.0
        %1968 = vadd.xlane.f32.xlu0 %v1967
        %v1969 = vpop.xlane.xlu0 %1968
        %v1970 = vsel %vm1706, %v1862, 0.0
        %1971 = vadd.xlane.f32.xlu0 %v1970
        %v1972 = vpop.xlane.xlu0 %1971
        %v1973 = vsel %vm1706, %v1863, 0.0
        %1974 = vadd.xlane.f32.xlu0 %v1973
        %v1975 = vpop.xlane.xlu0 %1974
        %v1976 = vsel %vm1706, %v1864, 0.0
        %1977 = vadd.xlane.f32.xlu0 %v1976
        %v1978 = vpop.xlane.xlu0 %1977
        %v1979 = vsel %vm1706, %v1865, 0.0
        %1980 = vadd.xlane.f32.xlu0 %v1979
        %v1981 = vpop.xlane.xlu0 %1980
        %v1982 = vsel %vm1706, %v1866, 0.0
        %1983 = vadd.xlane.f32.xlu0 %v1982
        %v1984 = vpop.xlane.xlu0 %1983
        %v1985 = vsel %vm1706, %v1867, 0.0
        %1986 = vadd.xlane.f32.xlu0 %v1985
        %v1987 = vpop.xlane.xlu0 %1986
        %v1988 = vsel %vm1706, %v1868, 0.0
        %1989 = vadd.xlane.f32.xlu0 %v1988
        %v1990 = vpop.xlane.xlu0 %1989
        %v1991 = vsel %vm1706, %v1869, 0.0
        %1992 = vadd.xlane.f32.xlu0 %v1991
        %v1993 = vpop.xlane.xlu0 %1992
        %v1994 = vsel %vm1706, %v1870, 0.0
        %1995 = vadd.xlane.f32.xlu0 %v1994
        %v1996 = vpop.xlane.xlu0 %1995
        %v1997 = vsel %vm1706, %v1871, 0.0
        %1998 = vadd.xlane.f32.xlu0 %v1997
        %v1999 = vpop.xlane.xlu0 %1998
        %v2000 = vsel %vm1706, %v1872, 0.0
        %2001 = vadd.xlane.f32.xlu0 %v2000
        %v2002 = vpop.xlane.xlu0 %2001
        %v2003 = vsel %vm1706, %v1873, 0.0
        %2004 = vadd.xlane.f32.xlu0 %v2003
        %v2005 = vpop.xlane.xlu0 %2004
        %v2006 = vsel %vm1706, %v1874, 0.0
        %2007 = vadd.xlane.f32.xlu0 %v2006
        %v2008 = vpop.xlane.xlu0 %2007
        %v2009 = vsel %vm1706, %v1875, 0.0
        %2010 = vadd.xlane.f32.xlu0 %v2009
        %v2011 = vpop.xlane.xlu0 %2010
        %v2012 = vsel %vm1706, %v1876, 0.0
        %2013 = vadd.xlane.f32.xlu0 %v2012
        %v2014 = vpop.xlane.xlu0 %2013
        %v2015 = vsel %vm1706, %v1877, 0.0
        %2016 = vadd.xlane.f32.xlu0 %v2015
        %v2017 = vpop.xlane.xlu0 %2016
        %v2018 = vsel %vm1706, %v1878, 0.0
        %2019 = vadd.xlane.f32.xlu0 %v2018
        %v2020 = vpop.xlane.xlu0 %2019
        %v2021 = vsel %vm1706, %v1879, 0.0
        %2022 = vadd.xlane.f32.xlu0 %v2021
        %v2023 = vpop.xlane.xlu0 %2022
        %v2024 = vsel %vm1706, %v1880, 0.0
        %2025 = vadd.xlane.f32.xlu0 %v2024
        %v2026 = vpop.xlane.xlu0 %2025
        %v2027 = vsel %vm1706, %v1881, 0.0
        %2028 = vadd.xlane.f32.xlu0 %v2027
        %v2029 = vpop.xlane.xlu0 %2028
        %v2030 = vsel %vm1706, %v1882, 0.0
        %2031 = vadd.xlane.f32.xlu0 %v2030
        %v2032 = vpop.xlane.xlu0 %2031
        %v2033 = vsel %vm1706, %v1883, 0.0
        %2034 = vadd.xlane.f32.xlu0 %v2033
        %v2035 = vpop.xlane.xlu0 %2034
        %v2036 = vsel %vm1706, %v1884, 0.0
        %2037 = vadd.xlane.f32.xlu0 %v2036
        %v2038 = vpop.xlane.xlu0 %2037
        %v2039 = vsel %vm1706, %v1885, 0.0
        %2040 = vadd.xlane.f32.xlu0 %v2039
        %v2041 = vpop.xlane.xlu0 %2040
        %v2042 = vsel %vm1706, %v1886, 0.0
        %2043 = vadd.xlane.f32.xlu0 %v2042
        %v2044 = vpop.xlane.xlu0 %2043
        %v2045 = vsel %vm1706, %v1887, 0.0
        %2046 = vadd.xlane.f32.xlu0 %v2045
        %v2047 = vpop.xlane.xlu0 %2046
        %v2048 = vsel %vm1706, %v1888, 0.0
        %2049 = vadd.xlane.f32.xlu0 %v2048
        %v2050 = vpop.xlane.xlu0 %2049
        %v2051 = vsel %vm1706, %v1889, 0.0
        %2052 = vadd.xlane.f32.xlu0 %v2051
        %v2053 = vpop.xlane.xlu0 %2052
        %v2054 = vsel %vm1706, %v1890, 0.0
        %2055 = vadd.xlane.f32.xlu0 %v2054
        %v2056 = vpop.xlane.xlu0 %2055
        %v2057 = vsel %vm1706, %v1891, 0.0
        %2058 = vadd.xlane.f32.xlu0 %v2057
        %v2059 = vpop.xlane.xlu0 %2058
        %v2060 = vsel %vm1706, %v1892, 0.0
        %2061 = vadd.xlane.f32.xlu0 %v2060
        %v2062 = vpop.xlane.xlu0 %2061
        %v2063 = vsel %vm1706, %v1893, 0.0
        %2064 = vadd.xlane.f32.xlu0 %v2063
        %v2065 = vpop.xlane.xlu0 %2064
        %v2066 = vsel %vm1706, %v1894, 0.0
        %2067 = vadd.xlane.f32.xlu0 %v2066
        %v2068 = vpop.xlane.xlu0 %2067
        %v2069 = vsel %vm1706, %v1895, 0.0
        %2070 = vadd.xlane.f32.xlu0 %v2069
        %v2071 = vpop.xlane.xlu0 %2070
        %v2072 = vsel %vm1706, %v1896, 0.0
        %2073 = vadd.xlane.f32.xlu0 %v2072
        %v2074 = vpop.xlane.xlu0 %2073
        %v2075 = vsel %vm1706, %v1897, 0.0
        %2076 = vadd.xlane.f32.xlu0 %v2075
        %v2077 = vpop.xlane.xlu0 %2076
        %v2078 = vsel %vm1706, %v1898, 0.0
        %2079 = vadd.xlane.f32.xlu0 %v2078
        %v2080 = vpop.xlane.xlu0 %2079
        %v2081 = vsel %vm1706, %v1899, 0.0
        %2082 = vadd.xlane.f32.xlu0 %v2081
        %v2083 = vpop.xlane.xlu0 %2082
        %v2084 = vsel %vm1706, %v1900, 0.0
        %2085 = vadd.xlane.f32.xlu0 %v2084
        %v2086 = vpop.xlane.xlu0 %2085
        %v2087 = vsel %vm1706, %v1901, 0.0
        %2088 = vadd.xlane.f32.xlu0 %v2087
        %v2089 = vpop.xlane.xlu0 %2088
        %v2090 = vsel %vm1706, %v1902, 0.0
        %2091 = vadd.xlane.f32.xlu0 %v2090
        %v2092 = vpop.xlane.xlu0 %2091
        %v2093 = vsel %vm1706, %v1903, 0.0
        %2094 = vadd.xlane.f32.xlu0 %v2093
        %v2095 = vpop.xlane.xlu0 %2094
        %v2096 = vsub.f32 %v458, %v1906
        %v2097 = vsub.f32 %v463, %v1909
        %v2098 = vsub.f32 %v468, %v1912
        %v2099 = vsub.f32 %v473, %v1915
        %v2100 = vsub.f32 %v478, %v1918
        %v2101 = vsub.f32 %v483, %v1921
        %v2102 = vsub.f32 %v488, %v1924
        %v2103 = vsub.f32 %v493, %v1927
        %v2104 = vsub.f32 %v498, %v1930
        %v2105 = vsub.f32 %v503, %v1933
        %v2106 = vsub.f32 %v508, %v1936
        %v2107 = vsub.f32 %v513, %v1939
        %v2108 = vsub.f32 %v518, %v1942
        %v2109 = vsub.f32 %v523, %v1945
        %v2110 = vsub.f32 %v528, %v1948
        %v2111 = vsub.f32 %v533, %v1951
        %v2112 = vsub.f32 %v538, %v1954
        %v2113 = vsub.f32 %v543, %v1957
        %v2114 = vsub.f32 %v548, %v1960
        %v2115 = vsub.f32 %v553, %v1963
        %v2116 = vsub.f32 %v558, %v1966
        %v2117 = vsub.f32 %v563, %v1969
        %v2118 = vsub.f32 %v568, %v1972
        %v2119 = vsub.f32 %v573, %v1975
        %v2120 = vsub.f32 %v578, %v1978
        %v2121 = vsub.f32 %v583, %v1981
        %v2122 = vsub.f32 %v588, %v1984
        %v2123 = vsub.f32 %v593, %v1987
        %v2124 = vsub.f32 %v598, %v1990
        %v2125 = vsub.f32 %v603, %v1993
        %v2126 = vsub.f32 %v608, %v1996
        %v2127 = vsub.f32 %v613, %v1999
        %v2128 = vsub.f32 %v618, %v2002
        %v2129 = vsub.f32 %v623, %v2005
        %v2130 = vsub.f32 %v628, %v2008
        %v2131 = vsub.f32 %v633, %v2011
        %v2132 = vsub.f32 %v638, %v2014
        %v2133 = vsub.f32 %v643, %v2017
        %v2134 = vsub.f32 %v648, %v2020
        %v2135 = vsub.f32 %v653, %v2023
        %v2136 = vsub.f32 %v658, %v2026
        %v2137 = vsub.f32 %v663, %v2029
        %v2138 = vsub.f32 %v668, %v2032
        %v2139 = vsub.f32 %v673, %v2035
        %v2140 = vsub.f32 %v678, %v2038
        %v2141 = vsub.f32 %v683, %v2041
        %v2142 = vsub.f32 %v688, %v2044
        %v2143 = vsub.f32 %v693, %v2047
        %v2144 = vsub.f32 %v698, %v2050
        %v2145 = vsub.f32 %v703, %v2053
        %v2146 = vsub.f32 %v708, %v2056
        %v2147 = vsub.f32 %v713, %v2059
        %v2148 = vsub.f32 %v718, %v2062
        %v2149 = vsub.f32 %v723, %v2065
        %v2150 = vsub.f32 %v728, %v2068
        %v2151 = vsub.f32 %v733, %v2071
        %v2152 = vsub.f32 %v738, %v2074
        %v2153 = vsub.f32 %v743, %v2077
        %v2154 = vsub.f32 %v748, %v2080
        %v2155 = vsub.f32 %v753, %v2083
        %v2156 = vsub.f32 %v758, %v2086
        %v2157 = vsub.f32 %v763, %v2089
        %v2158 = vsub.f32 %v768, %v2092
        %v2159 = vsub.f32 %v773, %v2095
        %v2160 = vmul.f32 %v2096, 1.442695
        %v2161 = vpow.pop %v2160
        %v2162 = vmul.f32 %v2097, 1.442695
        %v2163 = vpow.pop %v2162
        %v2164 = vmul.f32 %v2098, 1.442695
        %v2165 = vpow.pop %v2164
        %v2166 = vmul.f32 %v2099, 1.442695
        %v2167 = vpow.pop %v2166
        %v2168 = vmul.f32 %v2100, 1.442695
        %v2169 = vpow.pop %v2168
        %v2170 = vmul.f32 %v2101, 1.442695
        %v2171 = vpow.pop %v2170
        %v2172 = vmul.f32 %v2102, 1.442695
        %v2173 = vpow.pop %v2172
        %v2174 = vmul.f32 %v2103, 1.442695
        %v2175 = vpow.pop %v2174
        %v2176 = vmul.f32 %v2104, 1.442695
        %v2177 = vpow.pop %v2176
        %v2178 = vmul.f32 %v2105, 1.442695
        %v2179 = vpow.pop %v2178
        %v2180 = vmul.f32 %v2106, 1.442695
        %v2181 = vpow.pop %v2180
        %v2182 = vmul.f32 %v2107, 1.442695
        %v2183 = vpow.pop %v2182
        %v2184 = vmul.f32 %v2108, 1.442695
        %v2185 = vpow.pop %v2184
        %v2186 = vmul.f32 %v2109, 1.442695
        %v2187 = vpow.pop %v2186
        %v2188 = vmul.f32 %v2110, 1.442695
        %v2189 = vpow.pop %v2188
        %v2190 = vmul.f32 %v2111, 1.442695
        %v2191 = vpow.pop %v2190
        %v2192 = vmul.f32 %v2112, 1.442695
        %v2193 = vpow.pop %v2192
        %v2194 = vmul.f32 %v2113, 1.442695
        %v2195 = vpow.pop %v2194
        %v2196 = vmul.f32 %v2114, 1.442695
        %v2197 = vpow.pop %v2196
        %v2198 = vmul.f32 %v2115, 1.442695
        %v2199 = vpow.pop %v2198
        %v2200 = vmul.f32 %v2116, 1.442695
        %v2201 = vpow.pop %v2200
        %v2202 = vmul.f32 %v2117, 1.442695
        %v2203 = vpow.pop %v2202
        %v2204 = vmul.f32 %v2118, 1.442695
        %v2205 = vpow.pop %v2204
        %v2206 = vmul.f32 %v2119, 1.442695
        %v2207 = vpow.pop %v2206
        %v2208 = vmul.f32 %v2120, 1.442695
        %v2209 = vpow.pop %v2208
        %v2210 = vmul.f32 %v2121, 1.442695
        %v2211 = vpow.pop %v2210
        %v2212 = vmul.f32 %v2122, 1.442695
        %v2213 = vpow.pop %v2212
        %v2214 = vmul.f32 %v2123, 1.442695
        %v2215 = vpow.pop %v2214
        %v2216 = vmul.f32 %v2124, 1.442695
        %v2217 = vpow.pop %v2216
        %v2218 = vmul.f32 %v2125, 1.442695
        %v2219 = vpow.pop %v2218
        %v2220 = vmul.f32 %v2126, 1.442695
        %v2221 = vpow.pop %v2220
        %v2222 = vmul.f32 %v2127, 1.442695
        %v2223 = vpow.pop %v2222
        %v2224 = vmul.f32 %v2128, 1.442695
        %v2225 = vpow.pop %v2224
        %v2226 = vmul.f32 %v2129, 1.442695
        %v2227 = vpow.pop %v2226
        %v2228 = vmul.f32 %v2130, 1.442695
        %v2229 = vpow.pop %v2228
        %v2230 = vmul.f32 %v2131, 1.442695
        %v2231 = vpow.pop %v2230
        %v2232 = vmul.f32 %v2132, 1.442695
        %v2233 = vpow.pop %v2232
        %v2234 = vmul.f32 %v2133, 1.442695
        %v2235 = vpow.pop %v2234
        %v2236 = vmul.f32 %v2134, 1.442695
        %v2237 = vpow.pop %v2236
        %v2238 = vmul.f32 %v2135, 1.442695
        %v2239 = vpow.pop %v2238
        %v2240 = vmul.f32 %v2136, 1.442695
        %v2241 = vpow.pop %v2240
        %v2242 = vmul.f32 %v2137, 1.442695
        %v2243 = vpow.pop %v2242
        %v2244 = vmul.f32 %v2138, 1.442695
        %v2245 = vpow.pop %v2244
        %v2246 = vmul.f32 %v2139, 1.442695
        %v2247 = vpow.pop %v2246
        %v2248 = vmul.f32 %v2140, 1.442695
        %v2249 = vpow.pop %v2248
        %v2250 = vmul.f32 %v2141, 1.442695
        %v2251 = vpow.pop %v2250
        %v2252 = vmul.f32 %v2142, 1.442695
        %v2253 = vpow.pop %v2252
        %v2254 = vmul.f32 %v2143, 1.442695
        %v2255 = vpow.pop %v2254
        %v2256 = vmul.f32 %v2144, 1.442695
        %v2257 = vpow.pop %v2256
        %v2258 = vmul.f32 %v2145, 1.442695
        %v2259 = vpow.pop %v2258
        %v2260 = vmul.f32 %v2146, 1.442695
        %v2261 = vpow.pop %v2260
        %v2262 = vmul.f32 %v2147, 1.442695
        %v2263 = vpow.pop %v2262
        %v2264 = vmul.f32 %v2148, 1.442695
        %v2265 = vpow.pop %v2264
        %v2266 = vmul.f32 %v2149, 1.442695
        %v2267 = vpow.pop %v2266
        %v2268 = vmul.f32 %v2150, 1.442695
        %v2269 = vpow.pop %v2268
        %v2270 = vmul.f32 %v2151, 1.442695
        %v2271 = vpow.pop %v2270
        %v2272 = vmul.f32 %v2152, 1.442695
        %v2273 = vpow.pop %v2272
        %v2274 = vmul.f32 %v2153, 1.442695
        %v2275 = vpow.pop %v2274
        %v2276 = vmul.f32 %v2154, 1.442695
        %v2277 = vpow.pop %v2276
        %v2278 = vmul.f32 %v2155, 1.442695
        %v2279 = vpow.pop %v2278
        %v2280 = vmul.f32 %v2156, 1.442695
        %v2281 = vpow.pop %v2280
        %v2282 = vmul.f32 %v2157, 1.442695
        %v2283 = vpow.pop %v2282
        %v2284 = vmul.f32 %v2158, 1.442695
        %v2285 = vpow.pop %v2284
        %v2286 = vmul.f32 %v2159, 1.442695
        %v2287 = vpow.pop %v2286
        %v2288 = vsel %vm776, %v2161, 0.0
        %2289 = vadd.xlane.f32.xlu0 %v2288
        %v2290 = vpop.xlane.xlu0 %2289
        %v2291 = vsel %vm776, %v2163, 0.0
        %2292 = vadd.xlane.f32.xlu0 %v2291
        %v2293 = vpop.xlane.xlu0 %2292
        %v2294 = vsel %vm776, %v2165, 0.0
        %2295 = vadd.xlane.f32.xlu0 %v2294
        %v2296 = vpop.xlane.xlu0 %2295
        %v2297 = vsel %vm776, %v2167, 0.0
        %2298 = vadd.xlane.f32.xlu0 %v2297
        %v2299 = vpop.xlane.xlu0 %2298
        %v2300 = vsel %vm776, %v2169, 0.0
        %2301 = vadd.xlane.f32.xlu0 %v2300
        %v2302 = vpop.xlane.xlu0 %2301
        %v2303 = vsel %vm776, %v2171, 0.0
        %2304 = vadd.xlane.f32.xlu0 %v2303
        %v2305 = vpop.xlane.xlu0 %2304
        %v2306 = vsel %vm776, %v2173, 0.0
        %2307 = vadd.xlane.f32.xlu0 %v2306
        %v2308 = vpop.xlane.xlu0 %2307
        %v2309 = vsel %vm776, %v2175, 0.0
        %2310 = vadd.xlane.f32.xlu0 %v2309
        %v2311 = vpop.xlane.xlu0 %2310
        %v2312 = vsel %vm776, %v2177, 0.0
        %2313 = vadd.xlane.f32.xlu0 %v2312
        %v2314 = vpop.xlane.xlu0 %2313
        %v2315 = vsel %vm776, %v2179, 0.0
        %2316 = vadd.xlane.f32.xlu0 %v2315
        %v2317 = vpop.xlane.xlu0 %2316
        %v2318 = vsel %vm776, %v2181, 0.0
        %2319 = vadd.xlane.f32.xlu0 %v2318
        %v2320 = vpop.xlane.xlu0 %2319
        %v2321 = vsel %vm776, %v2183, 0.0
        %2322 = vadd.xlane.f32.xlu0 %v2321
        %v2323 = vpop.xlane.xlu0 %2322
        %v2324 = vsel %vm776, %v2185, 0.0
        %2325 = vadd.xlane.f32.xlu0 %v2324
        %v2326 = vpop.xlane.xlu0 %2325
        %v2327 = vsel %vm776, %v2187, 0.0
        %2328 = vadd.xlane.f32.xlu0 %v2327
        %v2329 = vpop.xlane.xlu0 %2328
        %v2330 = vsel %vm776, %v2189, 0.0
        %2331 = vadd.xlane.f32.xlu0 %v2330
        %v2332 = vpop.xlane.xlu0 %2331
        %v2333 = vsel %vm776, %v2191, 0.0
        %2334 = vadd.xlane.f32.xlu0 %v2333
        %v2335 = vpop.xlane.xlu0 %2334
        %v2336 = vsel %vm776, %v2193, 0.0
        %2337 = vadd.xlane.f32.xlu0 %v2336
        %v2338 = vpop.xlane.xlu0 %2337
        %v2339 = vsel %vm776, %v2195, 0.0
        %2340 = vadd.xlane.f32.xlu0 %v2339
        %v2341 = vpop.xlane.xlu0 %2340
        %v2342 = vsel %vm776, %v2197, 0.0
        %2343 = vadd.xlane.f32.xlu0 %v2342
        %v2344 = vpop.xlane.xlu0 %2343
        %v2345 = vsel %vm776, %v2199, 0.0
        %2346 = vadd.xlane.f32.xlu0 %v2345
        %v2347 = vpop.xlane.xlu0 %2346
        %v2348 = vsel %vm776, %v2201, 0.0
        %2349 = vadd.xlane.f32.xlu0 %v2348
        %v2350 = vpop.xlane.xlu0 %2349
        %v2351 = vsel %vm776, %v2203, 0.0
        %2352 = vadd.xlane.f32.xlu0 %v2351
        %v2353 = vpop.xlane.xlu0 %2352
        %v2354 = vsel %vm776, %v2205, 0.0
        %2355 = vadd.xlane.f32.xlu0 %v2354
        %v2356 = vpop.xlane.xlu0 %2355
        %v2357 = vsel %vm776, %v2207, 0.0
        %2358 = vadd.xlane.f32.xlu0 %v2357
        %v2359 = vpop.xlane.xlu0 %2358
        %v2360 = vsel %vm776, %v2209, 0.0
        %2361 = vadd.xlane.f32.xlu0 %v2360
        %v2362 = vpop.xlane.xlu0 %2361
        %v2363 = vsel %vm776, %v2211, 0.0
        %2364 = vadd.xlane.f32.xlu0 %v2363
        %v2365 = vpop.xlane.xlu0 %2364
        %v2366 = vsel %vm776, %v2213, 0.0
        %2367 = vadd.xlane.f32.xlu0 %v2366
        %v2368 = vpop.xlane.xlu0 %2367
        %v2369 = vsel %vm776, %v2215, 0.0
        %2370 = vadd.xlane.f32.xlu0 %v2369
        %v2371 = vpop.xlane.xlu0 %2370
        %v2372 = vsel %vm776, %v2217, 0.0
        %2373 = vadd.xlane.f32.xlu0 %v2372
        %v2374 = vpop.xlane.xlu0 %2373
        %v2375 = vsel %vm776, %v2219, 0.0
        %2376 = vadd.xlane.f32.xlu0 %v2375
        %v2377 = vpop.xlane.xlu0 %2376
        %v2378 = vsel %vm776, %v2221, 0.0
        %2379 = vadd.xlane.f32.xlu0 %v2378
        %v2380 = vpop.xlane.xlu0 %2379
        %v2381 = vsel %vm776, %v2223, 0.0
        %2382 = vadd.xlane.f32.xlu0 %v2381
        %v2383 = vpop.xlane.xlu0 %2382
        %v2384 = vsel %vm776, %v2225, 0.0
        %2385 = vadd.xlane.f32.xlu0 %v2384
        %v2386 = vpop.xlane.xlu0 %2385
        %v2387 = vsel %vm776, %v2227, 0.0
        %2388 = vadd.xlane.f32.xlu0 %v2387
        %v2389 = vpop.xlane.xlu0 %2388
        %v2390 = vsel %vm776, %v2229, 0.0
        %2391 = vadd.xlane.f32.xlu0 %v2390
        %v2392 = vpop.xlane.xlu0 %2391
        %v2393 = vsel %vm776, %v2231, 0.0
        %2394 = vadd.xlane.f32.xlu0 %v2393
        %v2395 = vpop.xlane.xlu0 %2394
        %v2396 = vsel %vm776, %v2233, 0.0
        %2397 = vadd.xlane.f32.xlu0 %v2396
        %v2398 = vpop.xlane.xlu0 %2397
        %v2399 = vsel %vm776, %v2235, 0.0
        %2400 = vadd.xlane.f32.xlu0 %v2399
        %v2401 = vpop.xlane.xlu0 %2400
        %v2402 = vsel %vm776, %v2237, 0.0
        %2403 = vadd.xlane.f32.xlu0 %v2402
        %v2404 = vpop.xlane.xlu0 %2403
        %v2405 = vsel %vm776, %v2239, 0.0
        %2406 = vadd.xlane.f32.xlu0 %v2405
        %v2407 = vpop.xlane.xlu0 %2406
        %v2408 = vsel %vm776, %v2241, 0.0
        %2409 = vadd.xlane.f32.xlu0 %v2408
        %v2410 = vpop.xlane.xlu0 %2409
        %v2411 = vsel %vm776, %v2243, 0.0
        %2412 = vadd.xlane.f32.xlu0 %v2411
        %v2413 = vpop.xlane.xlu0 %2412
        %v2414 = vsel %vm776, %v2245, 0.0
        %2415 = vadd.xlane.f32.xlu0 %v2414
        %v2416 = vpop.xlane.xlu0 %2415
        %v2417 = vsel %vm776, %v2247, 0.0
        %2418 = vadd.xlane.f32.xlu0 %v2417
        %v2419 = vpop.xlane.xlu0 %2418
        %v2420 = vsel %vm776, %v2249, 0.0
        %2421 = vadd.xlane.f32.xlu0 %v2420
        %v2422 = vpop.xlane.xlu0 %2421
        %v2423 = vsel %vm776, %v2251, 0.0
        %2424 = vadd.xlane.f32.xlu0 %v2423
        %v2425 = vpop.xlane.xlu0 %2424
        %v2426 = vsel %vm776, %v2253, 0.0
        %2427 = vadd.xlane.f32.xlu0 %v2426
        %v2428 = vpop.xlane.xlu0 %2427
        %v2429 = vsel %vm776, %v2255, 0.0
        %2430 = vadd.xlane.f32.xlu0 %v2429
        %v2431 = vpop.xlane.xlu0 %2430
        %v2432 = vsel %vm776, %v2257, 0.0
        %2433 = vadd.xlane.f32.xlu0 %v2432
        %v2434 = vpop.xlane.xlu0 %2433
        %v2435 = vsel %vm776, %v2259, 0.0
        %2436 = vadd.xlane.f32.xlu0 %v2435
        %v2437 = vpop.xlane.xlu0 %2436
        %v2438 = vsel %vm776, %v2261, 0.0
        %2439 = vadd.xlane.f32.xlu0 %v2438
        %v2440 = vpop.xlane.xlu0 %2439
        %v2441 = vsel %vm776, %v2263, 0.0
        %2442 = vadd.xlane.f32.xlu0 %v2441
        %v2443 = vpop.xlane.xlu0 %2442
        %v2444 = vsel %vm776, %v2265, 0.0
        %2445 = vadd.xlane.f32.xlu0 %v2444
        %v2446 = vpop.xlane.xlu0 %2445
        %v2447 = vsel %vm776, %v2267, 0.0
        %2448 = vadd.xlane.f32.xlu0 %v2447
        %v2449 = vpop.xlane.xlu0 %2448
        %v2450 = vsel %vm776, %v2269, 0.0
        %2451 = vadd.xlane.f32.xlu0 %v2450
        %v2452 = vpop.xlane.xlu0 %2451
        %v2453 = vsel %vm776, %v2271, 0.0
        %2454 = vadd.xlane.f32.xlu0 %v2453
        %v2455 = vpop.xlane.xlu0 %2454
        %v2456 = vsel %vm776, %v2273, 0.0
        %2457 = vadd.xlane.f32.xlu0 %v2456
        %v2458 = vpop.xlane.xlu0 %2457
        %v2459 = vsel %vm776, %v2275, 0.0
        %2460 = vadd.xlane.f32.xlu0 %v2459
        %v2461 = vpop.xlane.xlu0 %2460
        %v2462 = vsel %vm776, %v2277, 0.0
        %2463 = vadd.xlane.f32.xlu0 %v2462
        %v2464 = vpop.xlane.xlu0 %2463
        %v2465 = vsel %vm776, %v2279, 0.0
        %2466 = vadd.xlane.f32.xlu0 %v2465
        %v2467 = vpop.xlane.xlu0 %2466
        %v2468 = vsel %vm776, %v2281, 0.0
        %2469 = vadd.xlane.f32.xlu0 %v2468
        %v2470 = vpop.xlane.xlu0 %2469
        %v2471 = vsel %vm776, %v2283, 0.0
        %2472 = vadd.xlane.f32.xlu0 %v2471
        %v2473 = vpop.xlane.xlu0 %2472
        %v2474 = vsel %vm776, %v2285, 0.0
        %2475 = vadd.xlane.f32.xlu0 %v2474
        %v2476 = vpop.xlane.xlu0 %2475
        %v2477 = vsel %vm776, %v2287, 0.0
        %2478 = vadd.xlane.f32.xlu0 %v2477
        %v2479 = vpop.xlane.xlu0 %2478
        %v2480 = vsel %vm1450, %v2290, 0.0
        %v2481 = vsel %vm1451, %v2293, 0.0
        %v2482 = vsel %vm1452, %v2296, 0.0
        %v2483 = vsel %vm1453, %v2299, 0.0
        %v2484 = vsel %vm1454, %v2302, 0.0
        %v2485 = vsel %vm1455, %v2305, 0.0
        %v2486 = vsel %vm1456, %v2308, 0.0
        %v2487 = vsel %vm1457, %v2311, 0.0
        %v2488 = vsel %vm1458, %v2314, 0.0
        %v2489 = vsel %vm1459, %v2317, 0.0
        %v2490 = vsel %vm1460, %v2320, 0.0
        %v2491 = vsel %vm1461, %v2323, 0.0
        %v2492 = vsel %vm1462, %v2326, 0.0
        %v2493 = vsel %vm1463, %v2329, 0.0
        %v2494 = vsel %vm1464, %v2332, 0.0
        %v2495 = vsel %vm1465, %v2335, 0.0
        %v2496 = vsel %vm1466, %v2338, 0.0
        %v2497 = vsel %vm1467, %v2341, 0.0
        %v2498 = vsel %vm1468, %v2344, 0.0
        %v2499 = vsel %vm1469, %v2347, 0.0
        %v2500 = vsel %vm1470, %v2350, 0.0
        %v2501 = vsel %vm1471, %v2353, 0.0
        %v2502 = vsel %vm1472, %v2356, 0.0
        %v2503 = vsel %vm1473, %v2359, 0.0
        %v2504 = vsel %vm1474, %v2362, 0.0
        %v2505 = vsel %vm1475, %v2365, 0.0
        %v2506 = vsel %vm1476, %v2368, 0.0
        %v2507 = vsel %vm1477, %v2371, 0.0
        %v2508 = vsel %vm1478, %v2374, 0.0
        %v2509 = vsel %vm1479, %v2377, 0.0
        %v2510 = vsel %vm1480, %v2380, 0.0
        %v2511 = vsel %vm1481, %v2383, 0.0
        %v2512 = vsel %vm1482, %v2386, 0.0
        %v2513 = vsel %vm1483, %v2389, 0.0
        %v2514 = vsel %vm1484, %v2392, 0.0
        %v2515 = vsel %vm1485, %v2395, 0.0
        %v2516 = vsel %vm1486, %v2398, 0.0
        %v2517 = vsel %vm1487, %v2401, 0.0
        %v2518 = vsel %vm1488, %v2404, 0.0
        %v2519 = vsel %vm1489, %v2407, 0.0
        %v2520 = vsel %vm1490, %v2410, 0.0
        %v2521 = vsel %vm1491, %v2413, 0.0
        %v2522 = vsel %vm1492, %v2416, 0.0
        %v2523 = vsel %vm1493, %v2419, 0.0
        %v2524 = vsel %vm1494, %v2422, 0.0
        %v2525 = vsel %vm1495, %v2425, 0.0
        %v2526 = vsel %vm1496, %v2428, 0.0
        %v2527 = vsel %vm1497, %v2431, 0.0
        %v2528 = vsel %vm1498, %v2434, 0.0
        %v2529 = vsel %vm1499, %v2437, 0.0
        %v2530 = vsel %vm1500, %v2440, 0.0
        %v2531 = vsel %vm1501, %v2443, 0.0
        %v2532 = vsel %vm1502, %v2446, 0.0
        %v2533 = vsel %vm1503, %v2449, 0.0
        %v2534 = vsel %vm1504, %v2452, 0.0
        %v2535 = vsel %vm1505, %v2455, 0.0
        %v2536 = vsel %vm1506, %v2458, 0.0
        %v2537 = vsel %vm1507, %v2461, 0.0
        %v2538 = vsel %vm1508, %v2464, 0.0
        %v2539 = vsel %vm1509, %v2467, 0.0
        %v2540 = vsel %vm1510, %v2470, 0.0
        %v2541 = vsel %vm1511, %v2473, 0.0
        %v2542 = vsel %vm1512, %v2476, 0.0
        %v2543 = vsel %vm1513, %v2479, 0.0
        %v2544 = vsel %vm1706, %v2480, 0.0
        %v2545 = vsel %vm1706, %v2481, 0.0
        %v2546 = vadd.f32 %v2544, %v2545
        %v2547 = vsel %vm1706, %v2482, 0.0
        %v2548 = vadd.f32 %v2546, %v2547
        %v2549 = vsel %vm1706, %v2483, 0.0
        %v2550 = vadd.f32 %v2548, %v2549
        %v2551 = vsel %vm1706, %v2484, 0.0
        %v2552 = vadd.f32 %v2550, %v2551
        %v2553 = vsel %vm1706, %v2485, 0.0
        %v2554 = vadd.f32 %v2552, %v2553
        %v2555 = vsel %vm1706, %v2486, 0.0
        %v2556 = vadd.f32 %v2554, %v2555
        %v2557 = vsel %vm1706, %v2487, 0.0
        %v2558 = vadd.f32 %v2556, %v2557
        %v2559 = vsel %vm1706, %v2488, 0.0
        %v2560 = vadd.f32 %v2558, %v2559
        %v2561 = vsel %vm1706, %v2489, 0.0
        %v2562 = vadd.f32 %v2560, %v2561
        %v2563 = vsel %vm1706, %v2490, 0.0
        %v2564 = vadd.f32 %v2562, %v2563
        %v2565 = vsel %vm1706, %v2491, 0.0
        %v2566 = vadd.f32 %v2564, %v2565
        %v2567 = vsel %vm1706, %v2492, 0.0
        %v2568 = vadd.f32 %v2566, %v2567
        %v2569 = vsel %vm1706, %v2493, 0.0
        %v2570 = vadd.f32 %v2568, %v2569
        %v2571 = vsel %vm1706, %v2494, 0.0
        %v2572 = vadd.f32 %v2570, %v2571
        %v2573 = vsel %vm1706, %v2495, 0.0
        %v2574 = vadd.f32 %v2572, %v2573
        %v2575 = vsel %vm1706, %v2496, 0.0
        %v2576 = vadd.f32 %v2574, %v2575
        %v2577 = vsel %vm1706, %v2497, 0.0
        %v2578 = vadd.f32 %v2576, %v2577
        %v2579 = vsel %vm1706, %v2498, 0.0
        %v2580 = vadd.f32 %v2578, %v2579
        %v2581 = vsel %vm1706, %v2499, 0.0
        %v2582 = vadd.f32 %v2580, %v2581
        %v2583 = vsel %vm1706, %v2500, 0.0
        %v2584 = vadd.f32 %v2582, %v2583
        %v2585 = vsel %vm1706, %v2501, 0.0
        %v2586 = vadd.f32 %v2584, %v2585
        %v2587 = vsel %vm1706, %v2502, 0.0
        %v2588 = vadd.f32 %v2586, %v2587
        %v2589 = vsel %vm1706, %v2503, 0.0
        %v2590 = vadd.f32 %v2588, %v2589
        %v2591 = vsel %vm1706, %v2504, 0.0
        %v2592 = vadd.f32 %v2590, %v2591
        %v2593 = vsel %vm1706, %v2505, 0.0
        %v2594 = vadd.f32 %v2592, %v2593
        %v2595 = vsel %vm1706, %v2506, 0.0
        %v2596 = vadd.f32 %v2594, %v2595
        %v2597 = vsel %vm1706, %v2507, 0.0
        %v2598 = vadd.f32 %v2596, %v2597
        %v2599 = vsel %vm1706, %v2508, 0.0
        %v2600 = vadd.f32 %v2598, %v2599
        %v2601 = vsel %vm1706, %v2509, 0.0
        %v2602 = vadd.f32 %v2600, %v2601
        %v2603 = vsel %vm1706, %v2510, 0.0
        %v2604 = vadd.f32 %v2602, %v2603
        %v2605 = vsel %vm1706, %v2511, 0.0
        %v2606 = vadd.f32 %v2604, %v2605
        %v2607 = vsel %vm1706, %v2512, 0.0
        %v2608 = vadd.f32 %v2606, %v2607
        %v2609 = vsel %vm1706, %v2513, 0.0
        %v2610 = vadd.f32 %v2608, %v2609
        %v2611 = vsel %vm1706, %v2514, 0.0
        %v2612 = vadd.f32 %v2610, %v2611
        %v2613 = vsel %vm1706, %v2515, 0.0
        %v2614 = vadd.f32 %v2612, %v2613
        %v2615 = vsel %vm1706, %v2516, 0.0
        %v2616 = vadd.f32 %v2614, %v2615
        %v2617 = vsel %vm1706, %v2517, 0.0
        %v2618 = vadd.f32 %v2616, %v2617
        %v2619 = vsel %vm1706, %v2518, 0.0
        %v2620 = vadd.f32 %v2618, %v2619
        %v2621 = vsel %vm1706, %v2519, 0.0
        %v2622 = vadd.f32 %v2620, %v2621
        %v2623 = vsel %vm1706, %v2520, 0.0
        %v2624 = vadd.f32 %v2622, %v2623
        %v2625 = vsel %vm1706, %v2521, 0.0
        %v2626 = vadd.f32 %v2624, %v2625
        %v2627 = vsel %vm1706, %v2522, 0.0
        %v2628 = vadd.f32 %v2626, %v2627
        %v2629 = vsel %vm1706, %v2523, 0.0
        %v2630 = vadd.f32 %v2628, %v2629
        %v2631 = vsel %vm1706, %v2524, 0.0
        %v2632 = vadd.f32 %v2630, %v2631
        %v2633 = vsel %vm1706, %v2525, 0.0
        %v2634 = vadd.f32 %v2632, %v2633
        %v2635 = vsel %vm1706, %v2526, 0.0
        %v2636 = vadd.f32 %v2634, %v2635
        %v2637 = vsel %vm1706, %v2527, 0.0
        %v2638 = vadd.f32 %v2636, %v2637
        %v2639 = vsel %vm1706, %v2528, 0.0
        %v2640 = vadd.f32 %v2638, %v2639
        %v2641 = vsel %vm1706, %v2529, 0.0
        %v2642 = vadd.f32 %v2640, %v2641
        %v2643 = vsel %vm1706, %v2530, 0.0
        %v2644 = vadd.f32 %v2642, %v2643
        %v2645 = vsel %vm1706, %v2531, 0.0
        %v2646 = vadd.f32 %v2644, %v2645
        %v2647 = vsel %vm1706, %v2532, 0.0
        %v2648 = vadd.f32 %v2646, %v2647
        %v2649 = vsel %vm1706, %v2533, 0.0
        %v2650 = vadd.f32 %v2648, %v2649
        %v2651 = vsel %vm1706, %v2534, 0.0
        %v2652 = vadd.f32 %v2650, %v2651
        %v2653 = vsel %vm1706, %v2535, 0.0
        %v2654 = vadd.f32 %v2652, %v2653
        %v2655 = vsel %vm1706, %v2536, 0.0
        %v2656 = vadd.f32 %v2654, %v2655
        %v2657 = vsel %vm1706, %v2537, 0.0
        %v2658 = vadd.f32 %v2656, %v2657
        %v2659 = vsel %vm1706, %v2538, 0.0
        %v2660 = vadd.f32 %v2658, %v2659
        %v2661 = vsel %vm1706, %v2539, 0.0
        %v2662 = vadd.f32 %v2660, %v2661
        %v2663 = vsel %vm1706, %v2540, 0.0
        %v2664 = vadd.f32 %v2662, %v2663
        %v2665 = vsel %vm1706, %v2541, 0.0
        %v2666 = vadd.f32 %v2664, %v2665
        %v2667 = vsel %vm1706, %v2542, 0.0
        %v2668 = vadd.f32 %v2666, %v2667
        %v2669 = vsel %vm1706, %v2543, 0.0
        %v2670 = vadd.f32 %v2668, %v2669
        %v2671 = vrot.slane %v2670, 4
        %v2672 = vadd.f32 %v2670, %v2671
        %v2673 = vrot.slane %v2672, 2
        %v2674 = vadd.f32 %v2672, %v2673
        %v2675 = vrot.slane %v2674, 1
        %v2676 = vadd.f32 %v2674, %v2675
        %v2677 = vlog2.pop %v2676
        %v2678 = vmul.f32 %v2677, 0.6931472
        %v2679 = vadd.f32 %v2678, %v1839
        %s2680 = scalar_lea.vmem %s293, %s31 [#allocation10]
        %vm2681 = vcmask 253952
        %2682 = vst.msk [vmem:[%s2680] sm:$0x1] %vm2681, %v2679
        %v2683 = vld [vmem:[%s301] sm:$0xff]
        %v2684 = vld [vmem:[%s301 + $0x8] sm:$0xff]
        %v2685 = vld [vmem:[%s301 + $0x10] sm:$0xff]
        %v2686 = vld [vmem:[%s301 + $0x18] sm:$0xff]
        %2687 = vmatprep.subr.mxu0 0.0
        %2688 = vmatpush1.xpose.msra.mxu0 %v2683
        %2689 = vmatprep.subr.mxu0 0.0
        %2690 = vmatpush1.xpose.msra.mxu0 %v2684
        %2691 = vmatprep.subr.mxu0 0.0
        %2692 = vmatpush1.xpose.msra.mxu0 %v2685
        %2693 = vmatprep.subr.mxu0 0.0
        %2694 = vmatpush1.xpose.msra.mxu0 %v2686
        %2695 = vmatprep.subr.mxu0 0.0
        %2696 = vmatpush1.xpose.msra.mxu0 0.0
        %2697 = vmatprep.subr.mxu0 0.0
        %2698 = vmatpush1.xpose.msra.mxu0 0.0
        %2699 = vmatprep.subr.mxu0 0.0
        %2700 = vmatpush1.xpose.msra.mxu0 0.0
        %2701 = vmatprep.subr.mxu0 0.0
        %2702 = vmatpush1.xpose.msra.mxu0 0.0
        %2703 = vmatprep.subr.mxu0 0.0
        %2704 = vmatpush1.xpose.msra.mxu0 0.0
        %2705 = vmatprep.subr.mxu0 0.0
        %2706 = vmatpush1.xpose.msra.mxu0 0.0
        %2707 = vmatprep.subr.mxu0 0.0
        %2708 = vmatpush1.xpose.msra.mxu0 0.0
        %2709 = vmatprep.subr.mxu0 0.0
        %2710 = vmatpush1.xpose.msra.mxu0 0.0
        %2711 = vmatprep.subr.mxu0 0.0
        %2712 = vmatpush1.xpose.msra.mxu0 0.0
        %2713 = vmatprep.subr.mxu0 0.0
        %2714 = vmatpush1.xpose.msra.mxu0 0.0
        %2715 = vmatprep.subr.mxu0 0.0
        %2716 = vmatpush1.xpose.msra.mxu0 0.0
        %2717 = vmatprep.subr.mxu0 0.0
        %2718 = vmatpush1.xpose.msra.mxu0 0.0
        %2719 = vmatprep.subr.mxu0 0.0
        %2720 = vmatpush1.xpose.msra.mxu0 0.0
        %2721 = vmatprep.subr.mxu0 0.0
        %2722 = vmatpush1.xpose.msra.mxu0 0.0
        %2723 = vmatprep.subr.mxu0 0.0
        %2724 = vmatpush1.xpose.msra.mxu0 0.0
        %2725 = vmatprep.subr.mxu0 0.0
        %2726 = vmatpush1.xpose.msra.mxu0 0.0
        %2727 = vmatprep.subr.mxu0 0.0
        %2728 = vmatpush1.xpose.msra.mxu0 0.0
        %2729 = vmatprep.subr.mxu0 0.0
        %2730 = vmatpush1.xpose.msra.mxu0 0.0
        %2731 = vmatprep.subr.mxu0 0.0
        %2732 = vmatpush1.xpose.msra.mxu0 0.0
        %2733 = vmatprep.subr.mxu0 0.0
        %2734 = vmatpush1.xpose.msra.mxu0 0.0
        %2735 = vmatprep.subr.mxu0 0.0
        %2736 = vmatpush1.xpose.msra.mxu0 0.0
        %2737 = vmatprep.subr.mxu0 0.0
        %2738 = vmatpush1.xpose.msra.mxu0 0.0
        %2739 = vmatprep.subr.mxu0 0.0
        %2740 = vmatpush1.xpose.msra.mxu0 0.0
        %2741 = vmatprep.subr.mxu0 0.0
        %2742 = vmatpush1.xpose.msra.mxu0 0.0
        %2743 = vmatprep.subr.mxu0 0.0
        %2744 = vmatpush1.xpose.msra.mxu0 0.0
        %2745 = vmatprep.subr.mxu0 0.0
        %2746 = vmatpush1.xpose.msra.mxu0 0.0
        %2747 = vmatprep.subr.mxu0 0.0
        %2748 = vmatpush1.xpose.msra.mxu0 0.0
        %2749 = vmatprep.subr.mxu0 0.0
        %2750 = vmatpush1.xpose.msra.mxu0 0.0
        %2751 = vmatprep.mubr.f32.mxu0 0.0
        %2752 = vmatmul.mubr.f32.gmra.mrb[0].mxu0 %v311
        %v2753 = vpop.f32.mrb[0].mxu0
        %v2754 = vadd.f32 0.0, %v2753
        %v2755 = vpop.f32.mrb[0].mxu0
        %2756 = vmatprep.mubr.f32.mxu0 0.0
        %2757 = vmatmul.mubr.f32.gmra.mrb[0].mxu0 %v312
        %v2758 = vpop.f32.mrb[0].mxu0
        %v2759 = vadd.f32 0.0, %v2758
        %v2760 = vpop.f32.mrb[0].mxu0
        %2761 = vmatprep.mubr.f32.mxu0 0.0
        %2762 = vmatmul.mubr.f32.gmra.mrb[0].mxu0 %v313
        %v2763 = vpop.f32.mrb[0].mxu0
        %v2764 = vadd.f32 0.0, %v2763
        %v2765 = vpop.f32.mrb[0].mxu0
        %2766 = vmatprep.mubr.f32.mxu0 0.0
        %2767 = vmatmul.mubr.f32.gmra.mrb[0].mxu0 %v314
        %v2768 = vpop.f32.mrb[0].mxu0
        %v2769 = vadd.f32 0.0, %v2768
        %v2770 = vpop.f32.mrb[0].mxu0
        %2771 = vmatprep.mubr.f32.mxu0 0.0
        %2772 = vmatmul.mubr.f32.gmra.mrb[0].mxu0 %v315
        %v2773 = vpop.f32.mrb[0].mxu0
        %v2774 = vadd.f32 0.0, %v2773
        %v2775 = vpop.f32.mrb[0].mxu0
        %2776 = vmatprep.mubr.f32.mxu0 0.0
        %2777 = vmatmul.mubr.f32.gmra.mrb[0].mxu0 %v316
        %v2778 = vpop.f32.mrb[0].mxu0
        %v2779 = vadd.f32 0.0, %v2778
        %v2780 = vpop.f32.mrb[0].mxu0
        %2781 = vmatprep.mubr.f32.mxu0 0.0
        %2782 = vmatmul.mubr.f32.gmra.mrb[0].mxu0 %v317
        %v2783 = vpop.f32.mrb[0].mxu0
        %v2784 = vadd.f32 0.0, %v2783
        %v2785 = vpop.f32.mrb[0].mxu0
        %2786 = vmatprep.mubr.f32.mxu0 0.0
        %2787 = vmatmul.mubr.f32.gmra.mrb[0].mxu0 %v318
        %v2788 = vpop.f32.mrb[0].mxu0
        %v2789 = vadd.f32 0.0, %v2788
        %v2790 = vpop.f32.mrb[0].mxu0
        %2791 = vmatprep.mubr.f32.mxu0 0.0
        %2792 = vmatmul.mubr.f32.gmra.mrb[0].mxu0 %v319
        %v2793 = vpop.f32.mrb[0].mxu0
        %v2794 = vadd.f32 0.0, %v2793
        %v2795 = vpop.f32.mrb[0].mxu0
        %2796 = vmatprep.mubr.f32.mxu0 0.0
        %2797 = vmatmul.mubr.f32.gmra.mrb[0].mxu0 %v320
        %v2798 = vpop.f32.mrb[0].mxu0
        %v2799 = vadd.f32 0.0, %v2798
        %v2800 = vpop.f32.mrb[0].mxu0
        %2801 = vmatprep.mubr.f32.mxu0 0.0
        %2802 = vmatmul.mubr.f32.gmra.mrb[0].mxu0 %v321
        %v2803 = vpop.f32.mrb[0].mxu0
        %v2804 = vadd.f32 0.0, %v2803
        %v2805 = vpop.f32.mrb[0].mxu0
        %2806 = vmatprep.mubr.f32.mxu0 0.0
        %2807 = vmatmul.mubr.f32.gmra.mrb[0].mxu0 %v322
        %v2808 = vpop.f32.mrb[0].mxu0
        %v2809 = vadd.f32 0.0, %v2808
        %v2810 = vpop.f32.mrb[0].mxu0
        %2811 = vmatprep.mubr.f32.mxu0 0.0
        %2812 = vmatmul.mubr.f32.gmra.mrb[0].mxu0 %v323
        %v2813 = vpop.f32.mrb[0].mxu0
        %v2814 = vadd.f32 0.0, %v2813
        %v2815 = vpop.f32.mrb[0].mxu0
        %2816 = vmatprep.mubr.f32.mxu0 0.0
        %2817 = vmatmul.mubr.f32.gmra.mrb[0].mxu0 %v324
        %v2818 = vpop.f32.mrb[0].mxu0
        %v2819 = vadd.f32 0.0, %v2818
        %v2820 = vpop.f32.mrb[0].mxu0
        %2821 = vmatprep.mubr.f32.mxu0 0.0
        %2822 = vmatmul.mubr.f32.gmra.mrb[0].mxu0 %v325
        %v2823 = vpop.f32.mrb[0].mxu0
        %v2824 = vadd.f32 0.0, %v2823
        %v2825 = vpop.f32.mrb[0].mxu0
        %2826 = vmatprep.mubr.f32.mxu0 0.0
        %2827 = vmatmul.mubr.f32.gmra.mrb[0].mxu0 %v326
        %v2828 = vpop.f32.mrb[0].mxu0
        %v2829 = vadd.f32 0.0, %v2828
        %v2830 = vpop.f32.mrb[0].mxu0
        %2831 = vmatprep.mubr.f32.mxu0 0.0
        %2832 = vmatmul.mubr.f32.gmra.mrb[0].mxu0 %v327
        %v2833 = vpop.f32.mrb[0].mxu0
        %v2834 = vadd.f32 0.0, %v2833
        %v2835 = vpop.f32.mrb[0].mxu0
        %2836 = vmatprep.mubr.f32.mxu0 0.0
        %2837 = vmatmul.mubr.f32.gmra.mrb[0].mxu0 %v328
        %v2838 = vpop.f32.mrb[0].mxu0
        %v2839 = vadd.f32 0.0, %v2838
        %v2840 = vpop.f32.mrb[0].mxu0
        %2841 = vmatprep.mubr.f32.mxu0 0.0
        %2842 = vmatmul.mubr.f32.gmra.mrb[0].mxu0 %v329
        %v2843 = vpop.f32.mrb[0].mxu0
        %v2844 = vadd.f32 0.0, %v2843
        %v2845 = vpop.f32.mrb[0].mxu0
        %2846 = vmatprep.mubr.f32.mxu0 0.0
        %2847 = vmatmul.mubr.f32.gmra.mrb[0].mxu0 %v330
        %v2848 = vpop.f32.mrb[0].mxu0
        %v2849 = vadd.f32 0.0, %v2848
        %v2850 = vpop.f32.mrb[0].mxu0
        %2851 = vmatprep.mubr.f32.mxu0 0.0
        %2852 = vmatmul.mubr.f32.gmra.mrb[0].mxu0 %v331
        %v2853 = vpop.f32.mrb[0].mxu0
        %v2854 = vadd.f32 0.0, %v2853
        %v2855 = vpop.f32.mrb[0].mxu0
        %2856 = vmatprep.mubr.f32.mxu0 0.0
        %2857 = vmatmul.mubr.f32.gmra.mrb[0].mxu0 %v332
        %v2858 = vpop.f32.mrb[0].mxu0
        %v2859 = vadd.f32 0.0, %v2858
        %v2860 = vpop.f32.mrb[0].mxu0
        %2861 = vmatprep.mubr.f32.mxu0 0.0
        %2862 = vmatmul.mubr.f32.gmra.mrb[0].mxu0 %v333
        %v2863 = vpop.f32.mrb[0].mxu0
        %v2864 = vadd.f32 0.0, %v2863
        %v2865 = vpop.f32.mrb[0].mxu0
        %2866 = vmatprep.mubr.f32.mxu0 0.0
        %2867 = vmatmul.mubr.f32.gmra.mrb[0].mxu0 %v334
        %v2868 = vpop.f32.mrb[0].mxu0
        %v2869 = vadd.f32 0.0, %v2868
        %v2870 = vpop.f32.mrb[0].mxu0
        %2871 = vmatprep.mubr.f32.mxu0 0.0
        %2872 = vmatmul.mubr.f32.gmra.mrb[0].mxu0 %v335
        %v2873 = vpop.f32.mrb[0].mxu0
        %v2874 = vadd.f32 0.0, %v2873
        %v2875 = vpop.f32.mrb[0].mxu0
        %2876 = vmatprep.mubr.f32.mxu0 0.0
        %2877 = vmatmul.mubr.f32.gmra.mrb[0].mxu0 %v336
        %v2878 = vpop.f32.mrb[0].mxu0
        %v2879 = vadd.f32 0.0, %v2878
        %v2880 = vpop.f32.mrb[0].mxu0
        %2881 = vmatprep.mubr.f32.mxu0 0.0
        %2882 = vmatmul.mubr.f32.gmra.mrb[0].mxu0 %v337
        %v2883 = vpop.f32.mrb[0].mxu0
        %v2884 = vadd.f32 0.0, %v2883
        %v2885 = vpop.f32.mrb[0].mxu0
        %2886 = vmatprep.mubr.f32.mxu0 0.0
        %2887 = vmatmul.mubr.f32.gmra.mrb[0].mxu0 %v338
        %v2888 = vpop.f32.mrb[0].mxu0
        %v2889 = vadd.f32 0.0, %v2888
        %v2890 = vpop.f32.mrb[0].mxu0
        %2891 = vmatprep.mubr.f32.mxu0 0.0
        %2892 = vmatmul.mubr.f32.gmra.mrb[0].mxu0 %v339
        %v2893 = vpop.f32.mrb[0].mxu0
        %v2894 = vadd.f32 0.0, %v2893
        %v2895 = vpop.f32.mrb[0].mxu0
        %2896 = vmatprep.mubr.f32.mxu0 0.0
        %2897 = vmatmul.mubr.f32.gmra.mrb[0].mxu0 %v340
        %v2898 = vpop.f32.mrb[0].mxu0
        %v2899 = vadd.f32 0.0, %v2898
        %v2900 = vpop.f32.mrb[0].mxu0
        %2901 = vmatprep.mubr.f32.mxu0 0.0
        %2902 = vmatmul.mubr.f32.gmra.mrb[0].mxu0 %v341
        %v2903 = vpop.f32.mrb[0].mxu0
        %v2904 = vadd.f32 0.0, %v2903
        %v2905 = vpop.f32.mrb[0].mxu0
        %2906 = vmatprep.mubr.f32.mxu0 0.0
        %2907 = vmatmul.mubr.f32.gmra.mrb[0].mxu0 %v342
        %v2908 = vpop.f32.mrb[0].mxu0
        %v2909 = vadd.f32 0.0, %v2908
        %v2910 = vpop.f32.mrb[0].mxu0
        %2911 = vmatprep.mubr.f32.mxu0 0.0
        %2912 = vmatmul.mubr.f32.gmra.mrb[0].mxu0 %v343
        %v2913 = vpop.f32.mrb[0].mxu0
        %v2914 = vadd.f32 0.0, %v2913
        %v2915 = vpop.f32.mrb[0].mxu0
        %2916 = vmatprep.mubr.f32.mxu0 0.0
        %2917 = vmatmul.mubr.f32.gmra.mrb[0].mxu0 %v344
        %v2918 = vpop.f32.mrb[0].mxu0
        %v2919 = vadd.f32 0.0, %v2918
        %v2920 = vpop.f32.mrb[0].mxu0
        %2921 = vmatprep.mubr.f32.mxu0 0.0
        %2922 = vmatmul.mubr.f32.gmra.mrb[0].mxu0 %v345
        %v2923 = vpop.f32.mrb[0].mxu0
        %v2924 = vadd.f32 0.0, %v2923
        %v2925 = vpop.f32.mrb[0].mxu0
        %2926 = vmatprep.mubr.f32.mxu0 0.0
        %2927 = vmatmul.mubr.f32.gmra.mrb[0].mxu0 %v346
        %v2928 = vpop.f32.mrb[0].mxu0
        %v2929 = vadd.f32 0.0, %v2928
        %v2930 = vpop.f32.mrb[0].mxu0
        %2931 = vmatprep.mubr.f32.mxu0 0.0
        %2932 = vmatmul.mubr.f32.gmra.mrb[0].mxu0 %v347
        %v2933 = vpop.f32.mrb[0].mxu0
        %v2934 = vadd.f32 0.0, %v2933
        %v2935 = vpop.f32.mrb[0].mxu0
        %2936 = vmatprep.mubr.f32.mxu0 0.0
        %2937 = vmatmul.mubr.f32.gmra.mrb[0].mxu0 %v348
        %v2938 = vpop.f32.mrb[0].mxu0
        %v2939 = vadd.f32 0.0, %v2938
        %v2940 = vpop.f32.mrb[0].mxu0
        %2941 = vmatprep.mubr.f32.mxu0 0.0
        %2942 = vmatmul.mubr.f32.gmra.mrb[0].mxu0 %v349
        %v2943 = vpop.f32.mrb[0].mxu0
        %v2944 = vadd.f32 0.0, %v2943
        %v2945 = vpop.f32.mrb[0].mxu0
        %2946 = vmatprep.mubr.f32.mxu0 0.0
        %2947 = vmatmul.mubr.f32.gmra.mrb[0].mxu0 %v350
        %v2948 = vpop.f32.mrb[0].mxu0
        %v2949 = vadd.f32 0.0, %v2948
        %v2950 = vpop.f32.mrb[0].mxu0
        %2951 = vmatprep.mubr.f32.mxu0 0.0
        %2952 = vmatmul.mubr.f32.gmra.mrb[0].mxu0 %v351
        %v2953 = vpop.f32.mrb[0].mxu0
        %v2954 = vadd.f32 0.0, %v2953
        %v2955 = vpop.f32.mrb[0].mxu0
        %2956 = vmatprep.mubr.f32.mxu0 0.0
        %2957 = vmatmul.mubr.f32.gmra.mrb[0].mxu0 %v352
        %v2958 = vpop.f32.mrb[0].mxu0
        %v2959 = vadd.f32 0.0, %v2958
        %v2960 = vpop.f32.mrb[0].mxu0
        %2961 = vmatprep.mubr.f32.mxu0 0.0
        %2962 = vmatmul.mubr.f32.gmra.mrb[0].mxu0 %v353
        %v2963 = vpop.f32.mrb[0].mxu0
        %v2964 = vadd.f32 0.0, %v2963
        %v2965 = vpop.f32.mrb[0].mxu0
        %2966 = vmatprep.mubr.f32.mxu0 0.0
        %2967 = vmatmul.mubr.f32.gmra.mrb[0].mxu0 %v354
        %v2968 = vpop.f32.mrb[0].mxu0
        %v2969 = vadd.f32 0.0, %v2968
        %v2970 = vpop.f32.mrb[0].mxu0
        %2971 = vmatprep.mubr.f32.mxu0 0.0
        %2972 = vmatmul.mubr.f32.gmra.mrb[0].mxu0 %v355
        %v2973 = vpop.f32.mrb[0].mxu0
        %v2974 = vadd.f32 0.0, %v2973
        %v2975 = vpop.f32.mrb[0].mxu0
        %2976 = vmatprep.mubr.f32.mxu0 0.0
        %2977 = vmatmul.mubr.f32.gmra.mrb[0].mxu0 %v356
        %v2978 = vpop.f32.mrb[0].mxu0
        %v2979 = vadd.f32 0.0, %v2978
        %v2980 = vpop.f32.mrb[0].mxu0
        %2981 = vmatprep.mubr.f32.mxu0 0.0
        %2982 = vmatmul.mubr.f32.gmra.mrb[0].mxu0 %v357
        %v2983 = vpop.f32.mrb[0].mxu0
        %v2984 = vadd.f32 0.0, %v2983
        %v2985 = vpop.f32.mrb[0].mxu0
        %2986 = vmatprep.mubr.f32.mxu0 0.0
        %2987 = vmatmul.mubr.f32.gmra.mrb[0].mxu0 %v358
        %v2988 = vpop.f32.mrb[0].mxu0
        %v2989 = vadd.f32 0.0, %v2988
        %v2990 = vpop.f32.mrb[0].mxu0
        %2991 = vmatprep.mubr.f32.mxu0 0.0
        %2992 = vmatmul.mubr.f32.gmra.mrb[0].mxu0 %v359
        %v2993 = vpop.f32.mrb[0].mxu0
        %v2994 = vadd.f32 0.0, %v2993
        %v2995 = vpop.f32.mrb[0].mxu0
        %2996 = vmatprep.mubr.f32.mxu0 0.0
        %2997 = vmatmul.mubr.f32.gmra.mrb[0].mxu0 %v360
        %v2998 = vpop.f32.mrb[0].mxu0
        %v2999 = vadd.f32 0.0, %v2998
        %v3000 = vpop.f32.mrb[0].mxu0
        %3001 = vmatprep.mubr.f32.mxu0 0.0
        %3002 = vmatmul.mubr.f32.gmra.mrb[0].mxu0 %v361
        %v3003 = vpop.f32.mrb[0].mxu0
        %v3004 = vadd.f32 0.0, %v3003
        %v3005 = vpop.f32.mrb[0].mxu0
        %3006 = vmatprep.mubr.f32.mxu0 0.0
        %3007 = vmatmul.mubr.f32.gmra.mrb[0].mxu0 %v362
        %v3008 = vpop.f32.mrb[0].mxu0
        %v3009 = vadd.f32 0.0, %v3008
        %v3010 = vpop.f32.mrb[0].mxu0
        %3011 = vmatprep.mubr.f32.mxu0 0.0
        %3012 = vmatmul.mubr.f32.gmra.mrb[0].mxu0 %v363
        %v3013 = vpop.f32.mrb[0].mxu0
        %v3014 = vadd.f32 0.0, %v3013
        %v3015 = vpop.f32.mrb[0].mxu0
        %3016 = vmatprep.mubr.f32.mxu0 0.0
        %3017 = vmatmul.mubr.f32.gmra.mrb[0].mxu0 %v364
        %v3018 = vpop.f32.mrb[0].mxu0
        %v3019 = vadd.f32 0.0, %v3018
        %v3020 = vpop.f32.mrb[0].mxu0
        %3021 = vmatprep.mubr.f32.mxu0 0.0
        %3022 = vmatmul.mubr.f32.gmra.mrb[0].mxu0 %v365
        %v3023 = vpop.f32.mrb[0].mxu0
        %v3024 = vadd.f32 0.0, %v3023
        %v3025 = vpop.f32.mrb[0].mxu0
        %3026 = vmatprep.mubr.f32.mxu0 0.0
        %3027 = vmatmul.mubr.f32.gmra.mrb[0].mxu0 %v366
        %v3028 = vpop.f32.mrb[0].mxu0
        %v3029 = vadd.f32 0.0, %v3028
        %v3030 = vpop.f32.mrb[0].mxu0
        %3031 = vmatprep.mubr.f32.mxu0 0.0
        %3032 = vmatmul.mubr.f32.gmra.mrb[0].mxu0 %v367
        %v3033 = vpop.f32.mrb[0].mxu0
        %v3034 = vadd.f32 0.0, %v3033
        %v3035 = vpop.f32.mrb[0].mxu0
        %3036 = vmatprep.mubr.f32.mxu0 0.0
        %3037 = vmatmul.mubr.f32.gmra.mrb[0].mxu0 %v368
        %v3038 = vpop.f32.mrb[0].mxu0
        %v3039 = vadd.f32 0.0, %v3038
        %v3040 = vpop.f32.mrb[0].mxu0
        %3041 = vmatprep.mubr.f32.mxu0 0.0
        %3042 = vmatmul.mubr.f32.gmra.mrb[0].mxu0 %v369
        %v3043 = vpop.f32.mrb[0].mxu0
        %v3044 = vadd.f32 0.0, %v3043
        %v3045 = vpop.f32.mrb[0].mxu0
        %3046 = vmatprep.mubr.f32.mxu0 0.0
        %3047 = vmatmul.mubr.f32.gmra.mrb[0].mxu0 %v370
        %v3048 = vpop.f32.mrb[0].mxu0
        %v3049 = vadd.f32 0.0, %v3048
        %v3050 = vpop.f32.mrb[0].mxu0
        %3051 = vmatprep.mubr.f32.mxu0 0.0
        %3052 = vmatmul.mubr.f32.gmra.mrb[0].mxu0 %v371
        %v3053 = vpop.f32.mrb[0].mxu0
        %v3054 = vadd.f32 0.0, %v3053
        %v3055 = vpop.f32.mrb[0].mxu0
        %3056 = vmatprep.mubr.f32.mxu0 0.0
        %3057 = vmatmul.mubr.f32.gmra.mrb[0].mxu0 %v372
        %v3058 = vpop.f32.mrb[0].mxu0
        %v3059 = vadd.f32 0.0, %v3058
        %v3060 = vpop.f32.mrb[0].mxu0
        %3061 = vmatprep.mubr.f32.mxu0 0.0
        %3062 = vmatmul.mubr.f32.gmra.mrb[0].mxu0 %v373
        %v3063 = vpop.f32.mrb[0].mxu0
        %v3064 = vadd.f32 0.0, %v3063
        %v3065 = vpop.f32.mrb[0].mxu0
        %3066 = vmatprep.mubr.f32.mxu0 0.0
        %3067 = vmatmul.mubr.f32.gmra.mrb[0].mxu0 %v374
        %v3068 = vpop.f32.mrb[0].mxu0
        %v3069 = vadd.f32 0.0, %v3068
        %v3070 = vpop.f32.mrb[0].mxu0
        %3071 = vdwg.mxu0
        %v3072 = vsel %vm1450, %v2754, -inf
        %v3073 = vsel %vm1451, %v2759, -inf
        %v3074 = vsel %vm1452, %v2764, -inf
        %v3075 = vsel %vm1453, %v2769, -inf
        %v3076 = vsel %vm1454, %v2774, -inf
        %v3077 = vsel %vm1455, %v2779, -inf
        %v3078 = vsel %vm1456, %v2784, -inf
        %v3079 = vsel %vm1457, %v2789, -inf
        %v3080 = vsel %vm1458, %v2794, -inf
        %v3081 = vsel %vm1459, %v2799, -inf
        %v3082 = vsel %vm1460, %v2804, -inf
        %v3083 = vsel %vm1461, %v2809, -inf
        %v3084 = vsel %vm1462, %v2814, -inf
        %v3085 = vsel %vm1463, %v2819, -inf
        %v3086 = vsel %vm1464, %v2824, -inf
        %v3087 = vsel %vm1465, %v2829, -inf
        %v3088 = vsel %vm1466, %v2834, -inf
        %v3089 = vsel %vm1467, %v2839, -inf
        %v3090 = vsel %vm1468, %v2844, -inf
        %v3091 = vsel %vm1469, %v2849, -inf
        %v3092 = vsel %vm1470, %v2854, -inf
        %v3093 = vsel %vm1471, %v2859, -inf
        %v3094 = vsel %vm1472, %v2864, -inf
        %v3095 = vsel %vm1473, %v2869, -inf
        %v3096 = vsel %vm1474, %v2874, -inf
        %v3097 = vsel %vm1475, %v2879, -inf
        %v3098 = vsel %vm1476, %v2884, -inf
        %v3099 = vsel %vm1477, %v2889, -inf
        %v3100 = vsel %vm1478, %v2894, -inf
        %v3101 = vsel %vm1479, %v2899, -inf
        %v3102 = vsel %vm1480, %v2904, -inf
        %v3103 = vsel %vm1481, %v2909, -inf
        %v3104 = vsel %vm1482, %v2914, -inf
        %v3105 = vsel %vm1483, %v2919, -inf
        %v3106 = vsel %vm1484, %v2924, -inf
        %v3107 = vsel %vm1485, %v2929, -inf
        %v3108 = vsel %vm1486, %v2934, -inf
        %v3109 = vsel %vm1487, %v2939, -inf
        %v3110 = vsel %vm1488, %v2944, -inf
        %v3111 = vsel %vm1489, %v2949, -inf
        %v3112 = vsel %vm1490, %v2954, -inf
        %v3113 = vsel %vm1491, %v2959, -inf
        %v3114 = vsel %vm1492, %v2964, -inf
        %v3115 = vsel %vm1493, %v2969, -inf
        %v3116 = vsel %vm1494, %v2974, -inf
        %v3117 = vsel %vm1495, %v2979, -inf
        %v3118 = vsel %vm1496, %v2984, -inf
        %v3119 = vsel %vm1497, %v2989, -inf
        %v3120 = vsel %vm1498, %v2994, -inf
        %v3121 = vsel %vm1499, %v2999, -inf
        %v3122 = vsel %vm1500, %v3004, -inf
        %v3123 = vsel %vm1501, %v3009, -inf
        %v3124 = vsel %vm1502, %v3014, -inf
        %v3125 = vsel %vm1503, %v3019, -inf
        %v3126 = vsel %vm1504, %v3024, -inf
        %v3127 = vsel %vm1505, %v3029, -inf
        %v3128 = vsel %vm1506, %v3034, -inf
        %v3129 = vsel %vm1507, %v3039, -inf
        %v3130 = vsel %vm1508, %v3044, -inf
        %v3131 = vsel %vm1509, %v3049, -inf
        %v3132 = vsel %vm1510, %v3054, -inf
        %v3133 = vsel %vm1511, %v3059, -inf
        %v3134 = vsel %vm1512, %v3064, -inf
        %v3135 = vsel %vm1513, %v3069, -inf
        %v3136 = vsel %vm1706, %v3072, -inf
        %v3137 = vsel %vm1706, %v3073, -inf
        %v3138 = vsel %vm1706, %v3074, -inf
        %v3139 = vsel %vm1706, %v3075, -inf
        %v3140 = vsel %vm1706, %v3076, -inf
        %v3141 = vmax.f32 %v3136, %v3140
        %v3142 = vsel %vm1706, %v3077, -inf
        %v3143 = vmax.f32 %v3137, %v3142
        %v3144 = vsel %vm1706, %v3078, -inf
        %v3145 = vmax.f32 %v3138, %v3144
        %v3146 = vsel %vm1706, %v3079, -inf
        %v3147 = vmax.f32 %v3139, %v3146
        %v3148 = vsel %vm1706, %v3080, -inf
        %v3149 = vmax.f32 %v3141, %v3148
        %v3150 = vsel %vm1706, %v3081, -inf
        %v3151 = vmax.f32 %v3143, %v3150
        %v3152 = vsel %vm1706, %v3082, -inf
        %v3153 = vmax.f32 %v3145, %v3152
        %v3154 = vsel %vm1706, %v3083, -inf
        %v3155 = vmax.f32 %v3147, %v3154
        %v3156 = vsel %vm1706, %v3084, -inf
        %v3157 = vmax.f32 %v3149, %v3156
        %v3158 = vsel %vm1706, %v3085, -inf
        %v3159 = vmax.f32 %v3151, %v3158
        %v3160 = vsel %vm1706, %v3086, -inf
        %v3161 = vmax.f32 %v3153, %v3160
        %v3162 = vsel %vm1706, %v3087, -inf
        %v3163 = vmax.f32 %v3155, %v3162
        %v3164 = vsel %vm1706, %v3088, -inf
        %v3165 = vmax.f32 %v3157, %v3164
        %v3166 = vsel %vm1706, %v3089, -inf
        %v3167 = vmax.f32 %v3159, %v3166
        %v3168 = vsel %vm1706, %v3090, -inf
        %v3169 = vmax.f32 %v3161, %v3168
        %v3170 = vsel %vm1706, %v3091, -inf
        %v3171 = vmax.f32 %v3163, %v3170
        %v3172 = vsel %vm1706, %v3092, -inf
        %v3173 = vmax.f32 %v3165, %v3172
        %v3174 = vsel %vm1706, %v3093, -inf
        %v3175 = vmax.f32 %v3167, %v3174
        %v3176 = vsel %vm1706, %v3094, -inf
        %v3177 = vmax.f32 %v3169, %v3176
        %v3178 = vsel %vm1706, %v3095, -inf
        %v3179 = vmax.f32 %v3171, %v3178
        %v3180 = vsel %vm1706, %v3096, -inf
        %v3181 = vmax.f32 %v3173, %v3180
        %v3182 = vsel %vm1706, %v3097, -inf
        %v3183 = vmax.f32 %v3175, %v3182
        %v3184 = vsel %vm1706, %v3098, -inf
        %v3185 = vmax.f32 %v3177, %v3184
        %v3186 = vsel %vm1706, %v3099, -inf
        %v3187 = vmax.f32 %v3179, %v3186
        %v3188 = vsel %vm1706, %v3100, -inf
        %v3189 = vmax.f32 %v3181, %v3188
        %v3190 = vsel %vm1706, %v3101, -inf
        %v3191 = vmax.f32 %v3183, %v3190
        %v3192 = vsel %vm1706, %v3102, -inf
        %v3193 = vmax.f32 %v3185, %v3192
        %v3194 = vsel %vm1706, %v3103, -inf
        %v3195 = vmax.f32 %v3187, %v3194
        %v3196 = vsel %vm1706, %v3104, -inf
        %v3197 = vmax.f32 %v3189, %v3196
        %v3198 = vsel %vm1706, %v3105, -inf
        %v3199 = vmax.f32 %v3191, %v3198
        %v3200 = vsel %vm1706, %v3106, -inf
        %v3201 = vmax.f32 %v3193, %v3200
        %v3202 = vsel %vm1706, %v3107, -inf
        %v3203 = vmax.f32 %v3195, %v3202
        %v3204 = vsel %vm1706, %v3108, -inf
        %v3205 = vmax.f32 %v3197, %v3204
        %v3206 = vsel %vm1706, %v3109, -inf
        %v3207 = vmax.f32 %v3199, %v3206
        %v3208 = vsel %vm1706, %v3110, -inf
        %v3209 = vmax.f32 %v3201, %v3208
        %v3210 = vsel %vm1706, %v3111, -inf
        %v3211 = vmax.f32 %v3203, %v3210
        %v3212 = vsel %vm1706, %v3112, -inf
        %v3213 = vmax.f32 %v3205, %v3212
        %v3214 = vsel %vm1706, %v3113, -inf
        %v3215 = vmax.f32 %v3207, %v3214
        %v3216 = vsel %vm1706, %v3114, -inf
        %v3217 = vmax.f32 %v3209, %v3216
        %v3218 = vsel %vm1706, %v3115, -inf
        %v3219 = vmax.f32 %v3211, %v3218
        %v3220 = vsel %vm1706, %v3116, -inf
        %v3221 = vmax.f32 %v3213, %v3220
        %v3222 = vsel %vm1706, %v3117, -inf
        %v3223 = vmax.f32 %v3215, %v3222
        %v3224 = vsel %vm1706, %v3118, -inf
        %v3225 = vmax.f32 %v3217, %v3224
        %v3226 = vsel %vm1706, %v3119, -inf
        %v3227 = vmax.f32 %v3219, %v3226
        %v3228 = vsel %vm1706, %v3120, -inf
        %v3229 = vmax.f32 %v3221, %v3228
        %v3230 = vsel %vm1706, %v3121, -inf
        %v3231 = vmax.f32 %v3223, %v3230
        %v3232 = vsel %vm1706, %v3122, -inf
        %v3233 = vmax.f32 %v3225, %v3232
        %v3234 = vsel %vm1706, %v3123, -inf
        %v3235 = vmax.f32 %v3227, %v3234
        %v3236 = vsel %vm1706, %v3124, -inf
        %v3237 = vmax.f32 %v3229, %v3236
        %v3238 = vsel %vm1706, %v3125, -inf
        %v3239 = vmax.f32 %v3231, %v3238
        %v3240 = vsel %vm1706, %v3126, -inf
        %v3241 = vmax.f32 %v3233, %v3240
        %v3242 = vsel %vm1706, %v3127, -inf
        %v3243 = vmax.f32 %v3235, %v3242
        %v3244 = vsel %vm1706, %v3128, -inf
        %v3245 = vmax.f32 %v3237, %v3244
        %v3246 = vsel %vm1706, %v3129, -inf
        %v3247 = vmax.f32 %v3239, %v3246
        %v3248 = vsel %vm1706, %v3130, -inf
        %v3249 = vmax.f32 %v3241, %v3248
        %v3250 = vsel %vm1706, %v3131, -inf
        %v3251 = vmax.f32 %v3243, %v3250
        %v3252 = vsel %vm1706, %v3132, -inf
        %v3253 = vmax.f32 %v3245, %v3252
        %v3254 = vsel %vm1706, %v3133, -inf
        %v3255 = vmax.f32 %v3247, %v3254
        %v3256 = vsel %vm1706, %v3134, -inf
        %v3257 = vmax.f32 %v3249, %v3256
        %v3258 = vsel %vm1706, %v3135, -inf
        %v3259 = vmax.f32 %v3251, %v3258
        %v3260 = vmax.f32 %v3253, %v3255
        %v3261 = vmax.f32 %v3257, %v3259
        %v3262 = vmax.f32 %v3260, %v3261
        %v3263 = vrot.slane %v3262, 4
        %v3264 = vmax.f32 %v3262, %v3263
        %v3265 = vrot.slane %v3264, 2
        %v3266 = vmax.f32 %v3264, %v3265
        %v3267 = vrot.slane %v3266, 1
        %v3268 = vmax.f32 %v3266, %v3267
        %v3269 = vsub.f32 %v2754, %v3268
        %v3270 = vsub.f32 %v2759, %v3268
        %v3271 = vsub.f32 %v2764, %v3268
        %v3272 = vsub.f32 %v2769, %v3268
        %v3273 = vsub.f32 %v2774, %v3268
        %v3274 = vsub.f32 %v2779, %v3268
        %v3275 = vsub.f32 %v2784, %v3268
        %v3276 = vsub.f32 %v2789, %v3268
        %v3277 = vsub.f32 %v2794, %v3268
        %v3278 = vsub.f32 %v2799, %v3268
        %v3279 = vsub.f32 %v2804, %v3268
        %v3280 = vsub.f32 %v2809, %v3268
        %v3281 = vsub.f32 %v2814, %v3268
        %v3282 = vsub.f32 %v2819, %v3268
        %v3283 = vsub.f32 %v2824, %v3268
        %v3284 = vsub.f32 %v2829, %v3268
        %v3285 = vsub.f32 %v2834, %v3268
        %v3286 = vsub.f32 %v2839, %v3268
        %v3287 = vsub.f32 %v2844, %v3268
        %v3288 = vsub.f32 %v2849, %v3268
        %v3289 = vsub.f32 %v2854, %v3268
        %v3290 = vsub.f32 %v2859, %v3268
        %v3291 = vsub.f32 %v2864, %v3268
        %v3292 = vsub.f32 %v2869, %v3268
        %v3293 = vsub.f32 %v2874, %v3268
        %v3294 = vsub.f32 %v2879, %v3268
        %v3295 = vsub.f32 %v2884, %v3268
        %v3296 = vsub.f32 %v2889, %v3268
        %v3297 = vsub.f32 %v2894, %v3268
        %v3298 = vsub.f32 %v2899, %v3268
        %v3299 = vsub.f32 %v2904, %v3268
        %v3300 = vsub.f32 %v2909, %v3268
        %v3301 = vsub.f32 %v2914, %v3268
        %v3302 = vsub.f32 %v2919, %v3268
        %v3303 = vsub.f32 %v2924, %v3268
        %v3304 = vsub.f32 %v2929, %v3268
        %v3305 = vsub.f32 %v2934, %v3268
        %v3306 = vsub.f32 %v2939, %v3268
        %v3307 = vsub.f32 %v2944, %v3268
        %v3308 = vsub.f32 %v2949, %v3268
        %v3309 = vsub.f32 %v2954, %v3268
        %v3310 = vsub.f32 %v2959, %v3268
        %v3311 = vsub.f32 %v2964, %v3268
        %v3312 = vsub.f32 %v2969, %v3268
        %v3313 = vsub.f32 %v2974, %v3268
        %v3314 = vsub.f32 %v2979, %v3268
        %v3315 = vsub.f32 %v2984, %v3268
        %v3316 = vsub.f32 %v2989, %v3268
        %v3317 = vsub.f32 %v2994, %v3268
        %v3318 = vsub.f32 %v2999, %v3268
        %v3319 = vsub.f32 %v3004, %v3268
        %v3320 = vsub.f32 %v3009, %v3268
        %v3321 = vsub.f32 %v3014, %v3268
        %v3322 = vsub.f32 %v3019, %v3268
        %v3323 = vsub.f32 %v3024, %v3268
        %v3324 = vsub.f32 %v3029, %v3268
        %v3325 = vsub.f32 %v3034, %v3268
        %v3326 = vsub.f32 %v3039, %v3268
        %v3327 = vsub.f32 %v3044, %v3268
        %v3328 = vsub.f32 %v3049, %v3268
        %v3329 = vsub.f32 %v3054, %v3268
        %v3330 = vsub.f32 %v3059, %v3268
        %v3331 = vsub.f32 %v3064, %v3268
        %v3332 = vsub.f32 %v3069, %v3268
        %v3333 = vmul.f32 %v3269, 1.442695
        %v3334 = vpow.pop %v3333
        %v3335 = vmul.f32 %v3270, 1.442695
        %v3336 = vpow.pop %v3335
        %v3337 = vmul.f32 %v3271, 1.442695
        %v3338 = vpow.pop %v3337
        %v3339 = vmul.f32 %v3272, 1.442695
        %v3340 = vpow.pop %v3339
        %v3341 = vmul.f32 %v3273, 1.442695
        %v3342 = vpow.pop %v3341
        %v3343 = vmul.f32 %v3274, 1.442695
        %v3344 = vpow.pop %v3343
        %v3345 = vmul.f32 %v3275, 1.442695
        %v3346 = vpow.pop %v3345
        %v3347 = vmul.f32 %v3276, 1.442695
        %v3348 = vpow.pop %v3347
        %v3349 = vmul.f32 %v3277, 1.442695
        %v3350 = vpow.pop %v3349
        %v3351 = vmul.f32 %v3278, 1.442695
        %v3352 = vpow.pop %v3351
        %v3353 = vmul.f32 %v3279, 1.442695
        %v3354 = vpow.pop %v3353
        %v3355 = vmul.f32 %v3280, 1.442695
        %v3356 = vpow.pop %v3355
        %v3357 = vmul.f32 %v3281, 1.442695
        %v3358 = vpow.pop %v3357
        %v3359 = vmul.f32 %v3282, 1.442695
        %v3360 = vpow.pop %v3359
        %v3361 = vmul.f32 %v3283, 1.442695
        %v3362 = vpow.pop %v3361
        %v3363 = vmul.f32 %v3284, 1.442695
        %v3364 = vpow.pop %v3363
        %v3365 = vmul.f32 %v3285, 1.442695
        %v3366 = vpow.pop %v3365
        %v3367 = vmul.f32 %v3286, 1.442695
        %v3368 = vpow.pop %v3367
        %v3369 = vmul.f32 %v3287, 1.442695
        %v3370 = vpow.pop %v3369
        %v3371 = vmul.f32 %v3288, 1.442695
        %v3372 = vpow.pop %v3371
        %v3373 = vmul.f32 %v3289, 1.442695
        %v3374 = vpow.pop %v3373
        %v3375 = vmul.f32 %v3290, 1.442695
        %v3376 = vpow.pop %v3375
        %v3377 = vmul.f32 %v3291, 1.442695
        %v3378 = vpow.pop %v3377
        %v3379 = vmul.f32 %v3292, 1.442695
        %v3380 = vpow.pop %v3379
        %v3381 = vmul.f32 %v3293, 1.442695
        %v3382 = vpow.pop %v3381
        %v3383 = vmul.f32 %v3294, 1.442695
        %v3384 = vpow.pop %v3383
        %v3385 = vmul.f32 %v3295, 1.442695
        %v3386 = vpow.pop %v3385
        %v3387 = vmul.f32 %v3296, 1.442695
        %v3388 = vpow.pop %v3387
        %v3389 = vmul.f32 %v3297, 1.442695
        %v3390 = vpow.pop %v3389
        %v3391 = vmul.f32 %v3298, 1.442695
        %v3392 = vpow.pop %v3391
        %v3393 = vmul.f32 %v3299, 1.442695
        %v3394 = vpow.pop %v3393
        %v3395 = vmul.f32 %v3300, 1.442695
        %v3396 = vpow.pop %v3395
        %v3397 = vmul.f32 %v3301, 1.442695
        %v3398 = vpow.pop %v3397
        %v3399 = vmul.f32 %v3302, 1.442695
        %v3400 = vpow.pop %v3399
        %v3401 = vmul.f32 %v3303, 1.442695
        %v3402 = vpow.pop %v3401
        %v3403 = vmul.f32 %v3304, 1.442695
        %v3404 = vpow.pop %v3403
        %v3405 = vmul.f32 %v3305, 1.442695
        %v3406 = vpow.pop %v3405
        %v3407 = vmul.f32 %v3306, 1.442695
        %v3408 = vpow.pop %v3407
        %v3409 = vmul.f32 %v3307, 1.442695
        %v3410 = vpow.pop %v3409
        %v3411 = vmul.f32 %v3308, 1.442695
        %v3412 = vpow.pop %v3411
        %v3413 = vmul.f32 %v3309, 1.442695
        %v3414 = vpow.pop %v3413
        %v3415 = vmul.f32 %v3310, 1.442695
        %v3416 = vpow.pop %v3415
        %v3417 = vmul.f32 %v3311, 1.442695
        %v3418 = vpow.pop %v3417
        %v3419 = vmul.f32 %v3312, 1.442695
        %v3420 = vpow.pop %v3419
        %v3421 = vmul.f32 %v3313, 1.442695
        %v3422 = vpow.pop %v3421
        %v3423 = vmul.f32 %v3314, 1.442695
        %v3424 = vpow.pop %v3423
        %v3425 = vmul.f32 %v3315, 1.442695
        %v3426 = vpow.pop %v3425
        %v3427 = vmul.f32 %v3316, 1.442695
        %v3428 = vpow.pop %v3427
        %v3429 = vmul.f32 %v3317, 1.442695
        %v3430 = vpow.pop %v3429
        %v3431 = vmul.f32 %v3318, 1.442695
        %v3432 = vpow.pop %v3431
        %v3433 = vmul.f32 %v3319, 1.442695
        %v3434 = vpow.pop %v3433
        %v3435 = vmul.f32 %v3320, 1.442695
        %v3436 = vpow.pop %v3435
        %v3437 = vmul.f32 %v3321, 1.442695
        %v3438 = vpow.pop %v3437
        %v3439 = vmul.f32 %v3322, 1.442695
        %v3440 = vpow.pop %v3439
        %v3441 = vmul.f32 %v3323, 1.442695
        %v3442 = vpow.pop %v3441
        %v3443 = vmul.f32 %v3324, 1.442695
        %v3444 = vpow.pop %v3443
        %v3445 = vmul.f32 %v3325, 1.442695
        %v3446 = vpow.pop %v3445
        %v3447 = vmul.f32 %v3326, 1.442695
        %v3448 = vpow.pop %v3447
        %v3449 = vmul.f32 %v3327, 1.442695
        %v3450 = vpow.pop %v3449
        %v3451 = vmul.f32 %v3328, 1.442695
        %v3452 = vpow.pop %v3451
        %v3453 = vmul.f32 %v3329, 1.442695
        %v3454 = vpow.pop %v3453
        %v3455 = vmul.f32 %v3330, 1.442695
        %v3456 = vpow.pop %v3455
        %v3457 = vmul.f32 %v3331, 1.442695
        %v3458 = vpow.pop %v3457
        %v3459 = vmul.f32 %v3332, 1.442695
        %v3460 = vpow.pop %v3459
        %v3461 = vsel %vm1450, %v3334, 0.0
        %v3462 = vsel %vm1451, %v3336, 0.0
        %v3463 = vsel %vm1452, %v3338, 0.0
        %v3464 = vsel %vm1453, %v3340, 0.0
        %v3465 = vsel %vm1454, %v3342, 0.0
        %v3466 = vsel %vm1455, %v3344, 0.0
        %v3467 = vsel %vm1456, %v3346, 0.0
        %v3468 = vsel %vm1457, %v3348, 0.0
        %v3469 = vsel %vm1458, %v3350, 0.0
        %v3470 = vsel %vm1459, %v3352, 0.0
        %v3471 = vsel %vm1460, %v3354, 0.0
        %v3472 = vsel %vm1461, %v3356, 0.0
        %v3473 = vsel %vm1462, %v3358, 0.0
        %v3474 = vsel %vm1463, %v3360, 0.0
        %v3475 = vsel %vm1464, %v3362, 0.0
        %v3476 = vsel %vm1465, %v3364, 0.0
        %v3477 = vsel %vm1466, %v3366, 0.0
        %v3478 = vsel %vm1467, %v3368, 0.0
        %v3479 = vsel %vm1468, %v3370, 0.0
        %v3480 = vsel %vm1469, %v3372, 0.0
        %v3481 = vsel %vm1470, %v3374, 0.0
        %v3482 = vsel %vm1471, %v3376, 0.0
        %v3483 = vsel %vm1472, %v3378, 0.0
        %v3484 = vsel %vm1473, %v3380, 0.0
        %v3485 = vsel %vm1474, %v3382, 0.0
        %v3486 = vsel %vm1475, %v3384, 0.0
        %v3487 = vsel %vm1476, %v3386, 0.0
        %v3488 = vsel %vm1477, %v3388, 0.0
        %v3489 = vsel %vm1478, %v3390, 0.0
        %v3490 = vsel %vm1479, %v3392, 0.0
        %v3491 = vsel %vm1480, %v3394, 0.0
        %v3492 = vsel %vm1481, %v3396, 0.0
        %v3493 = vsel %vm1482, %v3398, 0.0
        %v3494 = vsel %vm1483, %v3400, 0.0
        %v3495 = vsel %vm1484, %v3402, 0.0
        %v3496 = vsel %vm1485, %v3404, 0.0
        %v3497 = vsel %vm1486, %v3406, 0.0
        %v3498 = vsel %vm1487, %v3408, 0.0
        %v3499 = vsel %vm1488, %v3410, 0.0
        %v3500 = vsel %vm1489, %v3412, 0.0
        %v3501 = vsel %vm1490, %v3414, 0.0
        %v3502 = vsel %vm1491, %v3416, 0.0
        %v3503 = vsel %vm1492, %v3418, 0.0
        %v3504 = vsel %vm1493, %v3420, 0.0
        %v3505 = vsel %vm1494, %v3422, 0.0
        %v3506 = vsel %vm1495, %v3424, 0.0
        %v3507 = vsel %vm1496, %v3426, 0.0
        %v3508 = vsel %vm1497, %v3428, 0.0
        %v3509 = vsel %vm1498, %v3430, 0.0
        %v3510 = vsel %vm1499, %v3432, 0.0
        %v3511 = vsel %vm1500, %v3434, 0.0
        %v3512 = vsel %vm1501, %v3436, 0.0
        %v3513 = vsel %vm1502, %v3438, 0.0
        %v3514 = vsel %vm1503, %v3440, 0.0
        %v3515 = vsel %vm1504, %v3442, 0.0
        %v3516 = vsel %vm1505, %v3444, 0.0
        %v3517 = vsel %vm1506, %v3446, 0.0
        %v3518 = vsel %vm1507, %v3448, 0.0
        %v3519 = vsel %vm1508, %v3450, 0.0
        %v3520 = vsel %vm1509, %v3452, 0.0
        %v3521 = vsel %vm1510, %v3454, 0.0
        %v3522 = vsel %vm1511, %v3456, 0.0
        %v3523 = vsel %vm1512, %v3458, 0.0
        %v3524 = vsel %vm1513, %v3460, 0.0
        %v3525 = vsel %vm1706, %v3461, 0.0
        %v3526 = vsel %vm1706, %v3462, 0.0
        %v3527 = vadd.f32 %v3525, %v3526
        %v3528 = vsel %vm1706, %v3463, 0.0
        %v3529 = vadd.f32 %v3527, %v3528
        %v3530 = vsel %vm1706, %v3464, 0.0
        %v3531 = vadd.f32 %v3529, %v3530
        %v3532 = vsel %vm1706, %v3465, 0.0
        %v3533 = vadd.f32 %v3531, %v3532
        %v3534 = vsel %vm1706, %v3466, 0.0
        %v3535 = vadd.f32 %v3533, %v3534
        %v3536 = vsel %vm1706, %v3467, 0.0
        %v3537 = vadd.f32 %v3535, %v3536
        %v3538 = vsel %vm1706, %v3468, 0.0
        %v3539 = vadd.f32 %v3537, %v3538
        %v3540 = vsel %vm1706, %v3469, 0.0
        %v3541 = vadd.f32 %v3539, %v3540
        %v3542 = vsel %vm1706, %v3470, 0.0
        %v3543 = vadd.f32 %v3541, %v3542
        %v3544 = vsel %vm1706, %v3471, 0.0
        %v3545 = vadd.f32 %v3543, %v3544
        %v3546 = vsel %vm1706, %v3472, 0.0
        %v3547 = vadd.f32 %v3545, %v3546
        %v3548 = vsel %vm1706, %v3473, 0.0
        %v3549 = vadd.f32 %v3547, %v3548
        %v3550 = vsel %vm1706, %v3474, 0.0
        %v3551 = vadd.f32 %v3549, %v3550
        %v3552 = vsel %vm1706, %v3475, 0.0
        %v3553 = vadd.f32 %v3551, %v3552
        %v3554 = vsel %vm1706, %v3476, 0.0
        %v3555 = vadd.f32 %v3553, %v3554
        %v3556 = vsel %vm1706, %v3477, 0.0
        %v3557 = vadd.f32 %v3555, %v3556
        %v3558 = vsel %vm1706, %v3478, 0.0
        %v3559 = vadd.f32 %v3557, %v3558
        %v3560 = vsel %vm1706, %v3479, 0.0
        %v3561 = vadd.f32 %v3559, %v3560
        %v3562 = vsel %vm1706, %v3480, 0.0
        %v3563 = vadd.f32 %v3561, %v3562
        %v3564 = vsel %vm1706, %v3481, 0.0
        %v3565 = vadd.f32 %v3563, %v3564
        %v3566 = vsel %vm1706, %v3482, 0.0
        %v3567 = vadd.f32 %v3565, %v3566
        %v3568 = vsel %vm1706, %v3483, 0.0
        %v3569 = vadd.f32 %v3567, %v3568
        %v3570 = vsel %vm1706, %v3484, 0.0
        %v3571 = vadd.f32 %v3569, %v3570
        %v3572 = vsel %vm1706, %v3485, 0.0
        %v3573 = vadd.f32 %v3571, %v3572
        %v3574 = vsel %vm1706, %v3486, 0.0
        %v3575 = vadd.f32 %v3573, %v3574
        %v3576 = vsel %vm1706, %v3487, 0.0
        %v3577 = vadd.f32 %v3575, %v3576
        %v3578 = vsel %vm1706, %v3488, 0.0
        %v3579 = vadd.f32 %v3577, %v3578
        %v3580 = vsel %vm1706, %v3489, 0.0
        %v3581 = vadd.f32 %v3579, %v3580
        %v3582 = vsel %vm1706, %v3490, 0.0
        %v3583 = vadd.f32 %v3581, %v3582
        %v3584 = vsel %vm1706, %v3491, 0.0
        %v3585 = vadd.f32 %v3583, %v3584
        %v3586 = vsel %vm1706, %v3492, 0.0
        %v3587 = vadd.f32 %v3585, %v3586
        %v3588 = vsel %vm1706, %v3493, 0.0
        %v3589 = vadd.f32 %v3587, %v3588
        %v3590 = vsel %vm1706, %v3494, 0.0
        %v3591 = vadd.f32 %v3589, %v3590
        %v3592 = vsel %vm1706, %v3495, 0.0
        %v3593 = vadd.f32 %v3591, %v3592
        %v3594 = vsel %vm1706, %v3496, 0.0
        %v3595 = vadd.f32 %v3593, %v3594
        %v3596 = vsel %vm1706, %v3497, 0.0
        %v3597 = vadd.f32 %v3595, %v3596
        %v3598 = vsel %vm1706, %v3498, 0.0
        %v3599 = vadd.f32 %v3597, %v3598
        %v3600 = vsel %vm1706, %v3499, 0.0
        %v3601 = vadd.f32 %v3599, %v3600
        %v3602 = vsel %vm1706, %v3500, 0.0
        %v3603 = vadd.f32 %v3601, %v3602
        %v3604 = vsel %vm1706, %v3501, 0.0
        %v3605 = vadd.f32 %v3603, %v3604
        %v3606 = vsel %vm1706, %v3502, 0.0
        %v3607 = vadd.f32 %v3605, %v3606
        %v3608 = vsel %vm1706, %v3503, 0.0
        %v3609 = vadd.f32 %v3607, %v3608
        %v3610 = vsel %vm1706, %v3504, 0.0
        %v3611 = vadd.f32 %v3609, %v3610
        %v3612 = vsel %vm1706, %v3505, 0.0
        %v3613 = vadd.f32 %v3611, %v3612
        %v3614 = vsel %vm1706, %v3506, 0.0
        %v3615 = vadd.f32 %v3613, %v3614
        %v3616 = vsel %vm1706, %v3507, 0.0
        %v3617 = vadd.f32 %v3615, %v3616
        %v3618 = vsel %vm1706, %v3508, 0.0
        %v3619 = vadd.f32 %v3617, %v3618
        %v3620 = vsel %vm1706, %v3509, 0.0
        %v3621 = vadd.f32 %v3619, %v3620
        %v3622 = vsel %vm1706, %v3510, 0.0
        %v3623 = vadd.f32 %v3621, %v3622
        %v3624 = vsel %vm1706, %v3511, 0.0
        %v3625 = vadd.f32 %v3623, %v3624
        %v3626 = vsel %vm1706, %v3512, 0.0
        %v3627 = vadd.f32 %v3625, %v3626
        %v3628 = vsel %vm1706, %v3513, 0.0
        %v3629 = vadd.f32 %v3627, %v3628
        %v3630 = vsel %vm1706, %v3514, 0.0
        %v3631 = vadd.f32 %v3629, %v3630
        %v3632 = vsel %vm1706, %v3515, 0.0
        %v3633 = vadd.f32 %v3631, %v3632
        %v3634 = vsel %vm1706, %v3516, 0.0
        %v3635 = vadd.f32 %v3633, %v3634
        %v3636 = vsel %vm1706, %v3517, 0.0
        %v3637 = vadd.f32 %v3635, %v3636
        %v3638 = vsel %vm1706, %v3518, 0.0
        %v3639 = vadd.f32 %v3637, %v3638
        %v3640 = vsel %vm1706, %v3519, 0.0
        %v3641 = vadd.f32 %v3639, %v3640
        %v3642 = vsel %vm1706, %v3520, 0.0
        %v3643 = vadd.f32 %v3641, %v3642
        %v3644 = vsel %vm1706, %v3521, 0.0
        %v3645 = vadd.f32 %v3643, %v3644
        %v3646 = vsel %vm1706, %v3522, 0.0
        %v3647 = vadd.f32 %v3645, %v3646
        %v3648 = vsel %vm1706, %v3523, 0.0
        %v3649 = vadd.f32 %v3647, %v3648
        %v3650 = vsel %vm1706, %v3524, 0.0
        %v3651 = vadd.f32 %v3649, %v3650
        %v3652 = vrot.slane %v3651, 4
        %v3653 = vadd.f32 %v3651, %v3652
        %v3654 = vrot.slane %v3653, 2
        %v3655 = vadd.f32 %v3653, %v3654
        %v3656 = vrot.slane %v3655, 1
        %v3657 = vadd.f32 %v3655, %v3656
        %v3658 = vlog2.pop %v3657
        %v3659 = vmul.f32 %v3658, 0.6931472
        %v3660 = vadd.f32 %v3659, %v3268
        %s3661 = scalar_lea.vmem %s287, %s31 [#allocation8]
        %3662 = vst.msk [vmem:[%s3661] sm:$0x1] %vm2681, %v3660
        // Predicated region
        $region41: #{tpu_custom_call.1} parent=31 // pred_check
          %p3663 = pneg %p304
        $region42: #{tpu_custom_call.1} parent=31 // pred_check_branch
          %3665 = sbr.rel (%p3663) target = $region44
        $region43: #{tpu_custom_call.1} parent=31 // pred_region
          %v3666 = vld [vmem:[#allocation3] sm:$0x1]
          %v3667 = vlog2.pop %v3666
          %v3668 = vmul.f32 %v3667, 0.6931472
          %v3669 = vld [vmem:[#allocation2] sm:$0x1]
          %v3670 = vadd.f32 %v3668, %v3669
          %3671 = vst.msk [vmem:[%s281] sm:$0x1] %vm1249, %v3670
        $region44: #{tpu_custom_call.1} parent=31 // pred_fallthru
          _
        %s3672 = sand.u32 %s123, 1
        %s3673 = scalar_lea.sflag [#allocation6], %s3672
        %s3674 = sand.u32 %s123, 1
        %s3675 = scalar_lea.vmem [#allocation7], %s3674
        %s3676 = sand.u32 %s26, 1
        %s3677 = scalar_lea.sflag [#allocation9], %s3676
        %s3678 = sand.u32 %s149, 1
        %s3679 = scalar_lea.vmem [#allocation8], %s3678
        %s3680 = sand.u32 %s26, 1
        %s3681 = scalar_lea.sflag [#allocation9], %s3680
        %s3682 = sand.u32 %s175, 1
        %s3683 = scalar_lea.vmem [#allocation10], %s3682
        // Predicated region
        $region45: #{tpu_custom_call.1} parent=31 // pred_check
          %p3684 = pneg %p133
        $region46: #{tpu_custom_call.1} parent=31 // pred_check_branch
          %3686 = sbr.rel (%p3684) target = $region48
        $region47: #{tpu_custom_call.1} parent=31 // pred_region
          %s3688 = ssub.s32 16, 16
          %3689 = vsyncadd %s3673, %s3688
          %s3690 = smul.addr %s30, 16
          %s3691 = scalar_lea.hbm %s3, %s3690
          %s3693 = sshll.u32 %s3675, 4
          %s3694 = int_to_ptr.vmem [resolvable:$true] %s3693
          %3696 = dma.vmem_to_hbm [thread:$0]  %s3694, 16, %s3691, %s3673
        $region48: #{tpu_custom_call.1} parent=31 // pred_fallthru
          _
        // Predicated region
        $region49: #{tpu_custom_call.1} parent=31 // pred_check
          %p3697 = pneg %p159
        $region50: #{tpu_custom_call.1} parent=31 // pred_check_branch
          %3699 = sbr.rel (%p3697) target = $region52
        $region51: #{tpu_custom_call.1} parent=31 // pred_region
          %s3701 = ssub.s32 16, 16
          %3702 = vsyncadd %s3677, %s3701
          %s3703 = smul.addr %s30, 16
          %s3704 = scalar_lea.hbm %s4, %s3703
          %s3706 = sshll.u32 %s3679, 4
          %s3707 = int_to_ptr.vmem [resolvable:$true] %s3706
          %3709 = dma.vmem_to_hbm [thread:$0]  %s3707, 16, %s3704, %s3677
        $region52: #{tpu_custom_call.1} parent=31 // pred_fallthru
          _
        // Predicated region
        $region53: #{tpu_custom_call.1} parent=31 // pred_check
          %p3710 = pneg %p185
        $region54: #{tpu_custom_call.1} parent=31 // pred_check_branch
          %3712 = sbr.rel (%p3710) target = $region56
        $region55: #{tpu_custom_call.1} parent=31 // pred_region
          %s3714 = ssub.s32 16, 16
          %3715 = vsyncadd %s3681, %s3714
          %s3716 = smul.addr %s30, 16
          %s3717 = scalar_lea.hbm %s5, %s3716
          %s3719 = sshll.u32 %s3683, 4
          %s3720 = int_to_ptr.vmem [resolvable:$true] %s3719
          %3722 = dma.vmem_to_hbm [thread:$0]  %s3720, 16, %s3717, %s3681
        $region56: #{tpu_custom_call.1} parent=31 // pred_fallthru
          _
      $region32: #{tpu_custom_call.1} parent=5 // pred_fallthru
        _
      %p3723 = scmp.le.s32.totalorder 2, %s21
      // Predicated region
      $region57: #{tpu_custom_call.1} parent=5 // pred_check
        %p3724 = pneg %p3723
      $region58: #{tpu_custom_call.1} parent=5 // pred_check_branch
        %3726 = sbr.rel (%p3724) target = $region60
      $region59: #{tpu_custom_call.1} parent=5 // pred_region
        %s3727 = ssub.s32 %s21, 2
        // Predicated region
        $region61: #{tpu_custom_call.1} parent=59 // pred_check
          %p3728 = pneg %p139
        $region62: #{tpu_custom_call.1} parent=59 // pred_check_branch
          %3730 = sbr.rel (%p3728) target = $region64
        $region63: #{tpu_custom_call.1} parent=59 // pred_region
          %s3731 = sand.u32 %s124, 1
          %s3732 = scalar_lea.sflag [#allocation6], %s3731
          %s3733 = sand.u32 %s124, 1
          %s3734 = scalar_lea.vmem [#allocation7], %s3733
          %3735 = dma.done %s3732, 16
        $region64: #{tpu_custom_call.1} parent=59 // pred_fallthru
          _
        // Predicated region
        $region65: #{tpu_custom_call.1} parent=59 // pred_check
          %p3736 = pneg %p165
        $region66: #{tpu_custom_call.1} parent=59 // pred_check_branch
          %3738 = sbr.rel (%p3736) target = $region68
        $region67: #{tpu_custom_call.1} parent=59 // pred_region
          %s3739 = sand.u32 %s27, 1
          %s3740 = scalar_lea.sflag [#allocation9], %s3739
          %s3741 = sand.u32 %s150, 1
          %s3742 = scalar_lea.vmem [#allocation8], %s3741
          %3743 = dma.done %s3740, 16
        $region68: #{tpu_custom_call.1} parent=59 // pred_fallthru
          _
        // Predicated region
        $region69: #{tpu_custom_call.1} parent=59 // pred_check
          %p3744 = pneg %p191
        $region70: #{tpu_custom_call.1} parent=59 // pred_check_branch
          %3746 = sbr.rel (%p3744) target = $region72
        $region71: #{tpu_custom_call.1} parent=59 // pred_region
          %s3747 = sand.u32 %s27, 1
          %s3748 = scalar_lea.sflag [#allocation9], %s3747
          %s3749 = sand.u32 %s176, 1
          %s3750 = scalar_lea.vmem [#allocation10], %s3749
          %3751 = dma.done %s3748, 16
        $region72: #{tpu_custom_call.1} parent=59 // pred_fallthru
          _
      $region60: #{tpu_custom_call.1} parent=5 // pred_fallthru
        _
    $region6: #{tpu_custom_call.1} parent=1 // loop_footer
      %s25 = sadd.s32 1, %s21
    $region7: #{tpu_custom_call.1} parent=1 // loop_footer_branch
      %20 = sbr.rel target = $region3
    $region8: #{tpu_custom_call.1} parent=1 // loop_exit
      _
    %3752 = vsyncpa [#allocation5], 1
    %s3753 = scalar_lea.sflag [#allocation5], 1
    %3754 = vsyncpa %s3753, 1
    %3755 = vsyncpa [#allocation6], 1
    %s3756 = scalar_lea.sflag [#allocation6], 1
    %3757 = vsyncpa %s3756, 1
    %3758 = vsyncpa [#allocation9], 1
    %s3759 = scalar_lea.sflag [#allocation9], 1
    %3760 = vsyncpa %s3759, 1

</llo_original>
